<compile_context>
chip_gen: v6e
topology: v6e:2x2x1
jax: 0.10.0
libtpu: 0.0.40
codegen_flags: <defaults>
</compile_context>

<pallas_src>
import functools
import math

import jax
import jax.numpy as jnp
from jax.experimental import pallas as pl
from jax.experimental.pallas import tpu as pltpu


# ----------------------------- in-kernel helpers -----------------------------

def _layernorm(x, gamma, beta, eps=1e-5):
    mu = jnp.mean(x, axis=-1, keepdims=True)
    var = jnp.mean((x - mu) ** 2, axis=-1, keepdims=True)
    return (x - mu) * jax.lax.rsqrt(var + eps) * gamma + beta


def _erf(x):
    # Abramowitz & Stegun 7.1.26 (max abs err ~1.5e-7, i.e. f32-exact here);
    # keeps nn.GELU() (erf) semantics with only elementwise ops that lower on Mosaic.
    p = 0.3275911
    a1, a2, a3, a4, a5 = (0.254829592, -0.284496736, 1.421413741,
                          -1.453152027, 1.061405429)
    sgn = jnp.where(x >= 0.0, 1.0, -1.0)
    ax = jnp.abs(x)
    t = 1.0 / (1.0 + p * ax)
    poly = ((((a5 * t + a4) * t + a3) * t + a2) * t + a1) * t
    return sgn * (1.0 - poly * jnp.exp(-ax * ax))


def _gelu_exact(x):
    # matches nn.GELU() (erf-based).  TODO(synk): switch to the tanh form only
    # if bundle profiling shows the VALU slot saturated after the bf16 change.
    return 0.5 * x * (1.0 + _erf(x * (1.0 / math.sqrt(2.0))))


# --------------------------------- kernel ------------------------------------

def _block_kernel(hs_ref, pi_ref,
                  ln_a_g_ref, ln_a_b_ref,
                  pe_w1_ref, pe_b1_ref, pe_g1_ref, pe_be1_ref,
                  pe_w2_ref, pe_b2_ref, pe_g2_ref, pe_be2_ref,
                  wq_ref, bq_ref, wk_ref, bk_ref, wv_ref, bv_ref,
                  wo_ref, bo_ref,
                  pos_bias_ref, hsel_q_ref, hsel_p_ref,
                  ffn_g_ref, ffn_b_ref,
                  fw1_ref, fb1_ref, fw2_ref, fb2_ref,
                  out_ref, *, valid_window):
    # hs_ref: [TB, Wp, H]  batch-major tile of raw hidden states
    # pi_ref: [TB, Wp, 2]  (local, global) position info
    TB, Wp, H = hs_ref.shape
    nh = hsel_q_ref.shape[-1]
    head_dim = H // nh
    mid = valid_window // 2
    f32, bf16 = jnp.float32, jnp.bfloat16
    inv_scale = 1.0 / (math.sqrt(head_dim) + 1e-6)   # trace-time constant

    # ---- hoisted constant loads (bf16 weights stay bf16 until the MXU) -------
    ln_a_g, ln_a_b = ln_a_g_ref[...], ln_a_b_ref[...]
    pe_w1_l, pe_w1_g = pe_w1_ref[0:1, :], pe_w1_ref[1:2, :]
    pe_b1, pe_g1, pe_be1 = pe_b1_ref[...], pe_g1_ref[...], pe_be1_ref[...]
    pe_w2, pe_b2 = pe_w2_ref[...], pe_b2_ref[...]
    pe_g2, pe_be2 = pe_g2_ref[...], pe_be2_ref[...]
    hsel_q = hsel_q_ref[...]       # [H, nh]  0/1 bf16 head selector (exact)
    hsel_p = hsel_p_ref[...]       # [nh, H]  0/1 bf16 head expander (exact)
    pos_bias = pos_bias_ref[...]   # [Wp, nh] f32, pre-clamped to [-10, 10]

    def encode(x_rows, pos_rows):
        """attention_layernorm + position_encoding: [M,H],[M,2] -> [M,H] (f32)."""
        x = _layernorm(x_rows, ln_a_g, ln_a_b)
        h1 = pos_rows[:, 0:1] * pe_w1_l + pos_rows[:, 1:2] * pe_w1_g + pe_b1
        h1 = jnp.tanh(_layernorm(h1, pe_g1, pe_be1))
        pe = jnp.dot(h1.astype(bf16), pe_w2, preferred_element_type=f32) + pe_b2
        return x + _layernorm(pe, pe_g2, pe_be2)

    # ---- all window slots batched into one [TB*Wp, H] slab --------------------
    hs3 = hs_ref[...]                                     # [TB, Wp, H]
    pi3 = pi_ref[...]                                     # [TB, Wp, 2]
    hs_all = hs3.reshape(TB * Wp, H)                      # free regroup (Wp % 8 == 0)
    pi_all = pi3.reshape(TB * Wp, 2)
    x_all = encode(hs_all, pi_all)                        # one LN/PE pass, all slots
    x_all_b = x_all.astype(bf16)
    k_all = jnp.dot(x_all_b, wk_ref[...], preferred_element_type=f32) + bk_ref[...]
    v_all = jnp.dot(x_all_b, wv_ref[...], preferred_element_type=f32) + bv_ref[...]

    # ---- middle clip: pre-LN residual + scaled query ---------------------------
    residual = hs3[:, mid, :]                             # [TB, H] raw (pre-LN)
    x_mid = encode(residual, pi3[:, mid, :])              # cheap re-encode of mid slot
    q = (jnp.dot(x_mid.astype(bf16), wq_ref[...], preferred_element_type=f32)
         + bq_ref[...]) * inv_scale                       # 1/(sqrt(hd)+1e-6) folded in

    # ---- scores for all heads & window slots: one selector matmul --------------
    q_rep = jnp.broadcast_to(q[:, None, :], (TB, Wp, H)).reshape(TB * Wp, H)
    qk = (q_rep * k_all).astype(bf16)                     # [TB*Wp, H]
    s = jnp.dot(qk, hsel_q, preferred_element_type=f32)   # [TB*Wp, nh]
    s = s.reshape(TB, Wp, nh) + pos_bias[None, :, :]
    s = jnp.clip(s, -10.0, 10.0)
    # scores are clipped to [-10, 10] exactly as in the reference, so plain
    # exp / sum / normalize is a numerically safe, exact softmax.
    e = jnp.exp(s)                                        # [TB, Wp, nh]
    if Wp != valid_window:                                # mask padded window slots
        wmask = (jax.lax.broadcasted_iota(jnp.int32, (1, Wp, 1), 1)
                 < valid_window).astype(f32)
        e = e * wmask
    denom = jnp.sum(e, axis=1, keepdims=True)             # [TB, 1, nh]
    probs = e * pl.reciprocal(denom, approx=True)         # softmax probs (EUP rcp)
    p_full = jnp.dot(probs.reshape(TB * Wp, nh).astype(bf16), hsel_p,
                     preferred_element_type=f32)          # [TB*Wp, H]
    ctx = jnp.sum((p_full * v_all).reshape(TB, Wp, H), axis=1)   # [TB, H]

    attn = (jnp.dot(ctx.astype(bf16), wo_ref[...], preferred_element_type=f32)
            + bo_ref[...] + residual)                     # out_proj + residual

    # ---- FFN block --------------------------------------------------------------
    na = _layernorm(attn, ffn_g_ref[...], ffn_b_ref[...])
    hff = (jnp.dot(na.astype(bf16), fw1_ref[...], preferred_element_type=f32)
           + fb1_ref[...])
    hff = _gelu_exact(hff)
    ff = (jnp.dot(hff.astype(bf16), fw2_ref[...], preferred_element_type=f32)
          + fb2_ref[...])

    out_ref[...] = ff + attn                              # [TB, H]


# ------------------------------ JAX-side glue ---------------------------------

def _round_up(x, m):
    return ((x + m - 1) // m) * m


def _tpu_vmem_capacity():
    try:
        return int(pltpu.get_tpu_info().vmem_capacity_bytes)
    except Exception:
        return 0


def _pick_vmem_limit():
    cap = _tpu_vmem_capacity()
    if cap >= 96 * 1024 * 1024:                 # v5e / v6e: 128 MiB physical
        return 100 * 1024 * 1024
    if cap > 0:                                 # v7x: 64 MiB -> ~52 MiB scoped
        return max(32 * 1024 * 1024, cap - 12 * 1024 * 1024)
    return 48 * 1024 * 1024                     # unknown part: safe everywhere


def _default_block_batch():
    # v7x (64 MiB VMEM) -> 64-row tiles; v5e/v6e (128 MiB) -> 128-row tiles
    cap = _tpu_vmem_capacity()
    return 64 if (0 < cap < 96 * 1024 * 1024) else 128


def _compute_position_info(target_clip_idx, total_num_clips, window_size):
    """Replicates VideoChapterWindowAttention.get_clip_positions over the batch."""
    mid = window_size // 2
    idx = jnp.arange(window_size, dtype=jnp.int32)                   # [W]
    start = target_clip_idx[:, None] - mid                           # [B, 1]
    window_indices = start + idx[None, :]                            # [B, W]
    tc = total_num_clips[:, None]
    window_indices = jnp.clip(window_indices, 0, tc - 1)

    local = (idx.astype(jnp.float32) - mid) / (mid + 1e-6)           # [W]
    tc_f = tc.astype(jnp.float32)
    ci = jnp.clip(window_indices.astype(jnp.float32), 0.0, tc_f - 1.0)
    global_pos = jnp.log(ci + 1.0) / jnp.log(tc_f + 1.0)
    local_b = jnp.broadcast_to(local[None, :], global_pos.shape)
    return jnp.stack([local_b, global_pos], axis=-1)                 # [B, W, 2]


def init_params(key, hidden_size, num_heads, window_size):
    H = hidden_size
    Hh = H // 2
    head_dim = H // num_heads
    ks = jax.random.split(key, 9)
    gain = 1.0 / math.sqrt(head_dim)

    def xavier_uniform(k, fan_in, fan_out, g):
        limit = g * math.sqrt(6.0 / (fan_in + fan_out))
        return jax.random.uniform(k, (fan_in, fan_out), jnp.float32, -limit, limit)

    def kaiming_normal(k, fan_in, fan_out):
        std = math.sqrt(2.0 / fan_in)
        return std * jax.random.normal(k, (fan_in, fan_out), jnp.float32)

    zeros = lambda *s: jnp.zeros(s, jnp.float32)
    ones = lambda *s: jnp.ones(s, jnp.float32)

    return {
        "ln_attn_g": ones(1, H), "ln_attn_b": zeros(1, H),
        "pe_w1": kaiming_normal(ks[0], 2, Hh), "pe_b1": zeros(1, Hh),
        "pe_ln1_g": ones(1, Hh), "pe_ln1_b": zeros(1, Hh),
        "pe_w2": kaiming_normal(ks[1], Hh, H), "pe_b2": zeros(1, H),
        "pe_ln2_g": ones(1, H), "pe_ln2_b": zeros(1, H),
        "wq": xavier_uniform(ks[2], H, H, gain), "bq": zeros(1, H),
        "wk": xavier_uniform(ks[3], H, H, gain), "bk": zeros(1, H),
        "wv": xavier_uniform(ks[4], H, H, gain), "bv": zeros(1, H),
        "wo": xavier_uniform(ks[5], H, H, gain), "bo": zeros(1, H),
        "window_pos_bias": 0.02 * jax.random.normal(ks[6], (num_heads, window_size),
                                                    jnp.float32),
        "ffn_ln_g": ones(1, H), "ffn_ln_b": zeros(1, H),
        "ffn_w1": kaiming_normal(ks[7], H, 4 * H), "ffn_b1": zeros(1, 4 * H),
        "ffn_w2": kaiming_normal(ks[8], 4 * H, H), "ffn_b2": zeros(1, H),
    }


@functools.partial(jax.jit,
                   static_argnames=("num_heads", "block_batch",
                                    "single_buffer_weights"))
def _forward(hidden_states, target_clip_idx, total_num_clips, params, *,
             num_heads, block_batch, single_buffer_weights):
    hidden_states = hidden_states.astype(jnp.float32)
    B, W, H = hidden_states.shape
    head_dim = H // num_heads

    pos_info = _compute_position_info(target_clip_idx.astype(jnp.int32),
                                      total_num_clips.astype(jnp.int32), W)

    # ---- tiling: batch-major, no host transpose; pad only if misaligned -------
    Wp = _round_up(W, 8)                              # sublane-align window axis
    TB = min(max(8, _round_up(block_batch, 8)),
             max(8, _round_up(-(-B // 2), 8)))        # aim for >=2 grid steps (2 TCs)
    Bp = _round_up(B, TB)
    pad_b, pad_w = Bp - B, Wp - W
    if pad_b or pad_w:
        hidden_states = jnp.pad(hidden_states, ((0, pad_b), (0, pad_w), (0, 0)))
        pos_info = jnp.pad(pos_info, ((0, pad_b), (0, pad_w), (0, 0)))

    # ---- trace-time constants ---------------------------------------------------
    head_ids = jnp.arange(H, dtype=jnp.int32) // head_dim
    head_sel = head_ids[:, None] == jnp.arange(num_heads, dtype=jnp.int32)[None, :]
    hsel_q = head_sel.astype(jnp.bfloat16)            # [H, nh] 0/1 (exact in bf16)
    hsel_p = head_sel.T.astype(jnp.bfloat16)          # [nh, H]
    # reference clamps window_pos_bias.data into [-10, 10] before use
    pos_bias = jnp.clip(params["window_pos_bias"], -10.0, 10.0).T  # [W, nh] f32
    if pad_w:
        pos_bias = jnp.pad(pos_bias, ((0, pad_w), (0, 0)))

    bf = lambda w: w.astype(jnp.bfloat16)             # bf16 MXU weight operands
    operands = [
        hidden_states, pos_info,
        params["ln_attn_g"], params["ln_attn_b"],
        params["pe_w1"], params["pe_b1"], params["pe_ln1_g"], params["pe_ln1_b"],
        bf(params["pe_w2"]), params["pe_b2"], params["pe_ln2_g"], params["pe_ln2_b"],
        bf(params["wq"]), params["bq"], bf(params["wk"]), params["bk"],
        bf(params["wv"]), params["bv"], bf(params["wo"]), params["bo"],
        pos_bias, hsel_q, hsel_p,
        params["ffn_ln_g"], params["ffn_ln_b"],
        bf(params["ffn_w1"]), params["ffn_b1"], bf(params["ffn_w2"]), params["ffn_b2"],
    ]

    def const_spec(p):
        nd = p.ndim
        idx = lambda g, _nd=nd: (0,) * _nd
        if single_buffer_weights:
            # constant-index operands: 1 VMEM buffer instead of the default 2
            return pl.BlockSpec(p.shape, idx, pipeline_mode=pl.Buffered(1))
        return pl.BlockSpec(p.shape, idx)

    in_specs = ([pl.BlockSpec((TB, Wp, H), lambda g: (g, 0, 0)),
                 pl.BlockSpec((TB, Wp, 2), lambda g: (g, 0, 0))]
                + [const_spec(p) for p in operands[2:]])

    grid_spec = pltpu.PrefetchScalarGridSpec(
        num_scalar_prefetch=0,
        grid=(Bp // TB,),
        in_specs=in_specs,
        out_specs=pl.BlockSpec((TB, H), lambda g: (g, 0)),
    )

    out = pl.pallas_call(
        functools.partial(_block_kernel, valid_window=W),
        out_shape=jax.ShapeDtypeStruct((Bp, H), jnp.float32),
        grid_spec=grid_spec,
        compiler_params=pltpu.CompilerParams(
            dimension_semantics=("parallel",),
            vmem_limit_bytes=_pick_vmem_limit(),
        ),
    )(*operands)

    return out[:B][:, None, :]                        # [B, 1, H]


def video_chapter_block_forward(hidden_states, target_clip_idx, total_num_clips,
                                params, *, num_heads, block_batch=None):
    if block_batch is None:
        block_batch = _default_block_batch()
    try:
        out = _forward(hidden_states, target_clip_idx, total_num_clips, params,
                       num_heads=num_heads, block_batch=block_batch,
                       single_buffer_weights=True)
        return jax.block_until_ready(out)
    except Exception:
        # TODO(synk): pl.Buffered(1) (single-buffered constant weights) not
        # supported by this jax build -> fall back to default double buffering.
        return _forward(hidden_states, target_clip_idx, total_num_clips, params,
                        num_heads=num_heads, block_batch=block_batch,
                        single_buffer_weights=False)


# ----------------------------------- main -------------------------------------

if __name__ == "__main__":
    B, W, H, NH = 2, 8, 32, 4   # batch, window_size (=seq), hidden_size, heads

    key = jax.random.PRNGKey(0)
    k_hs, k_params = jax.random.split(key)

    hidden_states = jax.random.normal(k_hs, (B, W, H), jnp.float32)
    target_clip_idx = jnp.array([5, 2], dtype=jnp.int32)
    total_num_clips = jnp.array([20, 10], dtype=jnp.int32)
    params = init_params(k_params, H, NH, W)

    out = video_chapter_block_forward(hidden_states, target_clip_idx,
                                      total_num_clips, params, num_heads=NH)
    out = jax.block_until_ready(out)

    assert out.shape == (B, 1, H), out.shape
    assert bool(jnp.all(jnp.isfinite(out)))
    print("KERNEL_OK")
</pallas_src>

<mosaic_0001>
module attributes {stable_mosaic.version = 11 : i64} {
  func.func @_block_kernel(%arg0: i32, %arg1: memref<8x8x32xf32, #tpu.memory_space<vmem>>, %arg2: memref<8x8x2xf32, #tpu.memory_space<vmem>>, %arg3: memref<1x32xf32, #tpu.memory_space<vmem>>, %arg4: memref<1x32xf32, #tpu.memory_space<vmem>>, %arg5: memref<2x16xf32, #tpu.memory_space<vmem>>, %arg6: memref<1x16xf32, #tpu.memory_space<vmem>>, %arg7: memref<1x16xf32, #tpu.memory_space<vmem>>, %arg8: memref<1x16xf32, #tpu.memory_space<vmem>>, %arg9: memref<16x32xbf16, #tpu.memory_space<vmem>>, %arg10: memref<1x32xf32, #tpu.memory_space<vmem>>, %arg11: memref<1x32xf32, #tpu.memory_space<vmem>>, %arg12: memref<1x32xf32, #tpu.memory_space<vmem>>, %arg13: memref<32x32xbf16, #tpu.memory_space<vmem>>, %arg14: memref<1x32xf32, #tpu.memory_space<vmem>>, %arg15: memref<32x32xbf16, #tpu.memory_space<vmem>>, %arg16: memref<1x32xf32, #tpu.memory_space<vmem>>, %arg17: memref<32x32xbf16, #tpu.memory_space<vmem>>, %arg18: memref<1x32xf32, #tpu.memory_space<vmem>>, %arg19: memref<32x32xbf16, #tpu.memory_space<vmem>>, %arg20: memref<1x32xf32, #tpu.memory_space<vmem>>, %arg21: memref<8x4xf32, #tpu.memory_space<vmem>>, %arg22: memref<32x4xbf16, #tpu.memory_space<vmem>>, %arg23: memref<4x32xbf16, #tpu.memory_space<vmem>>, %arg24: memref<1x32xf32, #tpu.memory_space<vmem>>, %arg25: memref<1x32xf32, #tpu.memory_space<vmem>>, %arg26: memref<32x128xbf16, #tpu.memory_space<vmem>>, %arg27: memref<1x128xf32, #tpu.memory_space<vmem>>, %arg28: memref<128x32xbf16, #tpu.memory_space<vmem>>, %arg29: memref<1x32xf32, #tpu.memory_space<vmem>>, %arg30: memref<8x32xf32, #tpu.memory_space<vmem>>) attributes {dimension_semantics = [#tpu.dimension_semantics<parallel>], iteration_bounds = array<i64: 1>, scalar_prefetch = 0 : i64, scratch_operands = 0 : i64, tpu.core_type = #tpu.core_type<tc>, window_params = [{transform_indices = @transform_0, window_bounds = array<i64: 8, 8, 32>}, {transform_indices = @transform_1, window_bounds = array<i64: 8, 8, 2>}, {pipeline_mode = #tpu.pipeline_mode<synchronous>, transform_indices = @transform_2, window_bounds = array<i64: 1, 32>}, {pipeline_mode = #tpu.pipeline_mode<synchronous>, transform_indices = @transform_3, window_bounds = array<i64: 1, 32>}, {pipeline_mode = #tpu.pipeline_mode<synchronous>, transform_indices = @transform_4, window_bounds = array<i64: 2, 16>}, {pipeline_mode = #tpu.pipeline_mode<synchronous>, transform_indices = @transform_5, window_bounds = array<i64: 1, 16>}, {pipeline_mode = #tpu.pipeline_mode<synchronous>, transform_indices = @transform_6, window_bounds = array<i64: 1, 16>}, {pipeline_mode = #tpu.pipeline_mode<synchronous>, transform_indices = @transform_7, window_bounds = array<i64: 1, 16>}, {pipeline_mode = #tpu.pipeline_mode<synchronous>, transform_indices = @transform_8, window_bounds = array<i64: 16, 32>}, {pipeline_mode = #tpu.pipeline_mode<synchronous>, transform_indices = @transform_9, window_bounds = array<i64: 1, 32>}, {pipeline_mode = #tpu.pipeline_mode<synchronous>, transform_indices = @transform_10, window_bounds = array<i64: 1, 32>}, {pipeline_mode = #tpu.pipeline_mode<synchronous>, transform_indices = @transform_11, window_bounds = array<i64: 1, 32>}, {pipeline_mode = #tpu.pipeline_mode<synchronous>, transform_indices = @transform_12, window_bounds = array<i64: 32, 32>}, {pipeline_mode = #tpu.pipeline_mode<synchronous>, transform_indices = @transform_13, window_bounds = array<i64: 1, 32>}, {pipeline_mode = #tpu.pipeline_mode<synchronous>, transform_indices = @transform_14, window_bounds = array<i64: 32, 32>}, {pipeline_mode = #tpu.pipeline_mode<synchronous>, transform_indices = @transform_15, window_bounds = array<i64: 1, 32>}, {pipeline_mode = #tpu.pipeline_mode<synchronous>, transform_indices = @transform_16, window_bounds = array<i64: 32, 32>}, {pipeline_mode = #tpu.pipeline_mode<synchronous>, transform_indices = @transform_17, window_bounds = array<i64: 1, 32>}, {pipeline_mode = #tpu.pipeline_mode<synchronous>, transform_indices = @transform_18, window_bounds = array<i64: 32, 32>}, {pipeline_mode = #tpu.pipeline_mode<synchronous>, transform_indices = @transform_19, window_bounds = array<i64: 1, 32>}, {pipeline_mode = #tpu.pipeline_mode<synchronous>, transform_indices = @transform_20, window_bounds = array<i64: 8, 4>}, {pipeline_mode = #tpu.pipeline_mode<synchronous>, transform_indices = @transform_21, window_bounds = array<i64: 32, 4>}, {pipeline_mode = #tpu.pipeline_mode<synchronous>, transform_indices = @transform_22, window_bounds = array<i64: 4, 32>}, {pipeline_mode = #tpu.pipeline_mode<synchronous>, transform_indices = @transform_23, window_bounds = array<i64: 1, 32>}, {pipeline_mode = #tpu.pipeline_mode<synchronous>, transform_indices = @transform_24, window_bounds = array<i64: 1, 32>}, {pipeline_mode = #tpu.pipeline_mode<synchronous>, transform_indices = @transform_25, window_bounds = array<i64: 32, 128>}, {pipeline_mode = #tpu.pipeline_mode<synchronous>, transform_indices = @transform_26, window_bounds = array<i64: 1, 128>}, {pipeline_mode = #tpu.pipeline_mode<synchronous>, transform_indices = @transform_27, window_bounds = array<i64: 128, 32>}, {pipeline_mode = #tpu.pipeline_mode<synchronous>, transform_indices = @transform_28, window_bounds = array<i64: 1, 32>}, {transform_indices = @transform_29, window_bounds = array<i64: 8, 32>}]} {
    %c0 = arith.constant 0 : index
    %c0_0 = arith.constant 0 : index
    %0 = vector.load %arg3[%c0, %c0_0] : memref<1x32xf32, #tpu.memory_space<vmem>>, vector<1x32xf32>
    %c0_1 = arith.constant 0 : index
    %c0_2 = arith.constant 0 : index
    %1 = vector.load %arg4[%c0_1, %c0_2] : memref<1x32xf32, #tpu.memory_space<vmem>>, vector<1x32xf32>
    %c0_3 = arith.constant 0 : index
    %c0_4 = arith.constant 0 : index
    %2 = vector.load %arg5[%c0_3, %c0_4] : memref<2x16xf32, #tpu.memory_space<vmem>>, vector<1x16xf32>
    %c1 = arith.constant 1 : index
    %c0_5 = arith.constant 0 : index
    %3 = vector.load %arg5[%c1, %c0_5] : memref<2x16xf32, #tpu.memory_space<vmem>>, vector<1x16xf32>
    %c0_6 = arith.constant 0 : index
    %c0_7 = arith.constant 0 : index
    %4 = vector.load %arg6[%c0_6, %c0_7] : memref<1x16xf32, #tpu.memory_space<vmem>>, vector<1x16xf32>
    %c0_8 = arith.constant 0 : index
    %c0_9 = arith.constant 0 : index
    %5 = vector.load %arg7[%c0_8, %c0_9] : memref<1x16xf32, #tpu.memory_space<vmem>>, vector<1x16xf32>
    %c0_10 = arith.constant 0 : index
    %c0_11 = arith.constant 0 : index
    %6 = vector.load %arg8[%c0_10, %c0_11] : memref<1x16xf32, #tpu.memory_space<vmem>>, vector<1x16xf32>
    %c0_12 = arith.constant 0 : index
    %c0_13 = arith.constant 0 : index
    %7 = vector.load %arg9[%c0_12, %c0_13] : memref<16x32xbf16, #tpu.memory_space<vmem>>, vector<16x32xbf16>
    %c0_14 = arith.constant 0 : index
    %c0_15 = arith.constant 0 : index
    %8 = vector.load %arg10[%c0_14, %c0_15] : memref<1x32xf32, #tpu.memory_space<vmem>>, vector<1x32xf32>
    %c0_16 = arith.constant 0 : index
    %c0_17 = arith.constant 0 : index
    %9 = vector.load %arg11[%c0_16, %c0_17] : memref<1x32xf32, #tpu.memory_space<vmem>>, vector<1x32xf32>
    %c0_18 = arith.constant 0 : index
    %c0_19 = arith.constant 0 : index
    %10 = vector.load %arg12[%c0_18, %c0_19] : memref<1x32xf32, #tpu.memory_space<vmem>>, vector<1x32xf32>
    %c0_20 = arith.constant 0 : index
    %c0_21 = arith.constant 0 : index
    %11 = vector.load %arg22[%c0_20, %c0_21] : memref<32x4xbf16, #tpu.memory_space<vmem>>, vector<32x4xbf16>
    %c0_22 = arith.constant 0 : index
    %c0_23 = arith.constant 0 : index
    %12 = vector.load %arg23[%c0_22, %c0_23] : memref<4x32xbf16, #tpu.memory_space<vmem>>, vector<4x32xbf16>
    %c0_24 = arith.constant 0 : index
    %c0_25 = arith.constant 0 : index
    %13 = vector.load %arg21[%c0_24, %c0_25] : memref<8x4xf32, #tpu.memory_space<vmem>>, vector<8x4xf32>
    %c0_26 = arith.constant 0 : index
    %c0_27 = arith.constant 0 : index
    %c0_28 = arith.constant 0 : index
    %14 = vector.load %arg1[%c0_26, %c0_27, %c0_28] : memref<8x8x32xf32, #tpu.memory_space<vmem>>, vector<8x8x32xf32>
    %c0_29 = arith.constant 0 : index
    %c0_30 = arith.constant 0 : index
    %c0_31 = arith.constant 0 : index
    %15 = vector.load %arg2[%c0_29, %c0_30, %c0_31] : memref<8x8x2xf32, #tpu.memory_space<vmem>>, vector<8x8x2xf32>
    %16 = vector.shape_cast %14 : vector<8x8x32xf32> to vector<64x32xf32>
    %17 = vector.shape_cast %15 : vector<8x8x2xf32> to vector<64x2xf32>
    %cst = arith.constant dense<0.000000e+00> : vector<64xf32>
    %18 = vector.multi_reduction <add>, %16, %cst [1] : vector<64x32xf32> to vector<64xf32>
    %19 = vector.shape_cast %18 : vector<64xf32> to vector<64x1xf32>
    %cst_32 = arith.constant 3.200000e+01 : f32
    %20 = vector.broadcast %cst_32 : f32 to vector<64x1xf32>
    %21 = arith.divf %19, %20 : vector<64x1xf32>
    %22 = vector.broadcast %21 : vector<64x1xf32> to vector<64x32xf32>
    %23 = arith.subf %16, %22 : vector<64x32xf32>
    %24 = arith.mulf %23, %23 : vector<64x32xf32>
    %cst_33 = arith.constant dense<0.000000e+00> : vector<64xf32>
    %25 = vector.multi_reduction <add>, %24, %cst_33 [1] : vector<64x32xf32> to vector<64xf32>
    %26 = vector.shape_cast %25 : vector<64xf32> to vector<64x1xf32>
    %cst_34 = arith.constant 3.200000e+01 : f32
    %27 = vector.broadcast %cst_34 : f32 to vector<64x1xf32>
    %28 = arith.divf %26, %27 : vector<64x1xf32>
    %29 = vector.broadcast %21 : vector<64x1xf32> to vector<64x32xf32>
    %30 = arith.subf %16, %29 : vector<64x32xf32>
    %cst_35 = arith.constant 9.99999974E-6 : f32
    %31 = vector.broadcast %cst_35 : f32 to vector<64x1xf32>
    %32 = arith.addf %28, %31 : vector<64x1xf32>
    %33 = math.rsqrt %32 : vector<64x1xf32>
    %34 = vector.broadcast %33 : vector<64x1xf32> to vector<64x32xf32>
    %35 = arith.mulf %30, %34 : vector<64x32xf32>
    %36 = vector.broadcast %0 : vector<1x32xf32> to vector<64x32xf32>
    %37 = arith.mulf %35, %36 : vector<64x32xf32>
    %38 = vector.broadcast %1 : vector<1x32xf32> to vector<64x32xf32>
    %39 = arith.addf %37, %38 : vector<64x32xf32>
    %40 = vector.extract_strided_slice %17 {offsets = [0, 0], sizes = [64, 1], strides = [1, 1]} : vector<64x2xf32> to vector<64x1xf32>
    %41 = vector.broadcast %40 : vector<64x1xf32> to vector<64x16xf32>
    %42 = vector.broadcast %2 : vector<1x16xf32> to vector<64x16xf32>
    %43 = arith.mulf %41, %42 : vector<64x16xf32>
    %44 = vector.extract_strided_slice %17 {offsets = [0, 1], sizes = [64, 1], strides = [1, 1]} : vector<64x2xf32> to vector<64x1xf32>
    %45 = vector.broadcast %44 : vector<64x1xf32> to vector<64x16xf32>
    %46 = vector.broadcast %3 : vector<1x16xf32> to vector<64x16xf32>
    %47 = arith.mulf %45, %46 : vector<64x16xf32>
    %48 = arith.addf %43, %47 : vector<64x16xf32>
    %49 = vector.broadcast %4 : vector<1x16xf32> to vector<64x16xf32>
    %50 = arith.addf %48, %49 : vector<64x16xf32>
    %cst_36 = arith.constant dense<0.000000e+00> : vector<64xf32>
    %51 = vector.multi_reduction <add>, %50, %cst_36 [1] : vector<64x16xf32> to vector<64xf32>
    %52 = vector.shape_cast %51 : vector<64xf32> to vector<64x1xf32>
    %cst_37 = arith.constant 1.600000e+01 : f32
    %53 = vector.broadcast %cst_37 : f32 to vector<64x1xf32>
    %54 = arith.divf %52, %53 : vector<64x1xf32>
    %55 = vector.broadcast %54 : vector<64x1xf32> to vector<64x16xf32>
    %56 = arith.subf %50, %55 : vector<64x16xf32>
    %57 = arith.mulf %56, %56 : vector<64x16xf32>
    %cst_38 = arith.constant dense<0.000000e+00> : vector<64xf32>
    %58 = vector.multi_reduction <add>, %57, %cst_38 [1] : vector<64x16xf32> to vector<64xf32>
    %59 = vector.shape_cast %58 : vector<64xf32> to vector<64x1xf32>
    %cst_39 = arith.constant 1.600000e+01 : f32
    %60 = vector.broadcast %cst_39 : f32 to vector<64x1xf32>
    %61 = arith.divf %59, %60 : vector<64x1xf32>
    %62 = vector.broadcast %54 : vector<64x1xf32> to vector<64x16xf32>
    %63 = arith.subf %50, %62 : vector<64x16xf32>
    %cst_40 = arith.constant 9.99999974E-6 : f32
    %64 = vector.broadcast %cst_40 : f32 to vector<64x1xf32>
    %65 = arith.addf %61, %64 : vector<64x1xf32>
    %66 = math.rsqrt %65 : vector<64x1xf32>
    %67 = vector.broadcast %66 : vector<64x1xf32> to vector<64x16xf32>
    %68 = arith.mulf %63, %67 : vector<64x16xf32>
    %69 = vector.broadcast %5 : vector<1x16xf32> to vector<64x16xf32>
    %70 = arith.mulf %68, %69 : vector<64x16xf32>
    %71 = vector.broadcast %6 : vector<1x16xf32> to vector<64x16xf32>
    %72 = arith.addf %70, %71 : vector<64x16xf32>
    %73 = math.tanh %72 : vector<64x16xf32>
    %74 = arith.truncf %73 : vector<64x16xf32> to vector<64x16xbf16>
    %cst_41 = arith.constant dense<0.000000e+00> : vector<64x32xf32>
    %75 = tpu.matmul %74, %7, %cst_41 {dimension_numbers = #tpu.dot_dimension_numbers<[1], [0], [0], [1], [0, 0, 1, 1], [], []>} : vector<64x16xbf16>, vector<16x32xbf16>, vector<64x32xf32> -> vector<64x32xf32>
    %76 = vector.broadcast %8 : vector<1x32xf32> to vector<64x32xf32>
    %77 = arith.addf %75, %76 : vector<64x32xf32>
    %cst_42 = arith.constant dense<0.000000e+00> : vector<64xf32>
    %78 = vector.multi_reduction <add>, %77, %cst_42 [1] : vector<64x32xf32> to vector<64xf32>
    %79 = vector.shape_cast %78 : vector<64xf32> to vector<64x1xf32>
    %cst_43 = arith.constant 3.200000e+01 : f32
    %80 = vector.broadcast %cst_43 : f32 to vector<64x1xf32>
    %81 = arith.divf %79, %80 : vector<64x1xf32>
    %82 = vector.broadcast %81 : vector<64x1xf32> to vector<64x32xf32>
    %83 = arith.subf %77, %82 : vector<64x32xf32>
    %84 = arith.mulf %83, %83 : vector<64x32xf32>
    %cst_44 = arith.constant dense<0.000000e+00> : vector<64xf32>
    %85 = vector.multi_reduction <add>, %84, %cst_44 [1] : vector<64x32xf32> to vector<64xf32>
    %86 = vector.shape_cast %85 : vector<64xf32> to vector<64x1xf32>
    %cst_45 = arith.constant 3.200000e+01 : f32
    %87 = vector.broadcast %cst_45 : f32 to vector<64x1xf32>
    %88 = arith.divf %86, %87 : vector<64x1xf32>
    %89 = vector.broadcast %81 : vector<64x1xf32> to vector<64x32xf32>
    %90 = arith.subf %77, %89 : vector<64x32xf32>
    %cst_46 = arith.constant 9.99999974E-6 : f32
    %91 = vector.broadcast %cst_46 : f32 to vector<64x1xf32>
    %92 = arith.addf %88, %91 : vector<64x1xf32>
    %93 = math.rsqrt %92 : vector<64x1xf32>
    %94 = vector.broadcast %93 : vector<64x1xf32> to vector<64x32xf32>
    %95 = arith.mulf %90, %94 : vector<64x32xf32>
    %96 = vector.broadcast %9 : vector<1x32xf32> to vector<64x32xf32>
    %97 = arith.mulf %95, %96 : vector<64x32xf32>
    %98 = vector.broadcast %10 : vector<1x32xf32> to vector<64x32xf32>
    %99 = arith.addf %97, %98 : vector<64x32xf32>
    %100 = arith.addf %39, %99 : vector<64x32xf32>
    %101 = arith.truncf %100 : vector<64x32xf32> to vector<64x32xbf16>
    %c0_47 = arith.constant 0 : index
    %c0_48 = arith.constant 0 : index
    %102 = vector.load %arg15[%c0_47, %c0_48] : memref<32x32xbf16, #tpu.memory_space<vmem>>, vector<32x32xbf16>
    %cst_49 = arith.constant dense<0.000000e+00> : vector<64x32xf32>
    %103 = tpu.matmul %101, %102, %cst_49 {dimension_numbers = #tpu.dot_dimension_numbers<[1], [0], [0], [1], [0, 0, 1, 1], [], []>} : vector<64x32xbf16>, vector<32x32xbf16>, vector<64x32xf32> -> vector<64x32xf32>
    %c0_50 = arith.constant 0 : index
    %c0_51 = arith.constant 0 : index
    %104 = vector.load %arg16[%c0_50, %c0_51] : memref<1x32xf32, #tpu.memory_space<vmem>>, vector<1x32xf32>
    %105 = vector.broadcast %104 : vector<1x32xf32> to vector<64x32xf32>
    %106 = arith.addf %103, %105 : vector<64x32xf32>
    %c0_52 = arith.constant 0 : index
    %c0_53 = arith.constant 0 : index
    %107 = vector.load %arg17[%c0_52, %c0_53] : memref<32x32xbf16, #tpu.memory_space<vmem>>, vector<32x32xbf16>
    %cst_54 = arith.constant dense<0.000000e+00> : vector<64x32xf32>
    %108 = tpu.matmul %101, %107, %cst_54 {dimension_numbers = #tpu.dot_dimension_numbers<[1], [0], [0], [1], [0, 0, 1, 1], [], []>} : vector<64x32xbf16>, vector<32x32xbf16>, vector<64x32xf32> -> vector<64x32xf32>
    %c0_55 = arith.constant 0 : index
    %c0_56 = arith.constant 0 : index
    %109 = vector.load %arg18[%c0_55, %c0_56] : memref<1x32xf32, #tpu.memory_space<vmem>>, vector<1x32xf32>
    %110 = vector.broadcast %109 : vector<1x32xf32> to vector<64x32xf32>
    %111 = arith.addf %108, %110 : vector<64x32xf32>
    %112 = vector.extract_strided_slice %14 {offsets = [0, 4, 0], sizes = [8, 1, 32], strides = [1, 1, 1]} : vector<8x8x32xf32> to vector<8x1x32xf32>
    %113 = vector.shape_cast %112 : vector<8x1x32xf32> to vector<8x32xf32>
    %114 = vector.extract_strided_slice %15 {offsets = [0, 4, 0], sizes = [8, 1, 2], strides = [1, 1, 1]} : vector<8x8x2xf32> to vector<8x1x2xf32>
    %115 = vector.shape_cast %114 : vector<8x1x2xf32> to vector<8x2xf32>
    %cst_57 = arith.constant dense<0.000000e+00> : vector<8xf32>
    %116 = vector.multi_reduction <add>, %113, %cst_57 [1] : vector<8x32xf32> to vector<8xf32>
    %117 = vector.shape_cast %116 : vector<8xf32> to vector<8x1xf32>
    %cst_58 = arith.constant 3.200000e+01 : f32
    %118 = vector.broadcast %cst_58 : f32 to vector<8x1xf32>
    %119 = arith.divf %117, %118 : vector<8x1xf32>
    %120 = vector.broadcast %119 : vector<8x1xf32> to vector<8x32xf32>
    %121 = arith.subf %113, %120 : vector<8x32xf32>
    %122 = arith.mulf %121, %121 : vector<8x32xf32>
    %cst_59 = arith.constant dense<0.000000e+00> : vector<8xf32>
    %123 = vector.multi_reduction <add>, %122, %cst_59 [1] : vector<8x32xf32> to vector<8xf32>
    %124 = vector.shape_cast %123 : vector<8xf32> to vector<8x1xf32>
    %cst_60 = arith.constant 3.200000e+01 : f32
    %125 = vector.broadcast %cst_60 : f32 to vector<8x1xf32>
    %126 = arith.divf %124, %125 : vector<8x1xf32>
    %127 = vector.broadcast %119 : vector<8x1xf32> to vector<8x32xf32>
    %128 = arith.subf %113, %127 : vector<8x32xf32>
    %cst_61 = arith.constant 9.99999974E-6 : f32
    %129 = vector.broadcast %cst_61 : f32 to vector<8x1xf32>
    %130 = arith.addf %126, %129 : vector<8x1xf32>
    %131 = math.rsqrt %130 : vector<8x1xf32>
    %132 = vector.broadcast %131 : vector<8x1xf32> to vector<8x32xf32>
    %133 = arith.mulf %128, %132 : vector<8x32xf32>
    %134 = vector.broadcast %0 : vector<1x32xf32> to vector<8x32xf32>
    %135 = arith.mulf %133, %134 : vector<8x32xf32>
    %136 = vector.broadcast %1 : vector<1x32xf32> to vector<8x32xf32>
    %137 = arith.addf %135, %136 : vector<8x32xf32>
    %138 = vector.extract_strided_slice %115 {offsets = [0, 0], sizes = [8, 1], strides = [1, 1]} : vector<8x2xf32> to vector<8x1xf32>
    %139 = vector.broadcast %138 : vector<8x1xf32> to vector<8x16xf32>
    %140 = vector.broadcast %2 : vector<1x16xf32> to vector<8x16xf32>
    %141 = arith.mulf %139, %140 : vector<8x16xf32>
    %142 = vector.extract_strided_slice %115 {offsets = [0, 1], sizes = [8, 1], strides = [1, 1]} : vector<8x2xf32> to vector<8x1xf32>
    %143 = vector.broadcast %142 : vector<8x1xf32> to vector<8x16xf32>
    %144 = vector.broadcast %3 : vector<1x16xf32> to vector<8x16xf32>
    %145 = arith.mulf %143, %144 : vector<8x16xf32>
    %146 = arith.addf %141, %145 : vector<8x16xf32>
    %147 = vector.broadcast %4 : vector<1x16xf32> to vector<8x16xf32>
    %148 = arith.addf %146, %147 : vector<8x16xf32>
    %cst_62 = arith.constant dense<0.000000e+00> : vector<8xf32>
    %149 = vector.multi_reduction <add>, %148, %cst_62 [1] : vector<8x16xf32> to vector<8xf32>
    %150 = vector.shape_cast %149 : vector<8xf32> to vector<8x1xf32>
    %cst_63 = arith.constant 1.600000e+01 : f32
    %151 = vector.broadcast %cst_63 : f32 to vector<8x1xf32>
    %152 = arith.divf %150, %151 : vector<8x1xf32>
    %153 = vector.broadcast %152 : vector<8x1xf32> to vector<8x16xf32>
    %154 = arith.subf %148, %153 : vector<8x16xf32>
    %155 = arith.mulf %154, %154 : vector<8x16xf32>
    %cst_64 = arith.constant dense<0.000000e+00> : vector<8xf32>
    %156 = vector.multi_reduction <add>, %155, %cst_64 [1] : vector<8x16xf32> to vector<8xf32>
    %157 = vector.shape_cast %156 : vector<8xf32> to vector<8x1xf32>
    %cst_65 = arith.constant 1.600000e+01 : f32
    %158 = vector.broadcast %cst_65 : f32 to vector<8x1xf32>
    %159 = arith.divf %157, %158 : vector<8x1xf32>
    %160 = vector.broadcast %152 : vector<8x1xf32> to vector<8x16xf32>
    %161 = arith.subf %148, %160 : vector<8x16xf32>
    %cst_66 = arith.constant 9.99999974E-6 : f32
    %162 = vector.broadcast %cst_66 : f32 to vector<8x1xf32>
    %163 = arith.addf %159, %162 : vector<8x1xf32>
    %164 = math.rsqrt %163 : vector<8x1xf32>
    %165 = vector.broadcast %164 : vector<8x1xf32> to vector<8x16xf32>
    %166 = arith.mulf %161, %165 : vector<8x16xf32>
    %167 = vector.broadcast %5 : vector<1x16xf32> to vector<8x16xf32>
    %168 = arith.mulf %166, %167 : vector<8x16xf32>
    %169 = vector.broadcast %6 : vector<1x16xf32> to vector<8x16xf32>
    %170 = arith.addf %168, %169 : vector<8x16xf32>
    %171 = math.tanh %170 : vector<8x16xf32>
    %172 = arith.truncf %171 : vector<8x16xf32> to vector<8x16xbf16>
    %cst_67 = arith.constant dense<0.000000e+00> : vector<8x32xf32>
    %173 = tpu.matmul %172, %7, %cst_67 {dimension_numbers = #tpu.dot_dimension_numbers<[1], [0], [0], [1], [0, 0, 1, 1], [], []>} : vector<8x16xbf16>, vector<16x32xbf16>, vector<8x32xf32> -> vector<8x32xf32>
    %174 = vector.broadcast %8 : vector<1x32xf32> to vector<8x32xf32>
    %175 = arith.addf %173, %174 : vector<8x32xf32>
    %cst_68 = arith.constant dense<0.000000e+00> : vector<8xf32>
    %176 = vector.multi_reduction <add>, %175, %cst_68 [1] : vector<8x32xf32> to vector<8xf32>
    %177 = vector.shape_cast %176 : vector<8xf32> to vector<8x1xf32>
    %cst_69 = arith.constant 3.200000e+01 : f32
    %178 = vector.broadcast %cst_69 : f32 to vector<8x1xf32>
    %179 = arith.divf %177, %178 : vector<8x1xf32>
    %180 = vector.broadcast %179 : vector<8x1xf32> to vector<8x32xf32>
    %181 = arith.subf %175, %180 : vector<8x32xf32>
    %182 = arith.mulf %181, %181 : vector<8x32xf32>
    %cst_70 = arith.constant dense<0.000000e+00> : vector<8xf32>
    %183 = vector.multi_reduction <add>, %182, %cst_70 [1] : vector<8x32xf32> to vector<8xf32>
    %184 = vector.shape_cast %183 : vector<8xf32> to vector<8x1xf32>
    %cst_71 = arith.constant 3.200000e+01 : f32
    %185 = vector.broadcast %cst_71 : f32 to vector<8x1xf32>
    %186 = arith.divf %184, %185 : vector<8x1xf32>
    %187 = vector.broadcast %179 : vector<8x1xf32> to vector<8x32xf32>
    %188 = arith.subf %175, %187 : vector<8x32xf32>
    %cst_72 = arith.constant 9.99999974E-6 : f32
    %189 = vector.broadcast %cst_72 : f32 to vector<8x1xf32>
    %190 = arith.addf %186, %189 : vector<8x1xf32>
    %191 = math.rsqrt %190 : vector<8x1xf32>
    %192 = vector.broadcast %191 : vector<8x1xf32> to vector<8x32xf32>
    %193 = arith.mulf %188, %192 : vector<8x32xf32>
    %194 = vector.broadcast %9 : vector<1x32xf32> to vector<8x32xf32>
    %195 = arith.mulf %193, %194 : vector<8x32xf32>
    %196 = vector.broadcast %10 : vector<1x32xf32> to vector<8x32xf32>
    %197 = arith.addf %195, %196 : vector<8x32xf32>
    %198 = arith.addf %137, %197 : vector<8x32xf32>
    %199 = arith.truncf %198 : vector<8x32xf32> to vector<8x32xbf16>
    %c0_73 = arith.constant 0 : index
    %c0_74 = arith.constant 0 : index
    %200 = vector.load %arg13[%c0_73, %c0_74] : memref<32x32xbf16, #tpu.memory_space<vmem>>, vector<32x32xbf16>
    %cst_75 = arith.constant dense<0.000000e+00> : vector<8x32xf32>
    %201 = tpu.matmul %199, %200, %cst_75 {dimension_numbers = #tpu.dot_dimension_numbers<[1], [0], [0], [1], [0, 0, 1, 1], [], []>} : vector<8x32xbf16>, vector<32x32xbf16>, vector<8x32xf32> -> vector<8x32xf32>
    %c0_76 = arith.constant 0 : index
    %c0_77 = arith.constant 0 : index
    %202 = vector.load %arg14[%c0_76, %c0_77] : memref<1x32xf32, #tpu.memory_space<vmem>>, vector<1x32xf32>
    %203 = vector.broadcast %202 : vector<1x32xf32> to vector<8x32xf32>
    %204 = arith.addf %201, %203 : vector<8x32xf32>
    %cst_78 = arith.constant 0.353553265 : f32
    %205 = vector.broadcast %cst_78 : f32 to vector<8x32xf32>
    %206 = arith.mulf %204, %205 : vector<8x32xf32>
    %207 = vector.shape_cast %206 : vector<8x32xf32> to vector<8x1x32xf32>
    %208 = vector.shape_cast %207 : vector<8x1x32xf32> to vector<8x1x32xf32>
    %209 = vector.broadcast %208 : vector<8x1x32xf32> to vector<8x8x32xf32>
    %210 = vector.shape_cast %209 : vector<8x8x32xf32> to vector<64x32xf32>
    %211 = arith.mulf %210, %106 : vector<64x32xf32>
    %212 = arith.truncf %211 : vector<64x32xf32> to vector<64x32xbf16>
    %cst_79 = arith.constant dense<0.000000e+00> : vector<64x4xf32>
    %213 = tpu.matmul %212, %11, %cst_79 {dimension_numbers = #tpu.dot_dimension_numbers<[1], [0], [0], [1], [0, 0, 1, 1], [], []>} : vector<64x32xbf16>, vector<32x4xbf16>, vector<64x4xf32> -> vector<64x4xf32>
    %214 = vector.shape_cast %213 : vector<64x4xf32> to vector<8x8x4xf32>
    %215 = vector.shape_cast %13 : vector<8x4xf32> to vector<1x8x4xf32>
    %216 = vector.broadcast %215 : vector<1x8x4xf32> to vector<8x8x4xf32>
    %217 = arith.addf %214, %216 : vector<8x8x4xf32>
    %cst_80 = arith.constant -1.000000e+01 : f32
    %cst_81 = arith.constant 1.000000e+01 : f32
    %218 = vector.broadcast %cst_80 : f32 to vector<8x8x4xf32>
    %219 = arith.maximumf %218, %217 : vector<8x8x4xf32>
    %220 = vector.broadcast %cst_81 : f32 to vector<8x8x4xf32>
    %221 = arith.minimumf %220, %219 : vector<8x8x4xf32>
    %222 = math.exp %221 : vector<8x8x4xf32>
    %cst_82 = arith.constant dense<0.000000e+00> : vector<8x4xf32>
    %223 = vector.multi_reduction <add>, %222, %cst_82 [1] : vector<8x8x4xf32> to vector<8x4xf32>
    %224 = vector.shape_cast %223 : vector<8x4xf32> to vector<8x1x4xf32>
    %225 = tpu.reciprocal %224 {approx = true} : vector<8x1x4xf32> -> vector<8x1x4xf32>
    %226 = vector.broadcast %225 : vector<8x1x4xf32> to vector<8x8x4xf32>
    %227 = arith.mulf %222, %226 : vector<8x8x4xf32>
    %228 = vector.shape_cast %227 : vector<8x8x4xf32> to vector<64x4xf32>
    %229 = arith.truncf %228 : vector<64x4xf32> to vector<64x4xbf16>
    %cst_83 = arith.constant dense<0.000000e+00> : vector<64x32xf32>
    %230 = tpu.matmul %229, %12, %cst_83 {dimension_numbers = #tpu.dot_dimension_numbers<[1], [0], [0], [1], [0, 0, 1, 1], [], []>} : vector<64x4xbf16>, vector<4x32xbf16>, vector<64x32xf32> -> vector<64x32xf32>
    %231 = arith.mulf %230, %111 : vector<64x32xf32>
    %232 = vector.shape_cast %231 : vector<64x32xf32> to vector<8x8x32xf32>
    %cst_84 = arith.constant dense<0.000000e+00> : vector<8x32xf32>
    %233 = vector.multi_reduction <add>, %232, %cst_84 [1] : vector<8x8x32xf32> to vector<8x32xf32>
    %234 = arith.truncf %233 : vector<8x32xf32> to vector<8x32xbf16>
    %c0_85 = arith.constant 0 : index
    %c0_86 = arith.constant 0 : index
    %235 = vector.load %arg19[%c0_85, %c0_86] : memref<32x32xbf16, #tpu.memory_space<vmem>>, vector<32x32xbf16>
    %cst_87 = arith.constant dense<0.000000e+00> : vector<8x32xf32>
    %236 = tpu.matmul %234, %235, %cst_87 {dimension_numbers = #tpu.dot_dimension_numbers<[1], [0], [0], [1], [0, 0, 1, 1], [], []>} : vector<8x32xbf16>, vector<32x32xbf16>, vector<8x32xf32> -> vector<8x32xf32>
    %c0_88 = arith.constant 0 : index
    %c0_89 = arith.constant 0 : index
    %237 = vector.load %arg20[%c0_88, %c0_89] : memref<1x32xf32, #tpu.memory_space<vmem>>, vector<1x32xf32>
    %238 = vector.broadcast %237 : vector<1x32xf32> to vector<8x32xf32>
    %239 = arith.addf %236, %238 : vector<8x32xf32>
    %240 = arith.addf %239, %113 : vector<8x32xf32>
    %c0_90 = arith.constant 0 : index
    %c0_91 = arith.constant 0 : index
    %241 = vector.load %arg24[%c0_90, %c0_91] : memref<1x32xf32, #tpu.memory_space<vmem>>, vector<1x32xf32>
    %c0_92 = arith.constant 0 : index
    %c0_93 = arith.constant 0 : index
    %242 = vector.load %arg25[%c0_92, %c0_93] : memref<1x32xf32, #tpu.memory_space<vmem>>, vector<1x32xf32>
    %cst_94 = arith.constant dense<0.000000e+00> : vector<8xf32>
    %243 = vector.multi_reduction <add>, %240, %cst_94 [1] : vector<8x32xf32> to vector<8xf32>
    %244 = vector.shape_cast %243 : vector<8xf32> to vector<8x1xf32>
    %cst_95 = arith.constant 3.200000e+01 : f32
    %245 = vector.broadcast %cst_95 : f32 to vector<8x1xf32>
    %246 = arith.divf %244, %245 : vector<8x1xf32>
    %247 = vector.broadcast %246 : vector<8x1xf32> to vector<8x32xf32>
    %248 = arith.subf %240, %247 : vector<8x32xf32>
    %249 = arith.mulf %248, %248 : vector<8x32xf32>
    %cst_96 = arith.constant dense<0.000000e+00> : vector<8xf32>
    %250 = vector.multi_reduction <add>, %249, %cst_96 [1] : vector<8x32xf32> to vector<8xf32>
    %251 = vector.shape_cast %250 : vector<8xf32> to vector<8x1xf32>
    %cst_97 = arith.constant 3.200000e+01 : f32
    %252 = vector.broadcast %cst_97 : f32 to vector<8x1xf32>
    %253 = arith.divf %251, %252 : vector<8x1xf32>
    %254 = vector.broadcast %246 : vector<8x1xf32> to vector<8x32xf32>
    %255 = arith.subf %240, %254 : vector<8x32xf32>
    %cst_98 = arith.constant 9.99999974E-6 : f32
    %256 = vector.broadcast %cst_98 : f32 to vector<8x1xf32>
    %257 = arith.addf %253, %256 : vector<8x1xf32>
    %258 = math.rsqrt %257 : vector<8x1xf32>
    %259 = vector.broadcast %258 : vector<8x1xf32> to vector<8x32xf32>
    %260 = arith.mulf %255, %259 : vector<8x32xf32>
    %261 = vector.broadcast %241 : vector<1x32xf32> to vector<8x32xf32>
    %262 = arith.mulf %260, %261 : vector<8x32xf32>
    %263 = vector.broadcast %242 : vector<1x32xf32> to vector<8x32xf32>
    %264 = arith.addf %262, %263 : vector<8x32xf32>
    %265 = arith.truncf %264 : vector<8x32xf32> to vector<8x32xbf16>
    %c0_99 = arith.constant 0 : index
    %c0_100 = arith.constant 0 : index
    %266 = vector.load %arg26[%c0_99, %c0_100] : memref<32x128xbf16, #tpu.memory_space<vmem>>, vector<32x128xbf16>
    %cst_101 = arith.constant dense<0.000000e+00> : vector<8x128xf32>
    %267 = tpu.matmul %265, %266, %cst_101 {dimension_numbers = #tpu.dot_dimension_numbers<[1], [0], [0], [1], [0, 0, 1, 1], [], []>} : vector<8x32xbf16>, vector<32x128xbf16>, vector<8x128xf32> -> vector<8x128xf32>
    %c0_102 = arith.constant 0 : index
    %c0_103 = arith.constant 0 : index
    %268 = vector.load %arg27[%c0_102, %c0_103] : memref<1x128xf32, #tpu.memory_space<vmem>>, vector<1x128xf32>
    %269 = vector.broadcast %268 : vector<1x128xf32> to vector<8x128xf32>
    %270 = arith.addf %267, %269 : vector<8x128xf32>
    %cst_104 = arith.constant 5.000000e-01 : f32
    %271 = vector.broadcast %cst_104 : f32 to vector<8x128xf32>
    %272 = arith.mulf %271, %270 : vector<8x128xf32>
    %cst_105 = arith.constant 0.707106769 : f32
    %273 = vector.broadcast %cst_105 : f32 to vector<8x128xf32>
    %274 = arith.mulf %270, %273 : vector<8x128xf32>
    %cst_106 = arith.constant 0.000000e+00 : f32
    %275 = vector.broadcast %cst_106 : f32 to vector<8x128xf32>
    %276 = arith.cmpf oge, %274, %275 : vector<8x128xf32>
    %cst_107 = arith.constant 1.000000e+00 : f32
    %cst_108 = arith.constant -1.000000e+00 : f32
    %277 = vector.broadcast %cst_107 : f32 to vector<8x128xf32>
    %278 = vector.broadcast %cst_108 : f32 to vector<8x128xf32>
    %279 = arith.select %276, %277, %278 : vector<8x128xi1>, vector<8x128xf32>
    %280 = math.absf %274 : vector<8x128xf32>
    %cst_109 = arith.constant 0.327591091 : f32
    %281 = vector.broadcast %cst_109 : f32 to vector<8x128xf32>
    %282 = arith.mulf %281, %280 : vector<8x128xf32>
    %cst_110 = arith.constant 1.000000e+00 : f32
    %283 = vector.broadcast %cst_110 : f32 to vector<8x128xf32>
    %284 = arith.addf %283, %282 : vector<8x128xf32>
    %cst_111 = arith.constant 1.000000e+00 : f32
    %285 = vector.broadcast %cst_111 : f32 to vector<8x128xf32>
    %286 = arith.divf %285, %284 : vector<8x128xf32>
    %cst_112 = arith.constant 1.06140542 : f32
    %287 = vector.broadcast %cst_112 : f32 to vector<8x128xf32>
    %288 = arith.mulf %287, %286 : vector<8x128xf32>
    %cst_113 = arith.constant -1.45315206 : f32
    %289 = vector.broadcast %cst_113 : f32 to vector<8x128xf32>
    %290 = arith.addf %288, %289 : vector<8x128xf32>
    %291 = arith.mulf %290, %286 : vector<8x128xf32>
    %cst_114 = arith.constant 1.42141378 : f32
    %292 = vector.broadcast %cst_114 : f32 to vector<8x128xf32>
    %293 = arith.addf %291, %292 : vector<8x128xf32>
    %294 = arith.mulf %293, %286 : vector<8x128xf32>
    %cst_115 = arith.constant -0.284496725 : f32
    %295 = vector.broadcast %cst_115 : f32 to vector<8x128xf32>
    %296 = arith.addf %294, %295 : vector<8x128xf32>
    %297 = arith.mulf %296, %286 : vector<8x128xf32>
    %cst_116 = arith.constant 0.254829586 : f32
    %298 = vector.broadcast %cst_116 : f32 to vector<8x128xf32>
    %299 = arith.addf %297, %298 : vector<8x128xf32>
    %300 = arith.mulf %299, %286 : vector<8x128xf32>
    %cst_117 = arith.constant 0.000000e+00 : f32
    %301 = vector.broadcast %cst_117 : f32 to vector<8x128xf32>
    %302 = arith.subf %301, %280 : vector<8x128xf32>
    %303 = arith.mulf %302, %280 : vector<8x128xf32>
    %304 = math.exp %303 : vector<8x128xf32>
    %305 = arith.mulf %300, %304 : vector<8x128xf32>
    %cst_118 = arith.constant 1.000000e+00 : f32
    %306 = vector.broadcast %cst_118 : f32 to vector<8x128xf32>
    %307 = arith.subf %306, %305 : vector<8x128xf32>
    %308 = arith.mulf %279, %307 : vector<8x128xf32>
    %cst_119 = arith.constant 1.000000e+00 : f32
    %309 = vector.broadcast %cst_119 : f32 to vector<8x128xf32>
    %310 = arith.addf %309, %308 : vector<8x128xf32>
    %311 = arith.mulf %272, %310 : vector<8x128xf32>
    %312 = arith.truncf %311 : vector<8x128xf32> to vector<8x128xbf16>
    %c0_120 = arith.constant 0 : index
    %c0_121 = arith.constant 0 : index
    %313 = vector.load %arg28[%c0_120, %c0_121] : memref<128x32xbf16, #tpu.memory_space<vmem>>, vector<128x32xbf16>
    %cst_122 = arith.constant dense<0.000000e+00> : vector<8x32xf32>
    %314 = tpu.matmul %312, %313, %cst_122 {dimension_numbers = #tpu.dot_dimension_numbers<[1], [0], [0], [1], [0, 0, 1, 1], [], []>} : vector<8x128xbf16>, vector<128x32xbf16>, vector<8x32xf32> -> vector<8x32xf32>
    %c0_123 = arith.constant 0 : index
    %c0_124 = arith.constant 0 : index
    %315 = vector.load %arg29[%c0_123, %c0_124] : memref<1x32xf32, #tpu.memory_space<vmem>>, vector<1x32xf32>
    %316 = vector.broadcast %315 : vector<1x32xf32> to vector<8x32xf32>
    %317 = arith.addf %314, %316 : vector<8x32xf32>
    %318 = arith.addf %317, %240 : vector<8x32xf32>
    %c0_125 = arith.constant 0 : index
    %c0_126 = arith.constant 0 : index
    %319 = vector.load %arg30[%c0_125, %c0_126] : memref<8x32xf32, #tpu.memory_space<vmem>>, vector<8x32xf32>
    tpu.vector_store %arg30[%c0_125, %c0_126], %318 {strides = array<i32>} : memref<8x32xf32, #tpu.memory_space<vmem>>, vector<8x32xf32>,
    return
  }
  func.func @transform_0(%arg0: i32) -> (i32, i32, i32) {
    %c0_i32 = arith.constant 0 : i32
    %c0_i32_0 = arith.constant 0 : i32
    %c0_i32_1 = arith.constant 0 : i32
    return %arg0, %c0_i32, %c0_i32_0 : i32, i32, i32
  }
  func.func @transform_1(%arg0: i32) -> (i32, i32, i32) {
    %c0_i32 = arith.constant 0 : i32
    %c0_i32_0 = arith.constant 0 : i32
    %c0_i32_1 = arith.constant 0 : i32
    return %arg0, %c0_i32, %c0_i32_0 : i32, i32, i32
  }
  func.func @transform_2(%arg0: i32) -> (i32, i32) {
    %c0_i32 = arith.constant 0 : i32
    %c0_i32_0 = arith.constant 0 : i32
    %c0_i32_1 = arith.constant 0 : i32
    return %c0_i32, %c0_i32_0 : i32, i32
  }
  func.func @transform_3(%arg0: i32) -> (i32, i32) {
    %c0_i32 = arith.constant 0 : i32
    %c0_i32_0 = arith.constant 0 : i32
    %c0_i32_1 = arith.constant 0 : i32
    return %c0_i32, %c0_i32_0 : i32, i32
  }
  func.func @transform_4(%arg0: i32) -> (i32, i32) {
    %c0_i32 = arith.constant 0 : i32
    %c0_i32_0 = arith.constant 0 : i32
    %c0_i32_1 = arith.constant 0 : i32
    return %c0_i32, %c0_i32_0 : i32, i32
  }
  func.func @transform_5(%arg0: i32) -> (i32, i32) {
    %c0_i32 = arith.constant 0 : i32
    %c0_i32_0 = arith.constant 0 : i32
    %c0_i32_1 = arith.constant 0 : i32
    return %c0_i32, %c0_i32_0 : i32, i32
  }
  func.func @transform_6(%arg0: i32) -> (i32, i32) {
    %c0_i32 = arith.constant 0 : i32
    %c0_i32_0 = arith.constant 0 : i32
    %c0_i32_1 = arith.constant 0 : i32
    return %c0_i32, %c0_i32_0 : i32, i32
  }
  func.func @transform_7(%arg0: i32) -> (i32, i32) {
    %c0_i32 = arith.constant 0 : i32
    %c0_i32_0 = arith.constant 0 : i32
    %c0_i32_1 = arith.constant 0 : i32
    return %c0_i32, %c0_i32_0 : i32, i32
  }
  func.func @transform_8(%arg0: i32) -> (i32, i32) {
    %c0_i32 = arith.constant 0 : i32
    %c0_i32_0 = arith.constant 0 : i32
    %c0_i32_1 = arith.constant 0 : i32
    return %c0_i32, %c0_i32_0 : i32, i32
  }
  func.func @transform_9(%arg0: i32) -> (i32, i32) {
    %c0_i32 = arith.constant 0 : i32
    %c0_i32_0 = arith.constant 0 : i32
    %c0_i32_1 = arith.constant 0 : i32
    return %c0_i32, %c0_i32_0 : i32, i32
  }
  func.func @transform_10(%arg0: i32) -> (i32, i32) {
    %c0_i32 = arith.constant 0 : i32
    %c0_i32_0 = arith.constant 0 : i32
    %c0_i32_1 = arith.constant 0 : i32
    return %c0_i32, %c0_i32_0 : i32, i32
  }
  func.func @transform_11(%arg0: i32) -> (i32, i32) {
    %c0_i32 = arith.constant 0 : i32
    %c0_i32_0 = arith.constant 0 : i32
    %c0_i32_1 = arith.constant 0 : i32
    return %c0_i32, %c0_i32_0 : i32, i32
  }
  func.func @transform_12(%arg0: i32) -> (i32, i32) {
    %c0_i32 = arith.constant 0 : i32
    %c0_i32_0 = arith.constant 0 : i32
    %c0_i32_1 = arith.constant 0 : i32
    return %c0_i32, %c0_i32_0 : i32, i32
  }
  func.func @transform_13(%arg0: i32) -> (i32, i32) {
    %c0_i32 = arith.constant 0 : i32
    %c0_i32_0 = arith.constant 0 : i32
    %c0_i32_1 = arith.constant 0 : i32
    return %c0_i32, %c0_i32_0 : i32, i32
  }
  func.func @transform_14(%arg0: i32) -> (i32, i32) {
    %c0_i32 = arith.constant 0 : i32
    %c0_i32_0 = arith.constant 0 : i32
    %c0_i32_1 = arith.constant 0 : i32
    return %c0_i32, %c0_i32_0 : i32, i32
  }
  func.func @transform_15(%arg0: i32) -> (i32, i32) {
    %c0_i32 = arith.constant 0 : i32
    %c0_i32_0 = arith.constant 0 : i32
    %c0_i32_1 = arith.constant 0 : i32
    return %c0_i32, %c0_i32_0 : i32, i32
  }
  func.func @transform_16(%arg0: i32) -> (i32, i32) {
    %c0_i32 = arith.constant 0 : i32
    %c0_i32_0 = arith.constant 0 : i32
    %c0_i32_1 = arith.constant 0 : i32
    return %c0_i32, %c0_i32_0 : i32, i32
  }
  func.func @transform_17(%arg0: i32) -> (i32, i32) {
    %c0_i32 = arith.constant 0 : i32
    %c0_i32_0 = arith.constant 0 : i32
    %c0_i32_1 = arith.constant 0 : i32
    return %c0_i32, %c0_i32_0 : i32, i32
  }
  func.func @transform_18(%arg0: i32) -> (i32, i32) {
    %c0_i32 = arith.constant 0 : i32
    %c0_i32_0 = arith.constant 0 : i32
    %c0_i32_1 = arith.constant 0 : i32
    return %c0_i32, %c0_i32_0 : i32, i32
  }
  func.func @transform_19(%arg0: i32) -> (i32, i32) {
    %c0_i32 = arith.constant 0 : i32
    %c0_i32_0 = arith.constant 0 : i32
    %c0_i32_1 = arith.constant 0 : i32
    return %c0_i32, %c0_i32_0 : i32, i32
  }
  func.func @transform_20(%arg0: i32) -> (i32, i32) {
    %c0_i32 = arith.constant 0 : i32
    %c0_i32_0 = arith.constant 0 : i32
    %c0_i32_1 = arith.constant 0 : i32
    return %c0_i32, %c0_i32_0 : i32, i32
  }
  func.func @transform_21(%arg0: i32) -> (i32, i32) {
    %c0_i32 = arith.constant 0 : i32
    %c0_i32_0 = arith.constant 0 : i32
    %c0_i32_1 = arith.constant 0 : i32
    return %c0_i32, %c0_i32_0 : i32, i32
  }
  func.func @transform_22(%arg0: i32) -> (i32, i32) {
    %c0_i32 = arith.constant 0 : i32
    %c0_i32_0 = arith.constant 0 : i32
    %c0_i32_1 = arith.constant 0 : i32
    return %c0_i32, %c0_i32_0 : i32, i32
  }
  func.func @transform_23(%arg0: i32) -> (i32, i32) {
    %c0_i32 = arith.constant 0 : i32
    %c0_i32_0 = arith.constant 0 : i32
    %c0_i32_1 = arith.constant 0 : i32
    return %c0_i32, %c0_i32_0 : i32, i32
  }
  func.func @transform_24(%arg0: i32) -> (i32, i32) {
    %c0_i32 = arith.constant 0 : i32
    %c0_i32_0 = arith.constant 0 : i32
    %c0_i32_1 = arith.constant 0 : i32
    return %c0_i32, %c0_i32_0 : i32, i32
  }
  func.func @transform_25(%arg0: i32) -> (i32, i32) {
    %c0_i32 = arith.constant 0 : i32
    %c0_i32_0 = arith.constant 0 : i32
    %c0_i32_1 = arith.constant 0 : i32
    return %c0_i32, %c0_i32_0 : i32, i32
  }
  func.func @transform_26(%arg0: i32) -> (i32, i32) {
    %c0_i32 = arith.constant 0 : i32
    %c0_i32_0 = arith.constant 0 : i32
    %c0_i32_1 = arith.constant 0 : i32
    return %c0_i32, %c0_i32_0 : i32, i32
  }
  func.func @transform_27(%arg0: i32) -> (i32, i32) {
    %c0_i32 = arith.constant 0 : i32
    %c0_i32_0 = arith.constant 0 : i32
    %c0_i32_1 = arith.constant 0 : i32
    return %c0_i32, %c0_i32_0 : i32, i32
  }
  func.func @transform_28(%arg0: i32) -> (i32, i32) {
    %c0_i32 = arith.constant 0 : i32
    %c0_i32_0 = arith.constant 0 : i32
    %c0_i32_1 = arith.constant 0 : i32
    return %c0_i32, %c0_i32_0 : i32, i32
  }
  func.func @transform_29(%arg0: i32) -> (i32, i32) {
    %c0_i32 = arith.constant 0 : i32
    %c0_i32_0 = arith.constant 0 : i32
    return %arg0, %c0_i32 : i32, i32
  }
}

module attributes {stable_mosaic.version = 11 : i64} {
  func.func @_block_kernel(%arg0: i32, %arg1: memref<8x8x32xf32, #tpu.memory_space<vmem>>, %arg2: memref<8x8x2xf32, #tpu.memory_space<vmem>>, %arg3: memref<1x32xf32, #tpu.memory_space<vmem>>, %arg4: memref<1x32xf32, #tpu.memory_space<vmem>>, %arg5: memref<2x16xf32, #tpu.memory_space<vmem>>, %arg6: memref<1x16xf32, #tpu.memory_space<vmem>>, %arg7: memref<1x16xf32, #tpu.memory_space<vmem>>, %arg8: memref<1x16xf32, #tpu.memory_space<vmem>>, %arg9: memref<16x32xbf16, #tpu.memory_space<vmem>>, %arg10: memref<1x32xf32, #tpu.memory_space<vmem>>, %arg11: memref<1x32xf32, #tpu.memory_space<vmem>>, %arg12: memref<1x32xf32, #tpu.memory_space<vmem>>, %arg13: memref<32x32xbf16, #tpu.memory_space<vmem>>, %arg14: memref<1x32xf32, #tpu.memory_space<vmem>>, %arg15: memref<32x32xbf16, #tpu.memory_space<vmem>>, %arg16: memref<1x32xf32, #tpu.memory_space<vmem>>, %arg17: memref<32x32xbf16, #tpu.memory_space<vmem>>, %arg18: memref<1x32xf32, #tpu.memory_space<vmem>>, %arg19: memref<32x32xbf16, #tpu.memory_space<vmem>>, %arg20: memref<1x32xf32, #tpu.memory_space<vmem>>, %arg21: memref<8x4xf32, #tpu.memory_space<vmem>>, %arg22: memref<32x4xbf16, #tpu.memory_space<vmem>>, %arg23: memref<4x32xbf16, #tpu.memory_space<vmem>>, %arg24: memref<1x32xf32, #tpu.memory_space<vmem>>, %arg25: memref<1x32xf32, #tpu.memory_space<vmem>>, %arg26: memref<32x128xbf16, #tpu.memory_space<vmem>>, %arg27: memref<1x128xf32, #tpu.memory_space<vmem>>, %arg28: memref<128x32xbf16, #tpu.memory_space<vmem>>, %arg29: memref<1x32xf32, #tpu.memory_space<vmem>>, %arg30: memref<8x32xf32, #tpu.memory_space<vmem>>) attributes {dimension_semantics = [#tpu.dimension_semantics<parallel>], iteration_bounds = array<i64: 1>, scalar_prefetch = 0 : i64, scratch_operands = 0 : i64, tpu.core_type = #tpu.core_type<tc>, window_params = [{transform_indices = @transform_0, window_bounds = array<i64: 8, 8, 32>}, {transform_indices = @transform_1, window_bounds = array<i64: 8, 8, 2>}, {pipeline_mode = #tpu.pipeline_mode<synchronous>, transform_indices = @transform_2, window_bounds = array<i64: 1, 32>}, {pipeline_mode = #tpu.pipeline_mode<synchronous>, transform_indices = @transform_3, window_bounds = array<i64: 1, 32>}, {pipeline_mode = #tpu.pipeline_mode<synchronous>, transform_indices = @transform_4, window_bounds = array<i64: 2, 16>}, {pipeline_mode = #tpu.pipeline_mode<synchronous>, transform_indices = @transform_5, window_bounds = array<i64: 1, 16>}, {pipeline_mode = #tpu.pipeline_mode<synchronous>, transform_indices = @transform_6, window_bounds = array<i64: 1, 16>}, {pipeline_mode = #tpu.pipeline_mode<synchronous>, transform_indices = @transform_7, window_bounds = array<i64: 1, 16>}, {pipeline_mode = #tpu.pipeline_mode<synchronous>, transform_indices = @transform_8, window_bounds = array<i64: 16, 32>}, {pipeline_mode = #tpu.pipeline_mode<synchronous>, transform_indices = @transform_9, window_bounds = array<i64: 1, 32>}, {pipeline_mode = #tpu.pipeline_mode<synchronous>, transform_indices = @transform_10, window_bounds = array<i64: 1, 32>}, {pipeline_mode = #tpu.pipeline_mode<synchronous>, transform_indices = @transform_11, window_bounds = array<i64: 1, 32>}, {pipeline_mode = #tpu.pipeline_mode<synchronous>, transform_indices = @transform_12, window_bounds = array<i64: 32, 32>}, {pipeline_mode = #tpu.pipeline_mode<synchronous>, transform_indices = @transform_13, window_bounds = array<i64: 1, 32>}, {pipeline_mode = #tpu.pipeline_mode<synchronous>, transform_indices = @transform_14, window_bounds = array<i64: 32, 32>}, {pipeline_mode = #tpu.pipeline_mode<synchronous>, transform_indices = @transform_15, window_bounds = array<i64: 1, 32>}, {pipeline_mode = #tpu.pipeline_mode<synchronous>, transform_indices = @transform_16, window_bounds = array<i64: 32, 32>}, {pipeline_mode = #tpu.pipeline_mode<synchronous>, transform_indices = @transform_17, window_bounds = array<i64: 1, 32>}, {pipeline_mode = #tpu.pipeline_mode<synchronous>, transform_indices = @transform_18, window_bounds = array<i64: 32, 32>}, {pipeline_mode = #tpu.pipeline_mode<synchronous>, transform_indices = @transform_19, window_bounds = array<i64: 1, 32>}, {pipeline_mode = #tpu.pipeline_mode<synchronous>, transform_indices = @transform_20, window_bounds = array<i64: 8, 4>}, {pipeline_mode = #tpu.pipeline_mode<synchronous>, transform_indices = @transform_21, window_bounds = array<i64: 32, 4>}, {pipeline_mode = #tpu.pipeline_mode<synchronous>, transform_indices = @transform_22, window_bounds = array<i64: 4, 32>}, {pipeline_mode = #tpu.pipeline_mode<synchronous>, transform_indices = @transform_23, window_bounds = array<i64: 1, 32>}, {pipeline_mode = #tpu.pipeline_mode<synchronous>, transform_indices = @transform_24, window_bounds = array<i64: 1, 32>}, {pipeline_mode = #tpu.pipeline_mode<synchronous>, transform_indices = @transform_25, window_bounds = array<i64: 32, 128>}, {pipeline_mode = #tpu.pipeline_mode<synchronous>, transform_indices = @transform_26, window_bounds = array<i64: 1, 128>}, {pipeline_mode = #tpu.pipeline_mode<synchronous>, transform_indices = @transform_27, window_bounds = array<i64: 128, 32>}, {pipeline_mode = #tpu.pipeline_mode<synchronous>, transform_indices = @transform_28, window_bounds = array<i64: 1, 32>}, {transform_indices = @transform_29, window_bounds = array<i64: 8, 32>}]} {
    %c0 = arith.constant 0 : index
    %c0_0 = arith.constant 0 : index
    %0 = vector.load %arg3[%c0, %c0_0] : memref<1x32xf32, #tpu.memory_space<vmem>>, vector<1x32xf32>
    %c0_1 = arith.constant 0 : index
    %c0_2 = arith.constant 0 : index
    %1 = vector.load %arg4[%c0_1, %c0_2] : memref<1x32xf32, #tpu.memory_space<vmem>>, vector<1x32xf32>
    %c0_3 = arith.constant 0 : index
    %c0_4 = arith.constant 0 : index
    %2 = vector.load %arg5[%c0_3, %c0_4] : memref<2x16xf32, #tpu.memory_space<vmem>>, vector<1x16xf32>
    %c1 = arith.constant 1 : index
    %c0_5 = arith.constant 0 : index
    %3 = vector.load %arg5[%c1, %c0_5] : memref<2x16xf32, #tpu.memory_space<vmem>>, vector<1x16xf32>
    %c0_6 = arith.constant 0 : index
    %c0_7 = arith.constant 0 : index
    %4 = vector.load %arg6[%c0_6, %c0_7] : memref<1x16xf32, #tpu.memory_space<vmem>>, vector<1x16xf32>
    %c0_8 = arith.constant 0 : index
    %c0_9 = arith.constant 0 : index
    %5 = vector.load %arg7[%c0_8, %c0_9] : memref<1x16xf32, #tpu.memory_space<vmem>>, vector<1x16xf32>
    %c0_10 = arith.constant 0 : index
    %c0_11 = arith.constant 0 : index
    %6 = vector.load %arg8[%c0_10, %c0_11] : memref<1x16xf32, #tpu.memory_space<vmem>>, vector<1x16xf32>
    %c0_12 = arith.constant 0 : index
    %c0_13 = arith.constant 0 : index
    %7 = vector.load %arg9[%c0_12, %c0_13] : memref<16x32xbf16, #tpu.memory_space<vmem>>, vector<16x32xbf16>
    %c0_14 = arith.constant 0 : index
    %c0_15 = arith.constant 0 : index
    %8 = vector.load %arg10[%c0_14, %c0_15] : memref<1x32xf32, #tpu.memory_space<vmem>>, vector<1x32xf32>
    %c0_16 = arith.constant 0 : index
    %c0_17 = arith.constant 0 : index
    %9 = vector.load %arg11[%c0_16, %c0_17] : memref<1x32xf32, #tpu.memory_space<vmem>>, vector<1x32xf32>
    %c0_18 = arith.constant 0 : index
    %c0_19 = arith.constant 0 : index
    %10 = vector.load %arg12[%c0_18, %c0_19] : memref<1x32xf32, #tpu.memory_space<vmem>>, vector<1x32xf32>
    %c0_20 = arith.constant 0 : index
    %c0_21 = arith.constant 0 : index
    %11 = vector.load %arg22[%c0_20, %c0_21] : memref<32x4xbf16, #tpu.memory_space<vmem>>, vector<32x4xbf16>
    %c0_22 = arith.constant 0 : index
    %c0_23 = arith.constant 0 : index
    %12 = vector.load %arg23[%c0_22, %c0_23] : memref<4x32xbf16, #tpu.memory_space<vmem>>, vector<4x32xbf16>
    %c0_24 = arith.constant 0 : index
    %c0_25 = arith.constant 0 : index
    %13 = vector.load %arg21[%c0_24, %c0_25] : memref<8x4xf32, #tpu.memory_space<vmem>>, vector<8x4xf32>
    %c0_26 = arith.constant 0 : index
    %c0_27 = arith.constant 0 : index
    %c0_28 = arith.constant 0 : index
    %14 = vector.load %arg1[%c0_26, %c0_27, %c0_28] : memref<8x8x32xf32, #tpu.memory_space<vmem>>, vector<8x8x32xf32>
    %c0_29 = arith.constant 0 : index
    %c0_30 = arith.constant 0 : index
    %c0_31 = arith.constant 0 : index
    %15 = vector.load %arg2[%c0_29, %c0_30, %c0_31] : memref<8x8x2xf32, #tpu.memory_space<vmem>>, vector<8x8x2xf32>
    %16 = vector.shape_cast %14 : vector<8x8x32xf32> to vector<64x32xf32>
    %17 = vector.shape_cast %15 : vector<8x8x2xf32> to vector<64x2xf32>
    %cst = arith.constant dense<0.000000e+00> : vector<64xf32>
    %18 = vector.multi_reduction <add>, %16, %cst [1] : vector<64x32xf32> to vector<64xf32>
    %19 = vector.shape_cast %18 : vector<64xf32> to vector<64x1xf32>
    %cst_32 = arith.constant 3.200000e+01 : f32
    %20 = vector.broadcast %cst_32 : f32 to vector<64x1xf32>
    %21 = arith.divf %19, %20 : vector<64x1xf32>
    %22 = vector.broadcast %21 : vector<64x1xf32> to vector<64x32xf32>
    %23 = arith.subf %16, %22 : vector<64x32xf32>
    %24 = arith.mulf %23, %23 : vector<64x32xf32>
    %cst_33 = arith.constant dense<0.000000e+00> : vector<64xf32>
    %25 = vector.multi_reduction <add>, %24, %cst_33 [1] : vector<64x32xf32> to vector<64xf32>
    %26 = vector.shape_cast %25 : vector<64xf32> to vector<64x1xf32>
    %cst_34 = arith.constant 3.200000e+01 : f32
    %27 = vector.broadcast %cst_34 : f32 to vector<64x1xf32>
    %28 = arith.divf %26, %27 : vector<64x1xf32>
    %29 = vector.broadcast %21 : vector<64x1xf32> to vector<64x32xf32>
    %30 = arith.subf %16, %29 : vector<64x32xf32>
    %cst_35 = arith.constant 9.99999974E-6 : f32
    %31 = vector.broadcast %cst_35 : f32 to vector<64x1xf32>
    %32 = arith.addf %28, %31 : vector<64x1xf32>
    %33 = math.rsqrt %32 : vector<64x1xf32>
    %34 = vector.broadcast %33 : vector<64x1xf32> to vector<64x32xf32>
    %35 = arith.mulf %30, %34 : vector<64x32xf32>
    %36 = vector.broadcast %0 : vector<1x32xf32> to vector<64x32xf32>
    %37 = arith.mulf %35, %36 : vector<64x32xf32>
    %38 = vector.broadcast %1 : vector<1x32xf32> to vector<64x32xf32>
    %39 = arith.addf %37, %38 : vector<64x32xf32>
    %40 = vector.extract_strided_slice %17 {offsets = [0, 0], sizes = [64, 1], strides = [1, 1]} : vector<64x2xf32> to vector<64x1xf32>
    %41 = vector.broadcast %40 : vector<64x1xf32> to vector<64x16xf32>
    %42 = vector.broadcast %2 : vector<1x16xf32> to vector<64x16xf32>
    %43 = arith.mulf %41, %42 : vector<64x16xf32>
    %44 = vector.extract_strided_slice %17 {offsets = [0, 1], sizes = [64, 1], strides = [1, 1]} : vector<64x2xf32> to vector<64x1xf32>
    %45 = vector.broadcast %44 : vector<64x1xf32> to vector<64x16xf32>
    %46 = vector.broadcast %3 : vector<1x16xf32> to vector<64x16xf32>
    %47 = arith.mulf %45, %46 : vector<64x16xf32>
    %48 = arith.addf %43, %47 : vector<64x16xf32>
    %49 = vector.broadcast %4 : vector<1x16xf32> to vector<64x16xf32>
    %50 = arith.addf %48, %49 : vector<64x16xf32>
    %cst_36 = arith.constant dense<0.000000e+00> : vector<64xf32>
    %51 = vector.multi_reduction <add>, %50, %cst_36 [1] : vector<64x16xf32> to vector<64xf32>
    %52 = vector.shape_cast %51 : vector<64xf32> to vector<64x1xf32>
    %cst_37 = arith.constant 1.600000e+01 : f32
    %53 = vector.broadcast %cst_37 : f32 to vector<64x1xf32>
    %54 = arith.divf %52, %53 : vector<64x1xf32>
    %55 = vector.broadcast %54 : vector<64x1xf32> to vector<64x16xf32>
    %56 = arith.subf %50, %55 : vector<64x16xf32>
    %57 = arith.mulf %56, %56 : vector<64x16xf32>
    %cst_38 = arith.constant dense<0.000000e+00> : vector<64xf32>
    %58 = vector.multi_reduction <add>, %57, %cst_38 [1] : vector<64x16xf32> to vector<64xf32>
    %59 = vector.shape_cast %58 : vector<64xf32> to vector<64x1xf32>
    %cst_39 = arith.constant 1.600000e+01 : f32
    %60 = vector.broadcast %cst_39 : f32 to vector<64x1xf32>
    %61 = arith.divf %59, %60 : vector<64x1xf32>
    %62 = vector.broadcast %54 : vector<64x1xf32> to vector<64x16xf32>
    %63 = arith.subf %50, %62 : vector<64x16xf32>
    %cst_40 = arith.constant 9.99999974E-6 : f32
    %64 = vector.broadcast %cst_40 : f32 to vector<64x1xf32>
    %65 = arith.addf %61, %64 : vector<64x1xf32>
    %66 = math.rsqrt %65 : vector<64x1xf32>
    %67 = vector.broadcast %66 : vector<64x1xf32> to vector<64x16xf32>
    %68 = arith.mulf %63, %67 : vector<64x16xf32>
    %69 = vector.broadcast %5 : vector<1x16xf32> to vector<64x16xf32>
    %70 = arith.mulf %68, %69 : vector<64x16xf32>
    %71 = vector.broadcast %6 : vector<1x16xf32> to vector<64x16xf32>
    %72 = arith.addf %70, %71 : vector<64x16xf32>
    %73 = math.tanh %72 : vector<64x16xf32>
    %74 = arith.truncf %73 : vector<64x16xf32> to vector<64x16xbf16>
    %cst_41 = arith.constant dense<0.000000e+00> : vector<64x32xf32>
    %75 = tpu.matmul %74, %7, %cst_41 {dimension_numbers = #tpu.dot_dimension_numbers<[1], [0], [0], [1], [0, 0, 1, 1], [], []>} : vector<64x16xbf16>, vector<16x32xbf16>, vector<64x32xf32> -> vector<64x32xf32>
    %76 = vector.broadcast %8 : vector<1x32xf32> to vector<64x32xf32>
    %77 = arith.addf %75, %76 : vector<64x32xf32>
    %cst_42 = arith.constant dense<0.000000e+00> : vector<64xf32>
    %78 = vector.multi_reduction <add>, %77, %cst_42 [1] : vector<64x32xf32> to vector<64xf32>
    %79 = vector.shape_cast %78 : vector<64xf32> to vector<64x1xf32>
    %cst_43 = arith.constant 3.200000e+01 : f32
    %80 = vector.broadcast %cst_43 : f32 to vector<64x1xf32>
    %81 = arith.divf %79, %80 : vector<64x1xf32>
    %82 = vector.broadcast %81 : vector<64x1xf32> to vector<64x32xf32>
    %83 = arith.subf %77, %82 : vector<64x32xf32>
    %84 = arith.mulf %83, %83 : vector<64x32xf32>
    %cst_44 = arith.constant dense<0.000000e+00> : vector<64xf32>
    %85 = vector.multi_reduction <add>, %84, %cst_44 [1] : vector<64x32xf32> to vector<64xf32>
    %86 = vector.shape_cast %85 : vector<64xf32> to vector<64x1xf32>
    %cst_45 = arith.constant 3.200000e+01 : f32
    %87 = vector.broadcast %cst_45 : f32 to vector<64x1xf32>
    %88 = arith.divf %86, %87 : vector<64x1xf32>
    %89 = vector.broadcast %81 : vector<64x1xf32> to vector<64x32xf32>
    %90 = arith.subf %77, %89 : vector<64x32xf32>
    %cst_46 = arith.constant 9.99999974E-6 : f32
    %91 = vector.broadcast %cst_46 : f32 to vector<64x1xf32>
    %92 = arith.addf %88, %91 : vector<64x1xf32>
    %93 = math.rsqrt %92 : vector<64x1xf32>
    %94 = vector.broadcast %93 : vector<64x1xf32> to vector<64x32xf32>
    %95 = arith.mulf %90, %94 : vector<64x32xf32>
    %96 = vector.broadcast %9 : vector<1x32xf32> to vector<64x32xf32>
    %97 = arith.mulf %95, %96 : vector<64x32xf32>
    %98 = vector.broadcast %10 : vector<1x32xf32> to vector<64x32xf32>
    %99 = arith.addf %97, %98 : vector<64x32xf32>
    %100 = arith.addf %39, %99 : vector<64x32xf32>
    %101 = arith.truncf %100 : vector<64x32xf32> to vector<64x32xbf16>
    %c0_47 = arith.constant 0 : index
    %c0_48 = arith.constant 0 : index
    %102 = vector.load %arg15[%c0_47, %c0_48] : memref<32x32xbf16, #tpu.memory_space<vmem>>, vector<32x32xbf16>
    %cst_49 = arith.constant dense<0.000000e+00> : vector<64x32xf32>
    %103 = tpu.matmul %101, %102, %cst_49 {dimension_numbers = #tpu.dot_dimension_numbers<[1], [0], [0], [1], [0, 0, 1, 1], [], []>} : vector<64x32xbf16>, vector<32x32xbf16>, vector<64x32xf32> -> vector<64x32xf32>
    %c0_50 = arith.constant 0 : index
    %c0_51 = arith.constant 0 : index
    %104 = vector.load %arg16[%c0_50, %c0_51] : memref<1x32xf32, #tpu.memory_space<vmem>>, vector<1x32xf32>
    %105 = vector.broadcast %104 : vector<1x32xf32> to vector<64x32xf32>
    %106 = arith.addf %103, %105 : vector<64x32xf32>
    %c0_52 = arith.constant 0 : index
    %c0_53 = arith.constant 0 : index
    %107 = vector.load %arg17[%c0_52, %c0_53] : memref<32x32xbf16, #tpu.memory_space<vmem>>, vector<32x32xbf16>
    %cst_54 = arith.constant dense<0.000000e+00> : vector<64x32xf32>
    %108 = tpu.matmul %101, %107, %cst_54 {dimension_numbers = #tpu.dot_dimension_numbers<[1], [0], [0], [1], [0, 0, 1, 1], [], []>} : vector<64x32xbf16>, vector<32x32xbf16>, vector<64x32xf32> -> vector<64x32xf32>
    %c0_55 = arith.constant 0 : index
    %c0_56 = arith.constant 0 : index
    %109 = vector.load %arg18[%c0_55, %c0_56] : memref<1x32xf32, #tpu.memory_space<vmem>>, vector<1x32xf32>
    %110 = vector.broadcast %109 : vector<1x32xf32> to vector<64x32xf32>
    %111 = arith.addf %108, %110 : vector<64x32xf32>
    %112 = vector.extract_strided_slice %14 {offsets = [0, 4, 0], sizes = [8, 1, 32], strides = [1, 1, 1]} : vector<8x8x32xf32> to vector<8x1x32xf32>
    %113 = vector.shape_cast %112 : vector<8x1x32xf32> to vector<8x32xf32>
    %114 = vector.extract_strided_slice %15 {offsets = [0, 4, 0], sizes = [8, 1, 2], strides = [1, 1, 1]} : vector<8x8x2xf32> to vector<8x1x2xf32>
    %115 = vector.shape_cast %114 : vector<8x1x2xf32> to vector<8x2xf32>
    %cst_57 = arith.constant dense<0.000000e+00> : vector<8xf32>
    %116 = vector.multi_reduction <add>, %113, %cst_57 [1] : vector<8x32xf32> to vector<8xf32>
    %117 = vector.shape_cast %116 : vector<8xf32> to vector<8x1xf32>
    %cst_58 = arith.constant 3.200000e+01 : f32
    %118 = vector.broadcast %cst_58 : f32 to vector<8x1xf32>
    %119 = arith.divf %117, %118 : vector<8x1xf32>
    %120 = vector.broadcast %119 : vector<8x1xf32> to vector<8x32xf32>
    %121 = arith.subf %113, %120 : vector<8x32xf32>
    %122 = arith.mulf %121, %121 : vector<8x32xf32>
    %cst_59 = arith.constant dense<0.000000e+00> : vector<8xf32>
    %123 = vector.multi_reduction <add>, %122, %cst_59 [1] : vector<8x32xf32> to vector<8xf32>
    %124 = vector.shape_cast %123 : vector<8xf32> to vector<8x1xf32>
    %cst_60 = arith.constant 3.200000e+01 : f32
    %125 = vector.broadcast %cst_60 : f32 to vector<8x1xf32>
    %126 = arith.divf %124, %125 : vector<8x1xf32>
    %127 = vector.broadcast %119 : vector<8x1xf32> to vector<8x32xf32>
    %128 = arith.subf %113, %127 : vector<8x32xf32>
    %cst_61 = arith.constant 9.99999974E-6 : f32
    %129 = vector.broadcast %cst_61 : f32 to vector<8x1xf32>
    %130 = arith.addf %126, %129 : vector<8x1xf32>
    %131 = math.rsqrt %130 : vector<8x1xf32>
    %132 = vector.broadcast %131 : vector<8x1xf32> to vector<8x32xf32>
    %133 = arith.mulf %128, %132 : vector<8x32xf32>
    %134 = vector.broadcast %0 : vector<1x32xf32> to vector<8x32xf32>
    %135 = arith.mulf %133, %134 : vector<8x32xf32>
    %136 = vector.broadcast %1 : vector<1x32xf32> to vector<8x32xf32>
    %137 = arith.addf %135, %136 : vector<8x32xf32>
    %138 = vector.extract_strided_slice %115 {offsets = [0, 0], sizes = [8, 1], strides = [1, 1]} : vector<8x2xf32> to vector<8x1xf32>
    %139 = vector.broadcast %138 : vector<8x1xf32> to vector<8x16xf32>
    %140 = vector.broadcast %2 : vector<1x16xf32> to vector<8x16xf32>
    %141 = arith.mulf %139, %140 : vector<8x16xf32>
    %142 = vector.extract_strided_slice %115 {offsets = [0, 1], sizes = [8, 1], strides = [1, 1]} : vector<8x2xf32> to vector<8x1xf32>
    %143 = vector.broadcast %142 : vector<8x1xf32> to vector<8x16xf32>
    %144 = vector.broadcast %3 : vector<1x16xf32> to vector<8x16xf32>
    %145 = arith.mulf %143, %144 : vector<8x16xf32>
    %146 = arith.addf %141, %145 : vector<8x16xf32>
    %147 = vector.broadcast %4 : vector<1x16xf32> to vector<8x16xf32>
    %148 = arith.addf %146, %147 : vector<8x16xf32>
    %cst_62 = arith.constant dense<0.000000e+00> : vector<8xf32>
    %149 = vector.multi_reduction <add>, %148, %cst_62 [1] : vector<8x16xf32> to vector<8xf32>
    %150 = vector.shape_cast %149 : vector<8xf32> to vector<8x1xf32>
    %cst_63 = arith.constant 1.600000e+01 : f32
    %151 = vector.broadcast %cst_63 : f32 to vector<8x1xf32>
    %152 = arith.divf %150, %151 : vector<8x1xf32>
    %153 = vector.broadcast %152 : vector<8x1xf32> to vector<8x16xf32>
    %154 = arith.subf %148, %153 : vector<8x16xf32>
    %155 = arith.mulf %154, %154 : vector<8x16xf32>
    %cst_64 = arith.constant dense<0.000000e+00> : vector<8xf32>
    %156 = vector.multi_reduction <add>, %155, %cst_64 [1] : vector<8x16xf32> to vector<8xf32>
    %157 = vector.shape_cast %156 : vector<8xf32> to vector<8x1xf32>
    %cst_65 = arith.constant 1.600000e+01 : f32
    %158 = vector.broadcast %cst_65 : f32 to vector<8x1xf32>
    %159 = arith.divf %157, %158 : vector<8x1xf32>
    %160 = vector.broadcast %152 : vector<8x1xf32> to vector<8x16xf32>
    %161 = arith.subf %148, %160 : vector<8x16xf32>
    %cst_66 = arith.constant 9.99999974E-6 : f32
    %162 = vector.broadcast %cst_66 : f32 to vector<8x1xf32>
    %163 = arith.addf %159, %162 : vector<8x1xf32>
    %164 = math.rsqrt %163 : vector<8x1xf32>
    %165 = vector.broadcast %164 : vector<8x1xf32> to vector<8x16xf32>
    %166 = arith.mulf %161, %165 : vector<8x16xf32>
    %167 = vector.broadcast %5 : vector<1x16xf32> to vector<8x16xf32>
    %168 = arith.mulf %166, %167 : vector<8x16xf32>
    %169 = vector.broadcast %6 : vector<1x16xf32> to vector<8x16xf32>
    %170 = arith.addf %168, %169 : vector<8x16xf32>
    %171 = math.tanh %170 : vector<8x16xf32>
    %172 = arith.truncf %171 : vector<8x16xf32> to vector<8x16xbf16>
    %cst_67 = arith.constant dense<0.000000e+00> : vector<8x32xf32>
    %173 = tpu.matmul %172, %7, %cst_67 {dimension_numbers = #tpu.dot_dimension_numbers<[1], [0], [0], [1], [0, 0, 1, 1], [], []>} : vector<8x16xbf16>, vector<16x32xbf16>, vector<8x32xf32> -> vector<8x32xf32>
    %174 = vector.broadcast %8 : vector<1x32xf32> to vector<8x32xf32>
    %175 = arith.addf %173, %174 : vector<8x32xf32>
    %cst_68 = arith.constant dense<0.000000e+00> : vector<8xf32>
    %176 = vector.multi_reduction <add>, %175, %cst_68 [1] : vector<8x32xf32> to vector<8xf32>
    %177 = vector.shape_cast %176 : vector<8xf32> to vector<8x1xf32>
    %cst_69 = arith.constant 3.200000e+01 : f32
    %178 = vector.broadcast %cst_69 : f32 to vector<8x1xf32>
    %179 = arith.divf %177, %178 : vector<8x1xf32>
    %180 = vector.broadcast %179 : vector<8x1xf32> to vector<8x32xf32>
    %181 = arith.subf %175, %180 : vector<8x32xf32>
    %182 = arith.mulf %181, %181 : vector<8x32xf32>
    %cst_70 = arith.constant dense<0.000000e+00> : vector<8xf32>
    %183 = vector.multi_reduction <add>, %182, %cst_70 [1] : vector<8x32xf32> to vector<8xf32>
    %184 = vector.shape_cast %183 : vector<8xf32> to vector<8x1xf32>
    %cst_71 = arith.constant 3.200000e+01 : f32
    %185 = vector.broadcast %cst_71 : f32 to vector<8x1xf32>
    %186 = arith.divf %184, %185 : vector<8x1xf32>
    %187 = vector.broadcast %179 : vector<8x1xf32> to vector<8x32xf32>
    %188 = arith.subf %175, %187 : vector<8x32xf32>
    %cst_72 = arith.constant 9.99999974E-6 : f32
    %189 = vector.broadcast %cst_72 : f32 to vector<8x1xf32>
    %190 = arith.addf %186, %189 : vector<8x1xf32>
    %191 = math.rsqrt %190 : vector<8x1xf32>
    %192 = vector.broadcast %191 : vector<8x1xf32> to vector<8x32xf32>
    %193 = arith.mulf %188, %192 : vector<8x32xf32>
    %194 = vector.broadcast %9 : vector<1x32xf32> to vector<8x32xf32>
    %195 = arith.mulf %193, %194 : vector<8x32xf32>
    %196 = vector.broadcast %10 : vector<1x32xf32> to vector<8x32xf32>
    %197 = arith.addf %195, %196 : vector<8x32xf32>
    %198 = arith.addf %137, %197 : vector<8x32xf32>
    %199 = arith.truncf %198 : vector<8x32xf32> to vector<8x32xbf16>
    %c0_73 = arith.constant 0 : index
    %c0_74 = arith.constant 0 : index
    %200 = vector.load %arg13[%c0_73, %c0_74] : memref<32x32xbf16, #tpu.memory_space<vmem>>, vector<32x32xbf16>
    %cst_75 = arith.constant dense<0.000000e+00> : vector<8x32xf32>
    %201 = tpu.matmul %199, %200, %cst_75 {dimension_numbers = #tpu.dot_dimension_numbers<[1], [0], [0], [1], [0, 0, 1, 1], [], []>} : vector<8x32xbf16>, vector<32x32xbf16>, vector<8x32xf32> -> vector<8x32xf32>
    %c0_76 = arith.constant 0 : index
    %c0_77 = arith.constant 0 : index
    %202 = vector.load %arg14[%c0_76, %c0_77] : memref<1x32xf32, #tpu.memory_space<vmem>>, vector<1x32xf32>
    %203 = vector.broadcast %202 : vector<1x32xf32> to vector<8x32xf32>
    %204 = arith.addf %201, %203 : vector<8x32xf32>
    %cst_78 = arith.constant 0.353553265 : f32
    %205 = vector.broadcast %cst_78 : f32 to vector<8x32xf32>
    %206 = arith.mulf %204, %205 : vector<8x32xf32>
    %207 = vector.shape_cast %206 : vector<8x32xf32> to vector<8x1x32xf32>
    %208 = vector.shape_cast %207 : vector<8x1x32xf32> to vector<8x1x32xf32>
    %209 = vector.broadcast %208 : vector<8x1x32xf32> to vector<8x8x32xf32>
    %210 = vector.shape_cast %209 : vector<8x8x32xf32> to vector<64x32xf32>
    %211 = arith.mulf %210, %106 : vector<64x32xf32>
    %212 = arith.truncf %211 : vector<64x32xf32> to vector<64x32xbf16>
    %cst_79 = arith.constant dense<0.000000e+00> : vector<64x4xf32>
    %213 = tpu.matmul %212, %11, %cst_79 {dimension_numbers = #tpu.dot_dimension_numbers<[1], [0], [0], [1], [0, 0, 1, 1], [], []>} : vector<64x32xbf16>, vector<32x4xbf16>, vector<64x4xf32> -> vector<64x4xf32>
    %214 = vector.shape_cast %213 : vector<64x4xf32> to vector<8x8x4xf32>
    %215 = vector.shape_cast %13 : vector<8x4xf32> to vector<1x8x4xf32>
    %216 = vector.broadcast %215 : vector<1x8x4xf32> to vector<8x8x4xf32>
    %217 = arith.addf %214, %216 : vector<8x8x4xf32>
    %cst_80 = arith.constant -1.000000e+01 : f32
    %cst_81 = arith.constant 1.000000e+01 : f32
    %218 = vector.broadcast %cst_80 : f32 to vector<8x8x4xf32>
    %219 = arith.maximumf %218, %217 : vector<8x8x4xf32>
    %220 = vector.broadcast %cst_81 : f32 to vector<8x8x4xf32>
    %221 = arith.minimumf %220, %219 : vector<8x8x4xf32>
    %222 = math.exp %221 : vector<8x8x4xf32>
    %cst_82 = arith.constant dense<0.000000e+00> : vector<8x4xf32>
    %223 = vector.multi_reduction <add>, %222, %cst_82 [1] : vector<8x8x4xf32> to vector<8x4xf32>
    %224 = vector.shape_cast %223 : vector<8x4xf32> to vector<8x1x4xf32>
    %225 = tpu.reciprocal %224 {approx = true} : vector<8x1x4xf32> -> vector<8x1x4xf32>
    %226 = vector.broadcast %225 : vector<8x1x4xf32> to vector<8x8x4xf32>
    %227 = arith.mulf %222, %226 : vector<8x8x4xf32>
    %228 = vector.shape_cast %227 : vector<8x8x4xf32> to vector<64x4xf32>
    %229 = arith.truncf %228 : vector<64x4xf32> to vector<64x4xbf16>
    %cst_83 = arith.constant dense<0.000000e+00> : vector<64x32xf32>
    %230 = tpu.matmul %229, %12, %cst_83 {dimension_numbers = #tpu.dot_dimension_numbers<[1], [0], [0], [1], [0, 0, 1, 1], [], []>} : vector<64x4xbf16>, vector<4x32xbf16>, vector<64x32xf32> -> vector<64x32xf32>
    %231 = arith.mulf %230, %111 : vector<64x32xf32>
    %232 = vector.shape_cast %231 : vector<64x32xf32> to vector<8x8x32xf32>
    %cst_84 = arith.constant dense<0.000000e+00> : vector<8x32xf32>
    %233 = vector.multi_reduction <add>, %232, %cst_84 [1] : vector<8x8x32xf32> to vector<8x32xf32>
    %234 = arith.truncf %233 : vector<8x32xf32> to vector<8x32xbf16>
    %c0_85 = arith.constant 0 : index
    %c0_86 = arith.constant 0 : index
    %235 = vector.load %arg19[%c0_85, %c0_86] : memref<32x32xbf16, #tpu.memory_space<vmem>>, vector<32x32xbf16>
    %cst_87 = arith.constant dense<0.000000e+00> : vector<8x32xf32>
    %236 = tpu.matmul %234, %235, %cst_87 {dimension_numbers = #tpu.dot_dimension_numbers<[1], [0], [0], [1], [0, 0, 1, 1], [], []>} : vector<8x32xbf16>, vector<32x32xbf16>, vector<8x32xf32> -> vector<8x32xf32>
    %c0_88 = arith.constant 0 : index
    %c0_89 = arith.constant 0 : index
    %237 = vector.load %arg20[%c0_88, %c0_89] : memref<1x32xf32, #tpu.memory_space<vmem>>, vector<1x32xf32>
    %238 = vector.broadcast %237 : vector<1x32xf32> to vector<8x32xf32>
    %239 = arith.addf %236, %238 : vector<8x32xf32>
    %240 = arith.addf %239, %113 : vector<8x32xf32>
    %c0_90 = arith.constant 0 : index
    %c0_91 = arith.constant 0 : index
    %241 = vector.load %arg24[%c0_90, %c0_91] : memref<1x32xf32, #tpu.memory_space<vmem>>, vector<1x32xf32>
    %c0_92 = arith.constant 0 : index
    %c0_93 = arith.constant 0 : index
    %242 = vector.load %arg25[%c0_92, %c0_93] : memref<1x32xf32, #tpu.memory_space<vmem>>, vector<1x32xf32>
    %cst_94 = arith.constant dense<0.000000e+00> : vector<8xf32>
    %243 = vector.multi_reduction <add>, %240, %cst_94 [1] : vector<8x32xf32> to vector<8xf32>
    %244 = vector.shape_cast %243 : vector<8xf32> to vector<8x1xf32>
    %cst_95 = arith.constant 3.200000e+01 : f32
    %245 = vector.broadcast %cst_95 : f32 to vector<8x1xf32>
    %246 = arith.divf %244, %245 : vector<8x1xf32>
    %247 = vector.broadcast %246 : vector<8x1xf32> to vector<8x32xf32>
    %248 = arith.subf %240, %247 : vector<8x32xf32>
    %249 = arith.mulf %248, %248 : vector<8x32xf32>
    %cst_96 = arith.constant dense<0.000000e+00> : vector<8xf32>
    %250 = vector.multi_reduction <add>, %249, %cst_96 [1] : vector<8x32xf32> to vector<8xf32>
    %251 = vector.shape_cast %250 : vector<8xf32> to vector<8x1xf32>
    %cst_97 = arith.constant 3.200000e+01 : f32
    %252 = vector.broadcast %cst_97 : f32 to vector<8x1xf32>
    %253 = arith.divf %251, %252 : vector<8x1xf32>
    %254 = vector.broadcast %246 : vector<8x1xf32> to vector<8x32xf32>
    %255 = arith.subf %240, %254 : vector<8x32xf32>
    %cst_98 = arith.constant 9.99999974E-6 : f32
    %256 = vector.broadcast %cst_98 : f32 to vector<8x1xf32>
    %257 = arith.addf %253, %256 : vector<8x1xf32>
    %258 = math.rsqrt %257 : vector<8x1xf32>
    %259 = vector.broadcast %258 : vector<8x1xf32> to vector<8x32xf32>
    %260 = arith.mulf %255, %259 : vector<8x32xf32>
    %261 = vector.broadcast %241 : vector<1x32xf32> to vector<8x32xf32>
    %262 = arith.mulf %260, %261 : vector<8x32xf32>
    %263 = vector.broadcast %242 : vector<1x32xf32> to vector<8x32xf32>
    %264 = arith.addf %262, %263 : vector<8x32xf32>
    %265 = arith.truncf %264 : vector<8x32xf32> to vector<8x32xbf16>
    %c0_99 = arith.constant 0 : index
    %c0_100 = arith.constant 0 : index
    %266 = vector.load %arg26[%c0_99, %c0_100] : memref<32x128xbf16, #tpu.memory_space<vmem>>, vector<32x128xbf16>
    %cst_101 = arith.constant dense<0.000000e+00> : vector<8x128xf32>
    %267 = tpu.matmul %265, %266, %cst_101 {dimension_numbers = #tpu.dot_dimension_numbers<[1], [0], [0], [1], [0, 0, 1, 1], [], []>} : vector<8x32xbf16>, vector<32x128xbf16>, vector<8x128xf32> -> vector<8x128xf32>
    %c0_102 = arith.constant 0 : index
    %c0_103 = arith.constant 0 : index
    %268 = vector.load %arg27[%c0_102, %c0_103] : memref<1x128xf32, #tpu.memory_space<vmem>>, vector<1x128xf32>
    %269 = vector.broadcast %268 : vector<1x128xf32> to vector<8x128xf32>
    %270 = arith.addf %267, %269 : vector<8x128xf32>
    %cst_104 = arith.constant 5.000000e-01 : f32
    %271 = vector.broadcast %cst_104 : f32 to vector<8x128xf32>
    %272 = arith.mulf %271, %270 : vector<8x128xf32>
    %cst_105 = arith.constant 0.707106769 : f32
    %273 = vector.broadcast %cst_105 : f32 to vector<8x128xf32>
    %274 = arith.mulf %270, %273 : vector<8x128xf32>
    %cst_106 = arith.constant 0.000000e+00 : f32
    %275 = vector.broadcast %cst_106 : f32 to vector<8x128xf32>
    %276 = arith.cmpf oge, %274, %275 : vector<8x128xf32>
    %cst_107 = arith.constant 1.000000e+00 : f32
    %cst_108 = arith.constant -1.000000e+00 : f32
    %277 = vector.broadcast %cst_107 : f32 to vector<8x128xf32>
    %278 = vector.broadcast %cst_108 : f32 to vector<8x128xf32>
    %279 = arith.select %276, %277, %278 : vector<8x128xi1>, vector<8x128xf32>
    %280 = math.absf %274 : vector<8x128xf32>
    %cst_109 = arith.constant 0.327591091 : f32
    %281 = vector.broadcast %cst_109 : f32 to vector<8x128xf32>
    %282 = arith.mulf %281, %280 : vector<8x128xf32>
    %cst_110 = arith.constant 1.000000e+00 : f32
    %283 = vector.broadcast %cst_110 : f32 to vector<8x128xf32>
    %284 = arith.addf %283, %282 : vector<8x128xf32>
    %cst_111 = arith.constant 1.000000e+00 : f32
    %285 = vector.broadcast %cst_111 : f32 to vector<8x128xf32>
    %286 = arith.divf %285, %284 : vector<8x128xf32>
    %cst_112 = arith.constant 1.06140542 : f32
    %287 = vector.broadcast %cst_112 : f32 to vector<8x128xf32>
    %288 = arith.mulf %287, %286 : vector<8x128xf32>
    %cst_113 = arith.constant -1.45315206 : f32
    %289 = vector.broadcast %cst_113 : f32 to vector<8x128xf32>
    %290 = arith.addf %288, %289 : vector<8x128xf32>
    %291 = arith.mulf %290, %286 : vector<8x128xf32>
    %cst_114 = arith.constant 1.42141378 : f32
    %292 = vector.broadcast %cst_114 : f32 to vector<8x128xf32>
    %293 = arith.addf %291, %292 : vector<8x128xf32>
    %294 = arith.mulf %293, %286 : vector<8x128xf32>
    %cst_115 = arith.constant -0.284496725 : f32
    %295 = vector.broadcast %cst_115 : f32 to vector<8x128xf32>
    %296 = arith.addf %294, %295 : vector<8x128xf32>
    %297 = arith.mulf %296, %286 : vector<8x128xf32>
    %cst_116 = arith.constant 0.254829586 : f32
    %298 = vector.broadcast %cst_116 : f32 to vector<8x128xf32>
    %299 = arith.addf %297, %298 : vector<8x128xf32>
    %300 = arith.mulf %299, %286 : vector<8x128xf32>
    %cst_117 = arith.constant 0.000000e+00 : f32
    %301 = vector.broadcast %cst_117 : f32 to vector<8x128xf32>
    %302 = arith.subf %301, %280 : vector<8x128xf32>
    %303 = arith.mulf %302, %280 : vector<8x128xf32>
    %304 = math.exp %303 : vector<8x128xf32>
    %305 = arith.mulf %300, %304 : vector<8x128xf32>
    %cst_118 = arith.constant 1.000000e+00 : f32
    %306 = vector.broadcast %cst_118 : f32 to vector<8x128xf32>
    %307 = arith.subf %306, %305 : vector<8x128xf32>
    %308 = arith.mulf %279, %307 : vector<8x128xf32>
    %cst_119 = arith.constant 1.000000e+00 : f32
    %309 = vector.broadcast %cst_119 : f32 to vector<8x128xf32>
    %310 = arith.addf %309, %308 : vector<8x128xf32>
    %311 = arith.mulf %272, %310 : vector<8x128xf32>
    %312 = arith.truncf %311 : vector<8x128xf32> to vector<8x128xbf16>
    %c0_120 = arith.constant 0 : index
    %c0_121 = arith.constant 0 : index
    %313 = vector.load %arg28[%c0_120, %c0_121] : memref<128x32xbf16, #tpu.memory_space<vmem>>, vector<128x32xbf16>
    %cst_122 = arith.constant dense<0.000000e+00> : vector<8x32xf32>
    %314 = tpu.matmul %312, %313, %cst_122 {dimension_numbers = #tpu.dot_dimension_numbers<[1], [0], [0], [1], [0, 0, 1, 1], [], []>} : vector<8x128xbf16>, vector<128x32xbf16>, vector<8x32xf32> -> vector<8x32xf32>
    %c0_123 = arith.constant 0 : index
    %c0_124 = arith.constant 0 : index
    %315 = vector.load %arg29[%c0_123, %c0_124] : memref<1x32xf32, #tpu.memory_space<vmem>>, vector<1x32xf32>
    %316 = vector.broadcast %315 : vector<1x32xf32> to vector<8x32xf32>
    %317 = arith.addf %314, %316 : vector<8x32xf32>
    %318 = arith.addf %317, %240 : vector<8x32xf32>
    %c0_125 = arith.constant 0 : index
    %c0_126 = arith.constant 0 : index
    %319 = vector.load %arg30[%c0_125, %c0_126] : memref<8x32xf32, #tpu.memory_space<vmem>>, vector<8x32xf32>
    tpu.vector_store %arg30[%c0_125, %c0_126], %318 {strides = array<i32>} : memref<8x32xf32, #tpu.memory_space<vmem>>, vector<8x32xf32>,
    return
  }
  func.func @transform_0(%arg0: i32) -> (i32, i32, i32) {
    %c0_i32 = arith.constant 0 : i32
    %c0_i32_0 = arith.constant 0 : i32
    %c0_i32_1 = arith.constant 0 : i32
    return %arg0, %c0_i32, %c0_i32_0 : i32, i32, i32
  }
  func.func @transform_1(%arg0: i32) -> (i32, i32, i32) {
    %c0_i32 = arith.constant 0 : i32
    %c0_i32_0 = arith.constant 0 : i32
    %c0_i32_1 = arith.constant 0 : i32
    return %arg0, %c0_i32, %c0_i32_0 : i32, i32, i32
  }
  func.func @transform_2(%arg0: i32) -> (i32, i32) {
    %c0_i32 = arith.constant 0 : i32
    %c0_i32_0 = arith.constant 0 : i32
    %c0_i32_1 = arith.constant 0 : i32
    return %c0_i32, %c0_i32_0 : i32, i32
  }
  func.func @transform_3(%arg0: i32) -> (i32, i32) {
    %c0_i32 = arith.constant 0 : i32
    %c0_i32_0 = arith.constant 0 : i32
    %c0_i32_1 = arith.constant 0 : i32
    return %c0_i32, %c0_i32_0 : i32, i32
  }
  func.func @transform_4(%arg0: i32) -> (i32, i32) {
    %c0_i32 = arith.constant 0 : i32
    %c0_i32_0 = arith.constant 0 : i32
    %c0_i32_1 = arith.constant 0 : i32
    return %c0_i32, %c0_i32_0 : i32, i32
  }
  func.func @transform_5(%arg0: i32) -> (i32, i32) {
    %c0_i32 = arith.constant 0 : i32
    %c0_i32_0 = arith.constant 0 : i32
    %c0_i32_1 = arith.constant 0 : i32
    return %c0_i32, %c0_i32_0 : i32, i32
  }
  func.func @transform_6(%arg0: i32) -> (i32, i32) {
    %c0_i32 = arith.constant 0 : i32
    %c0_i32_0 = arith.constant 0 : i32
    %c0_i32_1 = arith.constant 0 : i32
    return %c0_i32, %c0_i32_0 : i32, i32
  }
  func.func @transform_7(%arg0: i32) -> (i32, i32) {
    %c0_i32 = arith.constant 0 : i32
    %c0_i32_0 = arith.constant 0 : i32
    %c0_i32_1 = arith.constant 0 : i32
    return %c0_i32, %c0_i32_0 : i32, i32
  }
  func.func @transform_8(%arg0: i32) -> (i32, i32) {
    %c0_i32 = arith.constant 0 : i32
    %c0_i32_0 = arith.constant 0 : i32
    %c0_i32_1 = arith.constant 0 : i32
    return %c0_i32, %c0_i32_0 : i32, i32
  }
  func.func @transform_9(%arg0: i32) -> (i32, i32) {
    %c0_i32 = arith.constant 0 : i32
    %c0_i32_0 = arith.constant 0 : i32
    %c0_i32_1 = arith.constant 0 : i32
    return %c0_i32, %c0_i32_0 : i32, i32
  }
  func.func @transform_10(%arg0: i32) -> (i32, i32) {
    %c0_i32 = arith.constant 0 : i32
    %c0_i32_0 = arith.constant 0 : i32
    %c0_i32_1 = arith.constant 0 : i32
    return %c0_i32, %c0_i32_0 : i32, i32
  }
  func.func @transform_11(%arg0: i32) -> (i32, i32) {
    %c0_i32 = arith.constant 0 : i32
    %c0_i32_0 = arith.constant 0 : i32
    %c0_i32_1 = arith.constant 0 : i32
    return %c0_i32, %c0_i32_0 : i32, i32
  }
  func.func @transform_12(%arg0: i32) -> (i32, i32) {
    %c0_i32 = arith.constant 0 : i32
    %c0_i32_0 = arith.constant 0 : i32
    %c0_i32_1 = arith.constant 0 : i32
    return %c0_i32, %c0_i32_0 : i32, i32
  }
  func.func @transform_13(%arg0: i32) -> (i32, i32) {
    %c0_i32 = arith.constant 0 : i32
    %c0_i32_0 = arith.constant 0 : i32
    %c0_i32_1 = arith.constant 0 : i32
    return %c0_i32, %c0_i32_0 : i32, i32
  }
  func.func @transform_14(%arg0: i32) -> (i32, i32) {
    %c0_i32 = arith.constant 0 : i32
    %c0_i32_0 = arith.constant 0 : i32
    %c0_i32_1 = arith.constant 0 : i32
    return %c0_i32, %c0_i32_0 : i32, i32
  }
  func.func @transform_15(%arg0: i32) -> (i32, i32) {
    %c0_i32 = arith.constant 0 : i32
    %c0_i32_0 = arith.constant 0 : i32
    %c0_i32_1 = arith.constant 0 : i32
    return %c0_i32, %c0_i32_0 : i32, i32
  }
  func.func @transform_16(%arg0: i32) -> (i32, i32) {
    %c0_i32 = arith.constant 0 : i32
    %c0_i32_0 = arith.constant 0 : i32
    %c0_i32_1 = arith.constant 0 : i32
    return %c0_i32, %c0_i32_0 : i32, i32
  }
  func.func @transform_17(%arg0: i32) -> (i32, i32) {
    %c0_i32 = arith.constant 0 : i32
    %c0_i32_0 = arith.constant 0 : i32
    %c0_i32_1 = arith.constant 0 : i32
    return %c0_i32, %c0_i32_0 : i32, i32
  }
  func.func @transform_18(%arg0: i32) -> (i32, i32) {
    %c0_i32 = arith.constant 0 : i32
    %c0_i32_0 = arith.constant 0 : i32
    %c0_i32_1 = arith.constant 0 : i32
    return %c0_i32, %c0_i32_0 : i32, i32
  }
  func.func @transform_19(%arg0: i32) -> (i32, i32) {
    %c0_i32 = arith.constant 0 : i32
    %c0_i32_0 = arith.constant 0 : i32
    %c0_i32_1 = arith.constant 0 : i32
    return %c0_i32, %c0_i32_0 : i32, i32
  }
  func.func @transform_20(%arg0: i32) -> (i32, i32) {
    %c0_i32 = arith.constant 0 : i32
    %c0_i32_0 = arith.constant 0 : i32
    %c0_i32_1 = arith.constant 0 : i32
    return %c0_i32, %c0_i32_0 : i32, i32
  }
  func.func @transform_21(%arg0: i32) -> (i32, i32) {
    %c0_i32 = arith.constant 0 : i32
    %c0_i32_0 = arith.constant 0 : i32
    %c0_i32_1 = arith.constant 0 : i32
    return %c0_i32, %c0_i32_0 : i32, i32
  }
  func.func @transform_22(%arg0: i32) -> (i32, i32) {
    %c0_i32 = arith.constant 0 : i32
    %c0_i32_0 = arith.constant 0 : i32
    %c0_i32_1 = arith.constant 0 : i32
    return %c0_i32, %c0_i32_0 : i32, i32
  }
  func.func @transform_23(%arg0: i32) -> (i32, i32) {
    %c0_i32 = arith.constant 0 : i32
    %c0_i32_0 = arith.constant 0 : i32
    %c0_i32_1 = arith.constant 0 : i32
    return %c0_i32, %c0_i32_0 : i32, i32
  }
  func.func @transform_24(%arg0: i32) -> (i32, i32) {
    %c0_i32 = arith.constant 0 : i32
    %c0_i32_0 = arith.constant 0 : i32
    %c0_i32_1 = arith.constant 0 : i32
    return %c0_i32, %c0_i32_0 : i32, i32
  }
  func.func @transform_25(%arg0: i32) -> (i32, i32) {
    %c0_i32 = arith.constant 0 : i32
    %c0_i32_0 = arith.constant 0 : i32
    %c0_i32_1 = arith.constant 0 : i32
    return %c0_i32, %c0_i32_0 : i32, i32
  }
  func.func @transform_26(%arg0: i32) -> (i32, i32) {
    %c0_i32 = arith.constant 0 : i32
    %c0_i32_0 = arith.constant 0 : i32
    %c0_i32_1 = arith.constant 0 : i32
    return %c0_i32, %c0_i32_0 : i32, i32
  }
  func.func @transform_27(%arg0: i32) -> (i32, i32) {
    %c0_i32 = arith.constant 0 : i32
    %c0_i32_0 = arith.constant 0 : i32
    %c0_i32_1 = arith.constant 0 : i32
    return %c0_i32, %c0_i32_0 : i32, i32
  }
  func.func @transform_28(%arg0: i32) -> (i32, i32) {
    %c0_i32 = arith.constant 0 : i32
    %c0_i32_0 = arith.constant 0 : i32
    %c0_i32_1 = arith.constant 0 : i32
    return %c0_i32, %c0_i32_0 : i32, i32
  }
  func.func @transform_29(%arg0: i32) -> (i32, i32) {
    %c0_i32 = arith.constant 0 : i32
    %c0_i32_0 = arith.constant 0 : i32
    return %arg0, %c0_i32 : i32, i32
  }
}

</mosaic_0001>

<llo_original>
// kernel: _forward.1
$region0: #{_forward.1}
  #allocation0 [shape = 'u32[]', space=smem, size = 0x4, offset = 0x4, fixed_abs, tag = 'smem constant byte address 0x4 - core index']
  #allocation1 [shape = 'u32[144,128]{1,0:T(1,128)}', space=vmem, size = 0x12000, scoped, tag = 'internal scratch']
  %s0 = inlined_call_operand.smem [shape: u32[30], index: -1, kind: input, shape index: {}]
  %s1 = sld [smem:[%s0]]
  %s2 = scalar_lea.smem %s0, 1
  %s3 = sld [smem:[%s2]]
  %s4 = scalar_lea.smem %s0, 2
  %s5 = sld [smem:[%s4]]
  %s6 = scalar_lea.smem %s0, 3
  %s7 = sld [smem:[%s6]]
  %s8 = scalar_lea.smem %s0, 4
  %s9 = sld [smem:[%s8]]
  %s10 = scalar_lea.smem %s0, 5
  %s11 = sld [smem:[%s10]]
  %s12 = scalar_lea.smem %s0, 6
  %s13 = sld [smem:[%s12]]
  %s14 = scalar_lea.smem %s0, 7
  %s15 = sld [smem:[%s14]]
  %s16 = scalar_lea.smem %s0, 8
  %s17 = sld [smem:[%s16]]
  %s18 = scalar_lea.smem %s0, 9
  %s19 = sld [smem:[%s18]]
  %s20 = scalar_lea.smem %s0, 10
  %s21 = sld [smem:[%s20]]
  %s22 = scalar_lea.smem %s0, 11
  %s23 = sld [smem:[%s22]]
  %s24 = scalar_lea.smem %s0, 12
  %s25 = sld [smem:[%s24]]
  %s26 = scalar_lea.smem %s0, 13
  %s27 = sld [smem:[%s26]]
  %s28 = scalar_lea.smem %s0, 14
  %s29 = sld [smem:[%s28]]
  %s30 = scalar_lea.smem %s0, 15
  %s31 = sld [smem:[%s30]]
  %s32 = scalar_lea.smem %s0, 16
  %s33 = sld [smem:[%s32]]
  %s34 = scalar_lea.smem %s0, 17
  %s35 = sld [smem:[%s34]]
  %s36 = scalar_lea.smem %s0, 18
  %s37 = sld [smem:[%s36]]
  %s38 = scalar_lea.smem %s0, 19
  %s39 = sld [smem:[%s38]]
  %s40 = scalar_lea.smem %s0, 20
  %s41 = sld [smem:[%s40]]
  %s42 = scalar_lea.smem %s0, 21
  %s43 = sld [smem:[%s42]]
  %s44 = scalar_lea.smem %s0, 22
  %s45 = sld [smem:[%s44]]
  %s46 = scalar_lea.smem %s0, 23
  %s47 = sld [smem:[%s46]]
  %s48 = scalar_lea.smem %s0, 24
  %s49 = sld [smem:[%s48]]
  %s50 = scalar_lea.smem %s0, 25
  %s51 = sld [smem:[%s50]]
  %s52 = scalar_lea.smem %s0, 26
  %s53 = sld [smem:[%s52]]
  %s54 = scalar_lea.smem %s0, 27
  %s55 = sld [smem:[%s54]]
  %s56 = scalar_lea.smem %s0, 28
  %s57 = sld [smem:[%s56]]
  %s58 = scalar_lea.smem %s0, 29
  %s59 = sld [smem:[%s58]]
  %s60 = sld [smem:[#allocation0]]
  $region126: #{_forward.1} parent=0
    _
  %s62 = ssub.s32 1, %s60
  %s63 = scalar_select 0, %s62, %s60
  // Predicated region
  $region2: #{_forward.1} parent=0 // pred_check
    _
  $region3: #{_forward.1} parent=0 // pred_check_branch
    %65 = sbr.rel (0) target = $region5
  $region4: #{_forward.1} parent=0 // pred_region
    _
  $region5: #{_forward.1} parent=0 // pred_fallthru
    _
  // Predicated region
  $region6: #{_forward.1} parent=0 // pred_check
    _
  $region7: #{_forward.1} parent=0 // pred_check_branch
    %67 = sbr.rel (0) target = $region9
  $region8: #{_forward.1} parent=0 // pred_region
    _
  $region9: #{_forward.1} parent=0 // pred_fallthru
    _
  // Predicated region
  $region10: #{_forward.1} parent=0 // pred_check
    _
  $region11: #{_forward.1} parent=0 // pred_check_branch
    %69 = sbr.rel (0) target = $region13
  $region12: #{_forward.1} parent=0 // pred_region
    _
  $region13: #{_forward.1} parent=0 // pred_fallthru
    _
  // Predicated region
  $region14: #{_forward.1} parent=0 // pred_check
    _
  $region15: #{_forward.1} parent=0 // pred_check_branch
    %71 = sbr.rel (0) target = $region17
  $region16: #{_forward.1} parent=0 // pred_region
    _
  $region17: #{_forward.1} parent=0 // pred_fallthru
    _
  // Predicated region
  $region18: #{_forward.1} parent=0 // pred_check
    _
  $region19: #{_forward.1} parent=0 // pred_check_branch
    %73 = sbr.rel (0) target = $region21
  $region20: #{_forward.1} parent=0 // pred_region
    _
  $region21: #{_forward.1} parent=0 // pred_fallthru
    _
  // Predicated region
  $region22: #{_forward.1} parent=0 // pred_check
    _
  $region23: #{_forward.1} parent=0 // pred_check_branch
    %75 = sbr.rel (0) target = $region25
  $region24: #{_forward.1} parent=0 // pred_region
    _
  $region25: #{_forward.1} parent=0 // pred_fallthru
    _
  // Predicated region
  $region26: #{_forward.1} parent=0 // pred_check
    _
  $region27: #{_forward.1} parent=0 // pred_check_branch
    %77 = sbr.rel (0) target = $region29
  $region28: #{_forward.1} parent=0 // pred_region
    _
  $region29: #{_forward.1} parent=0 // pred_fallthru
    _
  // Predicated region
  $region30: #{_forward.1} parent=0 // pred_check
    _
  $region31: #{_forward.1} parent=0 // pred_check_branch
    %79 = sbr.rel (0) target = $region33
  $region32: #{_forward.1} parent=0 // pred_region
    _
  $region33: #{_forward.1} parent=0 // pred_fallthru
    _
  // Predicated region
  $region34: #{_forward.1} parent=0 // pred_check
    _
  $region35: #{_forward.1} parent=0 // pred_check_branch
    %81 = sbr.rel (0) target = $region37
  $region36: #{_forward.1} parent=0 // pred_region
    _
  $region37: #{_forward.1} parent=0 // pred_fallthru
    _
  // Predicated region
  $region38: #{_forward.1} parent=0 // pred_check
    _
  $region39: #{_forward.1} parent=0 // pred_check_branch
    %83 = sbr.rel (0) target = $region41
  $region40: #{_forward.1} parent=0 // pred_region
    _
  $region41: #{_forward.1} parent=0 // pred_fallthru
    _
  // Predicated region
  $region42: #{_forward.1} parent=0 // pred_check
    _
  $region43: #{_forward.1} parent=0 // pred_check_branch
    %85 = sbr.rel (0) target = $region45
  $region44: #{_forward.1} parent=0 // pred_region
    _
  $region45: #{_forward.1} parent=0 // pred_fallthru
    _
  // Predicated region
  $region46: #{_forward.1} parent=0 // pred_check
    _
  $region47: #{_forward.1} parent=0 // pred_check_branch
    %87 = sbr.rel (0) target = $region49
  $region48: #{_forward.1} parent=0 // pred_region
    _
  $region49: #{_forward.1} parent=0 // pred_fallthru
    _
  // Predicated region
  $region50: #{_forward.1} parent=0 // pred_check
    _
  $region51: #{_forward.1} parent=0 // pred_check_branch
    %89 = sbr.rel (0) target = $region53
  $region52: #{_forward.1} parent=0 // pred_region
    _
  $region53: #{_forward.1} parent=0 // pred_fallthru
    _
  // Predicated region
  $region54: #{_forward.1} parent=0 // pred_check
    _
  $region55: #{_forward.1} parent=0 // pred_check_branch
    %91 = sbr.rel (0) target = $region57
  $region56: #{_forward.1} parent=0 // pred_region
    _
  $region57: #{_forward.1} parent=0 // pred_fallthru
    _
  // Predicated region
  $region58: #{_forward.1} parent=0 // pred_check
    _
  $region59: #{_forward.1} parent=0 // pred_check_branch
    %93 = sbr.rel (0) target = $region61
  $region60: #{_forward.1} parent=0 // pred_region
    _
  $region61: #{_forward.1} parent=0 // pred_fallthru
    _
  // Predicated region
  $region62: #{_forward.1} parent=0 // pred_check
    _
  $region63: #{_forward.1} parent=0 // pred_check_branch
    %95 = sbr.rel (0) target = $region65
  $region64: #{_forward.1} parent=0 // pred_region
    _
  $region65: #{_forward.1} parent=0 // pred_fallthru
    _
  // Predicated region
  $region66: #{_forward.1} parent=0 // pred_check
    _
  $region67: #{_forward.1} parent=0 // pred_check_branch
    %97 = sbr.rel (0) target = $region69
  $region68: #{_forward.1} parent=0 // pred_region
    _
  $region69: #{_forward.1} parent=0 // pred_fallthru
    _
  // Predicated region
  $region70: #{_forward.1} parent=0 // pred_check
    _
  $region71: #{_forward.1} parent=0 // pred_check_branch
    %99 = sbr.rel (0) target = $region73
  $region72: #{_forward.1} parent=0 // pred_region
    _
  $region73: #{_forward.1} parent=0 // pred_fallthru
    _
  // Predicated region
  $region74: #{_forward.1} parent=0 // pred_check
    _
  $region75: #{_forward.1} parent=0 // pred_check_branch
    %101 = sbr.rel (0) target = $region77
  $region76: #{_forward.1} parent=0 // pred_region
    _
  $region77: #{_forward.1} parent=0 // pred_fallthru
    _
  // Predicated region
  $region78: #{_forward.1} parent=0 // pred_check
    _
  $region79: #{_forward.1} parent=0 // pred_check_branch
    %103 = sbr.rel (0) target = $region81
  $region80: #{_forward.1} parent=0 // pred_region
    _
  $region81: #{_forward.1} parent=0 // pred_fallthru
    _
  // Predicated region
  $region82: #{_forward.1} parent=0 // pred_check
    _
  $region83: #{_forward.1} parent=0 // pred_check_branch
    %105 = sbr.rel (0) target = $region85
  $region84: #{_forward.1} parent=0 // pred_region
    _
  $region85: #{_forward.1} parent=0 // pred_fallthru
    _
  // Predicated region
  $region86: #{_forward.1} parent=0 // pred_check
    _
  $region87: #{_forward.1} parent=0 // pred_check_branch
    %107 = sbr.rel (0) target = $region89
  $region88: #{_forward.1} parent=0 // pred_region
    _
  $region89: #{_forward.1} parent=0 // pred_fallthru
    _
  // Predicated region
  $region90: #{_forward.1} parent=0 // pred_check
    _
  $region91: #{_forward.1} parent=0 // pred_check_branch
    %109 = sbr.rel (0) target = $region93
  $region92: #{_forward.1} parent=0 // pred_region
    _
  $region93: #{_forward.1} parent=0 // pred_fallthru
    _
  // Predicated region
  $region94: #{_forward.1} parent=0 // pred_check
    _
  $region95: #{_forward.1} parent=0 // pred_check_branch
    %111 = sbr.rel (0) target = $region97
  $region96: #{_forward.1} parent=0 // pred_region
    _
  $region97: #{_forward.1} parent=0 // pred_fallthru
    _
  // Predicated region
  $region98: #{_forward.1} parent=0 // pred_check
    _
  $region99: #{_forward.1} parent=0 // pred_check_branch
    %113 = sbr.rel (0) target = $region101
  $region100: #{_forward.1} parent=0 // pred_region
    _
  $region101: #{_forward.1} parent=0 // pred_fallthru
    _
  // Predicated region
  $region102: #{_forward.1} parent=0 // pred_check
    _
  $region103: #{_forward.1} parent=0 // pred_check_branch
    %115 = sbr.rel (0) target = $region105
  $region104: #{_forward.1} parent=0 // pred_region
    _
  $region105: #{_forward.1} parent=0 // pred_fallthru
    _
  // Predicated region
  $region106: #{_forward.1} parent=0 // pred_check
    _
  $region107: #{_forward.1} parent=0 // pred_check_branch
    %117 = sbr.rel (0) target = $region109
  $region108: #{_forward.1} parent=0 // pred_region
    _
  $region109: #{_forward.1} parent=0 // pred_fallthru
    _
  // Predicated region
  $region110: #{_forward.1} parent=0 // pred_check
    _
  $region111: #{_forward.1} parent=0 // pred_check_branch
    %119 = sbr.rel (0) target = $region113
  $region112: #{_forward.1} parent=0 // pred_region
    _
  $region113: #{_forward.1} parent=0 // pred_fallthru
    _
  // Predicated region
  $region114: #{_forward.1} parent=0 // pred_check
    _
  $region115: #{_forward.1} parent=0 // pred_check_branch
    %121 = sbr.rel (0) target = $region117
  $region116: #{_forward.1} parent=0 // pred_region
    _
  $region117: #{_forward.1} parent=0 // pred_fallthru
    _
  %v123 = vld [vmem:[%s5] sm:$0x1]
  %v124 = vld [vmem:[%s7] sm:$0x1]
  %v125 = vld [vmem:[%s9] sm:$0x1]
  %v126 = vld [vmem:[%s9 + $0x1] sm:$0x1]
  %v127 = vld [vmem:[%s11] sm:$0x1]
  %v128 = vld [vmem:[%s13] sm:$0x1]
  %v129 = vld [vmem:[%s15] sm:$0x1]
  %v130 = vld [vmem:[%s17] sm:$0xf]
  %v131 = vld [vmem:[%s17 + $0x4] sm:$0xf]
  %v132 = vld [vmem:[%s19] sm:$0x1]
  %v133 = vld [vmem:[%s21] sm:$0x1]
  %v134 = vld [vmem:[%s23] sm:$0x1]
  %v135 = vld [vmem:[%s43] sm:$0xf]
  %v136 = vld [vmem:[%s43 + $0x4] sm:$0xf]
  %v137 = vld [vmem:[%s43 + $0x8] sm:$0xf]
  %v138 = vld [vmem:[%s43 + $0xc] sm:$0xf]
  %v139 = vld [vmem:[%s45] sm:$0x3]
  %v140 = vld [vmem:[%s41] sm:$0xff]
  %v141 = vld [vmem:[%s1] sm:$0xff]
  %v142 = vld [vmem:[%s1 + $0x8] sm:$0xff]
  %v143 = vld [vmem:[%s1 + $0x10] sm:$0xff]
  %v144 = vld [vmem:[%s1 + $0x18] sm:$0xff]
  %v145 = vld [vmem:[%s1 + $0x20] sm:$0xff]
  %v146 = vld [vmem:[%s1 + $0x28] sm:$0xff]
  %v147 = vld [vmem:[%s1 + $0x30] sm:$0xff]
  %v148 = vld [vmem:[%s1 + $0x38] sm:$0xff]
  %v149 = vld [vmem:[%s3] sm:$0xff]
  %v150 = vld [vmem:[%s3 + $0x8] sm:$0xff]
  %v151 = vld [vmem:[%s3 + $0x10] sm:$0xff]
  %v152 = vld [vmem:[%s3 + $0x18] sm:$0xff]
  %v153 = vld [vmem:[%s3 + $0x20] sm:$0xff]
  %v154 = vld [vmem:[%s3 + $0x28] sm:$0xff]
  %v155 = vld [vmem:[%s3 + $0x30] sm:$0xff]
  %v156 = vld [vmem:[%s3 + $0x38] sm:$0xff]
  %vm157 = vcmask 261120
  %v158 = vsel %vm157, %v141, 0.0
  %159 = vadd.xlane.f32.xlu0 %v158
  %v160 = vpop.xlane.xlu0 %159
  %v161 = vsel %vm157, %v142, 0.0
  %162 = vadd.xlane.f32.xlu0 %v161
  %v163 = vpop.xlane.xlu0 %162
  %v164 = vsel %vm157, %v143, 0.0
  %165 = vadd.xlane.f32.xlu0 %v164
  %v166 = vpop.xlane.xlu0 %165
  %v167 = vsel %vm157, %v144, 0.0
  %168 = vadd.xlane.f32.xlu0 %v167
  %v169 = vpop.xlane.xlu0 %168
  %v170 = vsel %vm157, %v145, 0.0
  %171 = vadd.xlane.f32.xlu0 %v170
  %v172 = vpop.xlane.xlu0 %171
  %v173 = vsel %vm157, %v146, 0.0
  %174 = vadd.xlane.f32.xlu0 %v173
  %v175 = vpop.xlane.xlu0 %174
  %v176 = vsel %vm157, %v147, 0.0
  %177 = vadd.xlane.f32.xlu0 %v176
  %v178 = vpop.xlane.xlu0 %177
  %v179 = vsel %vm157, %v148, 0.0
  %180 = vadd.xlane.f32.xlu0 %v179
  %v181 = vpop.xlane.xlu0 %180
  %v182 = vrcp.pop 32.0
  %v183 = vmul.f32 %v160, %v182
  %v184 = vmul.f32 %v163, %v182
  %v185 = vmul.f32 %v166, %v182
  %v186 = vmul.f32 %v169, %v182
  %v187 = vmul.f32 %v172, %v182
  %v188 = vmul.f32 %v175, %v182
  %v189 = vmul.f32 %v178, %v182
  %v190 = vmul.f32 %v181, %v182
  %v191 = vsub.f32 %v141, %v183
  %v192 = vsub.f32 %v142, %v184
  %v193 = vsub.f32 %v143, %v185
  %v194 = vsub.f32 %v144, %v186
  %v195 = vsub.f32 %v145, %v187
  %v196 = vsub.f32 %v146, %v188
  %v197 = vsub.f32 %v147, %v189
  %v198 = vsub.f32 %v148, %v190
  %v199 = vmul.f32 %v191, %v191
  %v200 = vmul.f32 %v192, %v192
  %v201 = vmul.f32 %v193, %v193
  %v202 = vmul.f32 %v194, %v194
  %v203 = vmul.f32 %v195, %v195
  %v204 = vmul.f32 %v196, %v196
  %v205 = vmul.f32 %v197, %v197
  %v206 = vmul.f32 %v198, %v198
  %v207 = vsel %vm157, %v199, 0.0
  %208 = vadd.xlane.f32.xlu0 %v207
  %v209 = vpop.xlane.xlu0 %208
  %v210 = vsel %vm157, %v200, 0.0
  %211 = vadd.xlane.f32.xlu0 %v210
  %v212 = vpop.xlane.xlu0 %211
  %v213 = vsel %vm157, %v201, 0.0
  %214 = vadd.xlane.f32.xlu0 %v213
  %v215 = vpop.xlane.xlu0 %214
  %v216 = vsel %vm157, %v202, 0.0
  %217 = vadd.xlane.f32.xlu0 %v216
  %v218 = vpop.xlane.xlu0 %217
  %v219 = vsel %vm157, %v203, 0.0
  %220 = vadd.xlane.f32.xlu0 %v219
  %v221 = vpop.xlane.xlu0 %220
  %v222 = vsel %vm157, %v204, 0.0
  %223 = vadd.xlane.f32.xlu0 %v222
  %v224 = vpop.xlane.xlu0 %223
  %v225 = vsel %vm157, %v205, 0.0
  %226 = vadd.xlane.f32.xlu0 %v225
  %v227 = vpop.xlane.xlu0 %226
  %v228 = vsel %vm157, %v206, 0.0
  %229 = vadd.xlane.f32.xlu0 %v228
  %v230 = vpop.xlane.xlu0 %229
  %v231 = vmul.f32 %v209, %v182
  %v232 = vmul.f32 %v212, %v182
  %v233 = vmul.f32 %v215, %v182
  %v234 = vmul.f32 %v218, %v182
  %v235 = vmul.f32 %v221, %v182
  %v236 = vmul.f32 %v224, %v182
  %v237 = vmul.f32 %v227, %v182
  %v238 = vmul.f32 %v230, %v182
  %v239 = vadd.f32 %v231, 1e-05
  %v240 = vadd.f32 %v232, 1e-05
  %v241 = vadd.f32 %v233, 1e-05
  %v242 = vadd.f32 %v234, 1e-05
  %v243 = vadd.f32 %v235, 1e-05
  %v244 = vadd.f32 %v236, 1e-05
  %v245 = vadd.f32 %v237, 1e-05
  %v246 = vadd.f32 %v238, 1e-05
  %v247 = vrsqrt.pop %v239
  %v248 = vrsqrt.pop %v240
  %v249 = vrsqrt.pop %v241
  %v250 = vrsqrt.pop %v242
  %v251 = vrsqrt.pop %v243
  %v252 = vrsqrt.pop %v244
  %v253 = vrsqrt.pop %v245
  %v254 = vrsqrt.pop %v246
  %v255 = vmul.f32 %v191, %v247
  %v256 = vmul.f32 %v192, %v248
  %v257 = vmul.f32 %v193, %v249
  %v258 = vmul.f32 %v194, %v250
  %v259 = vmul.f32 %v195, %v251
  %v260 = vmul.f32 %v196, %v252
  %v261 = vmul.f32 %v197, %v253
  %v262 = vmul.f32 %v198, %v254
  %v264 = vlaneseq
  %v265 = vshrl.u32 %v264, 7
  %v266 = vsub.s32 0, %v265
  %v267 = vrot.slane %v123, %v266
  %v269 = vmul.f32 %v255, %v267
  %v270 = vmul.f32 %v256, %v267
  %v271 = vmul.f32 %v257, %v267
  %v272 = vmul.f32 %v258, %v267
  %v273 = vmul.f32 %v259, %v267
  %v274 = vmul.f32 %v260, %v267
  %v275 = vmul.f32 %v261, %v267
  %v276 = vmul.f32 %v262, %v267
  %v278 = vlaneseq
  %v279 = vshrl.u32 %v278, 7
  %v280 = vsub.s32 0, %v279
  %v281 = vrot.slane %v124, %v280
  %v283 = vadd.f32 %v269, %v281
  %v284 = vadd.f32 %v270, %v281
  %v285 = vadd.f32 %v271, %v281
  %v286 = vadd.f32 %v272, %v281
  %v287 = vadd.f32 %v273, %v281
  %v288 = vadd.f32 %v274, %v281
  %v289 = vadd.f32 %v275, %v281
  %v290 = vadd.f32 %v276, %v281
  %292 = vset.pattern.permute.xlu0 0
  %293 = vperm.xlu0 %292, %v149
  %v294 = vpop.permute.xlu0 %293
  %297 = vset.pattern.permute.xlu0 0
  %298 = vperm.xlu0 %297, %v150
  %v299 = vpop.permute.xlu0 %298
  %302 = vset.pattern.permute.xlu0 0
  %303 = vperm.xlu0 %302, %v151
  %v304 = vpop.permute.xlu0 %303
  %307 = vset.pattern.permute.xlu0 0
  %308 = vperm.xlu0 %307, %v152
  %v309 = vpop.permute.xlu0 %308
  %312 = vset.pattern.permute.xlu0 0
  %313 = vperm.xlu0 %312, %v153
  %v314 = vpop.permute.xlu0 %313
  %317 = vset.pattern.permute.xlu0 0
  %318 = vperm.xlu0 %317, %v154
  %v319 = vpop.permute.xlu0 %318
  %322 = vset.pattern.permute.xlu0 0
  %323 = vperm.xlu0 %322, %v155
  %v324 = vpop.permute.xlu0 %323
  %327 = vset.pattern.permute.xlu0 0
  %328 = vperm.xlu0 %327, %v156
  %v329 = vpop.permute.xlu0 %328
  %v331 = vlaneseq
  %v332 = vshrl.u32 %v331, 7
  %v333 = vsub.s32 0, %v332
  %v334 = vrot.slane %v125, %v333
  %v335 = vmul.f32 %v294, %v334
  %v336 = vmul.f32 %v299, %v334
  %v337 = vmul.f32 %v304, %v334
  %v338 = vmul.f32 %v309, %v334
  %v339 = vmul.f32 %v314, %v334
  %v340 = vmul.f32 %v319, %v334
  %v341 = vmul.f32 %v324, %v334
  %v342 = vmul.f32 %v329, %v334
  %343 = vset.pattern.permute.xlu0 1
  %344 = vperm.xlu0 %343, %v149
  %v345 = vpop.permute.xlu0 %344
  %347 = vset.pattern.permute.xlu0 1
  %348 = vperm.xlu0 %347, %v150
  %v349 = vpop.permute.xlu0 %348
  %351 = vset.pattern.permute.xlu0 1
  %352 = vperm.xlu0 %351, %v151
  %v353 = vpop.permute.xlu0 %352
  %355 = vset.pattern.permute.xlu0 1
  %356 = vperm.xlu0 %355, %v152
  %v357 = vpop.permute.xlu0 %356
  %359 = vset.pattern.permute.xlu0 1
  %360 = vperm.xlu0 %359, %v153
  %v361 = vpop.permute.xlu0 %360
  %363 = vset.pattern.permute.xlu0 1
  %364 = vperm.xlu0 %363, %v154
  %v365 = vpop.permute.xlu0 %364
  %367 = vset.pattern.permute.xlu0 1
  %368 = vperm.xlu0 %367, %v155
  %v369 = vpop.permute.xlu0 %368
  %371 = vset.pattern.permute.xlu0 1
  %372 = vperm.xlu0 %371, %v156
  %v373 = vpop.permute.xlu0 %372
  %v375 = vlaneseq
  %v376 = vshrl.u32 %v375, 7
  %v377 = vsub.s32 0, %v376
  %v378 = vrot.slane %v126, %v377
  %v379 = vmul.f32 %v345, %v378
  %v380 = vmul.f32 %v349, %v378
  %v381 = vmul.f32 %v353, %v378
  %v382 = vmul.f32 %v357, %v378
  %v383 = vmul.f32 %v361, %v378
  %v384 = vmul.f32 %v365, %v378
  %v385 = vmul.f32 %v369, %v378
  %v386 = vmul.f32 %v373, %v378
  %v387 = vadd.f32 %v335, %v379
  %v388 = vadd.f32 %v336, %v380
  %v389 = vadd.f32 %v337, %v381
  %v390 = vadd.f32 %v338, %v382
  %v391 = vadd.f32 %v339, %v383
  %v392 = vadd.f32 %v340, %v384
  %v393 = vadd.f32 %v341, %v385
  %v394 = vadd.f32 %v342, %v386
  %v396 = vlaneseq
  %v397 = vshrl.u32 %v396, 7
  %v398 = vsub.s32 0, %v397
  %v399 = vrot.slane %v127, %v398
  %v401 = vadd.f32 %v387, %v399
  %v402 = vadd.f32 %v388, %v399
  %v403 = vadd.f32 %v389, %v399
  %v404 = vadd.f32 %v390, %v399
  %v405 = vadd.f32 %v391, %v399
  %v406 = vadd.f32 %v392, %v399
  %v407 = vadd.f32 %v393, %v399
  %v408 = vadd.f32 %v394, %v399
  %vm409 = vcmask 130048
  %v410 = vsel %vm409, %v401, 0.0
  %411 = vadd.xlane.f32.xlu0 %v410
  %v412 = vpop.xlane.xlu0 %411
  %v413 = vsel %vm409, %v402, 0.0
  %414 = vadd.xlane.f32.xlu0 %v413
  %v415 = vpop.xlane.xlu0 %414
  %v416 = vsel %vm409, %v403, 0.0
  %417 = vadd.xlane.f32.xlu0 %v416
  %v418 = vpop.xlane.xlu0 %417
  %v419 = vsel %vm409, %v404, 0.0
  %420 = vadd.xlane.f32.xlu0 %v419
  %v421 = vpop.xlane.xlu0 %420
  %v422 = vsel %vm409, %v405, 0.0
  %423 = vadd.xlane.f32.xlu0 %v422
  %v424 = vpop.xlane.xlu0 %423
  %v425 = vsel %vm409, %v406, 0.0
  %426 = vadd.xlane.f32.xlu0 %v425
  %v427 = vpop.xlane.xlu0 %426
  %v428 = vsel %vm409, %v407, 0.0
  %429 = vadd.xlane.f32.xlu0 %v428
  %v430 = vpop.xlane.xlu0 %429
  %v431 = vsel %vm409, %v408, 0.0
  %432 = vadd.xlane.f32.xlu0 %v431
  %v433 = vpop.xlane.xlu0 %432
  %v434 = vrcp.pop 16.0
  %v435 = vmul.f32 %v412, %v434
  %v436 = vmul.f32 %v415, %v434
  %v437 = vmul.f32 %v418, %v434
  %v438 = vmul.f32 %v421, %v434
  %v439 = vmul.f32 %v424, %v434
  %v440 = vmul.f32 %v427, %v434
  %v441 = vmul.f32 %v430, %v434
  %v442 = vmul.f32 %v433, %v434
  %v443 = vsub.f32 %v401, %v435
  %v444 = vsub.f32 %v402, %v436
  %v445 = vsub.f32 %v403, %v437
  %v446 = vsub.f32 %v404, %v438
  %v447 = vsub.f32 %v405, %v439
  %v448 = vsub.f32 %v406, %v440
  %v449 = vsub.f32 %v407, %v441
  %v450 = vsub.f32 %v408, %v442
  %v451 = vmul.f32 %v443, %v443
  %v452 = vmul.f32 %v444, %v444
  %v453 = vmul.f32 %v445, %v445
  %v454 = vmul.f32 %v446, %v446
  %v455 = vmul.f32 %v447, %v447
  %v456 = vmul.f32 %v448, %v448
  %v457 = vmul.f32 %v449, %v449
  %v458 = vmul.f32 %v450, %v450
  %v459 = vsel %vm409, %v451, 0.0
  %460 = vadd.xlane.f32.xlu0 %v459
  %v461 = vpop.xlane.xlu0 %460
  %v462 = vsel %vm409, %v452, 0.0
  %463 = vadd.xlane.f32.xlu0 %v462
  %v464 = vpop.xlane.xlu0 %463
  %v465 = vsel %vm409, %v453, 0.0
  %466 = vadd.xlane.f32.xlu0 %v465
  %v467 = vpop.xlane.xlu0 %466
  %v468 = vsel %vm409, %v454, 0.0
  %469 = vadd.xlane.f32.xlu0 %v468
  %v470 = vpop.xlane.xlu0 %469
  %v471 = vsel %vm409, %v455, 0.0
  %472 = vadd.xlane.f32.xlu0 %v471
  %v473 = vpop.xlane.xlu0 %472
  %v474 = vsel %vm409, %v456, 0.0
  %475 = vadd.xlane.f32.xlu0 %v474
  %v476 = vpop.xlane.xlu0 %475
  %v477 = vsel %vm409, %v457, 0.0
  %478 = vadd.xlane.f32.xlu0 %v477
  %v479 = vpop.xlane.xlu0 %478
  %v480 = vsel %vm409, %v458, 0.0
  %481 = vadd.xlane.f32.xlu0 %v480
  %v482 = vpop.xlane.xlu0 %481
  %v483 = vmul.f32 %v461, %v434
  %v484 = vmul.f32 %v464, %v434
  %v485 = vmul.f32 %v467, %v434
  %v486 = vmul.f32 %v470, %v434
  %v487 = vmul.f32 %v473, %v434
  %v488 = vmul.f32 %v476, %v434
  %v489 = vmul.f32 %v479, %v434
  %v490 = vmul.f32 %v482, %v434
  %v491 = vadd.f32 %v483, 1e-05
  %v492 = vadd.f32 %v484, 1e-05
  %v493 = vadd.f32 %v485, 1e-05
  %v494 = vadd.f32 %v486, 1e-05
  %v495 = vadd.f32 %v487, 1e-05
  %v496 = vadd.f32 %v488, 1e-05
  %v497 = vadd.f32 %v489, 1e-05
  %v498 = vadd.f32 %v490, 1e-05
  %v499 = vrsqrt.pop %v491
  %v500 = vrsqrt.pop %v492
  %v501 = vrsqrt.pop %v493
  %v502 = vrsqrt.pop %v494
  %v503 = vrsqrt.pop %v495
  %v504 = vrsqrt.pop %v496
  %v505 = vrsqrt.pop %v497
  %v506 = vrsqrt.pop %v498
  %v507 = vmul.f32 %v443, %v499
  %v508 = vmul.f32 %v444, %v500
  %v509 = vmul.f32 %v445, %v501
  %v510 = vmul.f32 %v446, %v502
  %v511 = vmul.f32 %v447, %v503
  %v512 = vmul.f32 %v448, %v504
  %v513 = vmul.f32 %v449, %v505
  %v514 = vmul.f32 %v450, %v506
  %v516 = vlaneseq
  %v517 = vshrl.u32 %v516, 7
  %v518 = vsub.s32 0, %v517
  %v519 = vrot.slane %v128, %v518
  %v521 = vmul.f32 %v507, %v519
  %v522 = vmul.f32 %v508, %v519
  %v523 = vmul.f32 %v509, %v519
  %v524 = vmul.f32 %v510, %v519
  %v525 = vmul.f32 %v511, %v519
  %v526 = vmul.f32 %v512, %v519
  %v527 = vmul.f32 %v513, %v519
  %v528 = vmul.f32 %v514, %v519
  %v530 = vlaneseq
  %v531 = vshrl.u32 %v530, 7
  %v532 = vsub.s32 0, %v531
  %v533 = vrot.slane %v129, %v532
  %v535 = vadd.f32 %v521, %v533
  %v536 = vadd.f32 %v522, %v533
  %v537 = vadd.f32 %v523, %v533
  %v538 = vadd.f32 %v524, %v533
  %v539 = vadd.f32 %v525, %v533
  %v540 = vadd.f32 %v526, %v533
  %v541 = vadd.f32 %v527, %v533
  %v542 = vadd.f32 %v528, %v533
  %v543 = vtanh.pop %v535
  %v544 = vtanh.pop %v536
  %v545 = vtanh.pop %v537
  %v546 = vtanh.pop %v538
  %v547 = vtanh.pop %v539
  %v548 = vtanh.pop %v540
  %v549 = vtanh.pop %v541
  %v550 = vtanh.pop %v542
  %v551 = vpack.c.bf16 %v544, %v543
  %v552 = vpack.c.bf16 %v546, %v545
  %v553 = vpack.c.bf16 %v548, %v547
  %v554 = vpack.c.bf16 %v550, %v549
  %v556 = vlaneseq
  %v557 = vshrl.u32 %v556, 7
  %v558 = vsub.s32 0, %v557
  %v559 = vrot.slane %v132, %v558
  %v563 = vunpack.c.l.b16 %v130
  %v564 = vunpack.c.l.b16 %v131
  %v565 = vpack.c.b16 %v564, %v563
  %v568 = vsel %vm409, %v551, 0
  %v571 = vsel %vm409, %v552, 0
  %v574 = vsel %vm409, %v553, 0
  %v577 = vsel %vm409, %v554, 0
  %579 = vmatprep.subr.bf16.mxu0 0
  %580 = vmatpush1.bf16.msra.mxu0 0
  %581 = vmatprep.subr.bf16.mxu0 0
  %582 = vmatpush1.bf16.msra.mxu0 0
  %583 = vmatprep.subr.bf16.mxu0 0
  %584 = vmatpush1.bf16.msra.mxu0 0
  %585 = vmatprep.subr.bf16.mxu0 0
  %586 = vmatpush1.bf16.msra.mxu0 0
  %587 = vmatprep.subr.bf16.mxu0 0
  %588 = vmatpush1.bf16.msra.mxu0 0
  %589 = vmatprep.subr.bf16.mxu0 0
  %590 = vmatpush1.bf16.msra.mxu0 0
  %591 = vmatprep.subr.bf16.mxu0 0
  %592 = vmatpush1.bf16.msra.mxu0 0
  %593 = vmatprep.subr.bf16.mxu0 0
  %594 = vmatpush1.bf16.msra.mxu0 %v565
  %595 = vmatprep.subr.bf16.mxu0 0
  %596 = vmatpush2.bf16.msra.mxu0 0
  %597 = vmatprep.subr.bf16.mxu0 0
  %598 = vmatpush2.bf16.msra.mxu0 0
  %599 = vmatprep.subr.bf16.mxu0 0
  %600 = vmatpush2.bf16.msra.mxu0 0
  %601 = vmatprep.subr.bf16.mxu0 0
  %602 = vmatpush2.bf16.msra.mxu0 0
  %603 = vmatprep.subr.bf16.mxu0 0
  %604 = vmatpush2.bf16.msra.mxu0 0
  %605 = vmatprep.subr.bf16.mxu0 0
  %606 = vmatpush2.bf16.msra.mxu0 0
  %607 = vmatprep.subr.bf16.mxu0 0
  %608 = vmatpush2.bf16.msra.mxu0 0
  %609 = vmatprep.subr.bf16.mxu0 0
  %610 = vmatpush2.bf16.msra.mxu0 0
  %611 = vmatprep.mubr.bf16.mxu0 0
  %612 = vmatmul.mubr.bf16.gmra.mxu0 %v568
  %v613 = vpop.f32.mrf.mxu0
  %v614 = vadd.f32 %v559, %v613
  %v615 = vpop.f32.mrf.mxu0
  %v616 = vpop.f32.mrf.mxu0
  %v617 = vadd.f32 %v559, %v616
  %v618 = vpop.f32.mrf.mxu0
  %619 = vmatprep.mubr.bf16.mxu0 0
  %620 = vmatmul.mubr.bf16.gmra.mxu0 %v571
  %v621 = vpop.f32.mrf.mxu0
  %v622 = vadd.f32 %v559, %v621
  %v623 = vpop.f32.mrf.mxu0
  %v624 = vpop.f32.mrf.mxu0
  %v625 = vadd.f32 %v559, %v624
  %v626 = vpop.f32.mrf.mxu0
  %627 = vmatprep.mubr.bf16.mxu0 0
  %628 = vmatmul.mubr.bf16.gmra.mxu0 %v574
  %v629 = vpop.f32.mrf.mxu0
  %v630 = vadd.f32 %v559, %v629
  %v631 = vpop.f32.mrf.mxu0
  %v632 = vpop.f32.mrf.mxu0
  %v633 = vadd.f32 %v559, %v632
  %v634 = vpop.f32.mrf.mxu0
  %635 = vmatprep.mubr.bf16.mxu0 0
  %636 = vmatmul.mubr.bf16.gmra.mxu0 %v577
  %v637 = vpop.f32.mrf.mxu0
  %v638 = vadd.f32 %v559, %v637
  %v639 = vpop.f32.mrf.mxu0
  %v640 = vpop.f32.mrf.mxu0
  %v641 = vadd.f32 %v559, %v640
  %v642 = vpop.f32.mrf.mxu0
  %643 = vdwg.mxu0
  %v644 = vsel %vm157, %v614, 0.0
  %645 = vadd.xlane.f32.xlu0 %v644
  %v646 = vpop.xlane.xlu0 %645
  %v647 = vsel %vm157, %v617, 0.0
  %648 = vadd.xlane.f32.xlu0 %v647
  %v649 = vpop.xlane.xlu0 %648
  %v650 = vsel %vm157, %v622, 0.0
  %651 = vadd.xlane.f32.xlu0 %v650
  %v652 = vpop.xlane.xlu0 %651
  %v653 = vsel %vm157, %v625, 0.0
  %654 = vadd.xlane.f32.xlu0 %v653
  %v655 = vpop.xlane.xlu0 %654
  %v656 = vsel %vm157, %v630, 0.0
  %657 = vadd.xlane.f32.xlu0 %v656
  %v658 = vpop.xlane.xlu0 %657
  %v659 = vsel %vm157, %v633, 0.0
  %660 = vadd.xlane.f32.xlu0 %v659
  %v661 = vpop.xlane.xlu0 %660
  %v662 = vsel %vm157, %v638, 0.0
  %663 = vadd.xlane.f32.xlu0 %v662
  %v664 = vpop.xlane.xlu0 %663
  %v665 = vsel %vm157, %v641, 0.0
  %666 = vadd.xlane.f32.xlu0 %v665
  %v667 = vpop.xlane.xlu0 %666
  %v668 = vmul.f32 %v646, %v182
  %v669 = vmul.f32 %v649, %v182
  %v670 = vmul.f32 %v652, %v182
  %v671 = vmul.f32 %v655, %v182
  %v672 = vmul.f32 %v658, %v182
  %v673 = vmul.f32 %v661, %v182
  %v674 = vmul.f32 %v664, %v182
  %v675 = vmul.f32 %v667, %v182
  %v676 = vsub.f32 %v614, %v668
  %v677 = vsub.f32 %v617, %v669
  %v678 = vsub.f32 %v622, %v670
  %v679 = vsub.f32 %v625, %v671
  %v680 = vsub.f32 %v630, %v672
  %v681 = vsub.f32 %v633, %v673
  %v682 = vsub.f32 %v638, %v674
  %v683 = vsub.f32 %v641, %v675
  %v684 = vmul.f32 %v676, %v676
  %v685 = vmul.f32 %v677, %v677
  %v686 = vmul.f32 %v678, %v678
  %v687 = vmul.f32 %v679, %v679
  %v688 = vmul.f32 %v680, %v680
  %v689 = vmul.f32 %v681, %v681
  %v690 = vmul.f32 %v682, %v682
  %v691 = vmul.f32 %v683, %v683
  %v692 = vsel %vm157, %v684, 0.0
  %693 = vadd.xlane.f32.xlu0 %v692
  %v694 = vpop.xlane.xlu0 %693
  %v695 = vsel %vm157, %v685, 0.0
  %696 = vadd.xlane.f32.xlu0 %v695
  %v697 = vpop.xlane.xlu0 %696
  %v698 = vsel %vm157, %v686, 0.0
  %699 = vadd.xlane.f32.xlu0 %v698
  %v700 = vpop.xlane.xlu0 %699
  %v701 = vsel %vm157, %v687, 0.0
  %702 = vadd.xlane.f32.xlu0 %v701
  %v703 = vpop.xlane.xlu0 %702
  %v704 = vsel %vm157, %v688, 0.0
  %705 = vadd.xlane.f32.xlu0 %v704
  %v706 = vpop.xlane.xlu0 %705
  %v707 = vsel %vm157, %v689, 0.0
  %708 = vadd.xlane.f32.xlu0 %v707
  %v709 = vpop.xlane.xlu0 %708
  %v710 = vsel %vm157, %v690, 0.0
  %711 = vadd.xlane.f32.xlu0 %v710
  %v712 = vpop.xlane.xlu0 %711
  %v713 = vsel %vm157, %v691, 0.0
  %714 = vadd.xlane.f32.xlu0 %v713
  %v715 = vpop.xlane.xlu0 %714
  %v716 = vmul.f32 %v694, %v182
  %v717 = vmul.f32 %v697, %v182
  %v718 = vmul.f32 %v700, %v182
  %v719 = vmul.f32 %v703, %v182
  %v720 = vmul.f32 %v706, %v182
  %v721 = vmul.f32 %v709, %v182
  %v722 = vmul.f32 %v712, %v182
  %v723 = vmul.f32 %v715, %v182
  %v724 = vadd.f32 %v716, 1e-05
  %v725 = vadd.f32 %v717, 1e-05
  %v726 = vadd.f32 %v718, 1e-05
  %v727 = vadd.f32 %v719, 1e-05
  %v728 = vadd.f32 %v720, 1e-05
  %v729 = vadd.f32 %v721, 1e-05
  %v730 = vadd.f32 %v722, 1e-05
  %v731 = vadd.f32 %v723, 1e-05
  %v732 = vrsqrt.pop %v724
  %v733 = vrsqrt.pop %v725
  %v734 = vrsqrt.pop %v726
  %v735 = vrsqrt.pop %v727
  %v736 = vrsqrt.pop %v728
  %v737 = vrsqrt.pop %v729
  %v738 = vrsqrt.pop %v730
  %v739 = vrsqrt.pop %v731
  %v740 = vmul.f32 %v676, %v732
  %v741 = vmul.f32 %v677, %v733
  %v742 = vmul.f32 %v678, %v734
  %v743 = vmul.f32 %v679, %v735
  %v744 = vmul.f32 %v680, %v736
  %v745 = vmul.f32 %v681, %v737
  %v746 = vmul.f32 %v682, %v738
  %v747 = vmul.f32 %v683, %v739
  %v749 = vlaneseq
  %v750 = vshrl.u32 %v749, 7
  %v751 = vsub.s32 0, %v750
  %v752 = vrot.slane %v133, %v751
  %v754 = vmul.f32 %v740, %v752
  %v755 = vmul.f32 %v741, %v752
  %v756 = vmul.f32 %v742, %v752
  %v757 = vmul.f32 %v743, %v752
  %v758 = vmul.f32 %v744, %v752
  %v759 = vmul.f32 %v745, %v752
  %v760 = vmul.f32 %v746, %v752
  %v761 = vmul.f32 %v747, %v752
  %v763 = vlaneseq
  %v764 = vshrl.u32 %v763, 7
  %v765 = vsub.s32 0, %v764
  %v766 = vrot.slane %v134, %v765
  %v768 = vadd.f32 %v754, %v766
  %v769 = vadd.f32 %v755, %v766
  %v770 = vadd.f32 %v756, %v766
  %v771 = vadd.f32 %v757, %v766
  %v772 = vadd.f32 %v758, %v766
  %v773 = vadd.f32 %v759, %v766
  %v774 = vadd.f32 %v760, %v766
  %v775 = vadd.f32 %v761, %v766
  %v776 = vadd.f32 %v283, %v768
  %v777 = vadd.f32 %v284, %v769
  %v778 = vadd.f32 %v285, %v770
  %v779 = vadd.f32 %v286, %v771
  %v780 = vadd.f32 %v287, %v772
  %v781 = vadd.f32 %v288, %v773
  %v782 = vadd.f32 %v289, %v774
  %v783 = vadd.f32 %v290, %v775
  %v784 = vpack.c.bf16 %v777, %v776
  %v785 = vpack.c.bf16 %v779, %v778
  %v786 = vpack.c.bf16 %v781, %v780
  %v787 = vpack.c.bf16 %v783, %v782
  %v788 = vld [vmem:[%s29] sm:$0xf]
  %v789 = vld [vmem:[%s29 + $0x4] sm:$0xf]
  %v790 = vld [vmem:[%s29 + $0x8] sm:$0xf]
  %v791 = vld [vmem:[%s29 + $0xc] sm:$0xf]
  %v792 = vld [vmem:[%s31] sm:$0x1]
  %v794 = vlaneseq
  %v795 = vshrl.u32 %v794, 7
  %v796 = vsub.s32 0, %v795
  %v797 = vrot.slane %v792, %v796
  %v803 = vunpack.c.l.b16 %v788
  %v804 = vunpack.c.l.b16 %v789
  %v805 = vunpack.c.l.b16 %v790
  %v806 = vunpack.c.l.b16 %v791
  %v807 = vpack.c.b16 %v804, %v803
  %v808 = vpack.c.b16 %v806, %v805
  %v812 = vsel %vm157, %v784, 0
  %v815 = vsel %vm157, %v785, 0
  %v818 = vsel %vm157, %v786, 0
  %v821 = vsel %vm157, %v787, 0
  %823 = vmatprep.subr.bf16.mxu0 0
  %824 = vmatpush1.bf16.msra.mxu0 0
  %825 = vmatprep.subr.bf16.mxu0 0
  %826 = vmatpush1.bf16.msra.mxu0 0
  %827 = vmatprep.subr.bf16.mxu0 0
  %828 = vmatpush1.bf16.msra.mxu0 0
  %829 = vmatprep.subr.bf16.mxu0 0
  %830 = vmatpush1.bf16.msra.mxu0 0
  %831 = vmatprep.subr.bf16.mxu0 0
  %832 = vmatpush1.bf16.msra.mxu0 0
  %833 = vmatprep.subr.bf16.mxu0 0
  %834 = vmatpush1.bf16.msra.mxu0 0
  %835 = vmatprep.subr.bf16.mxu0 0
  %836 = vmatpush1.bf16.msra.mxu0 %v808
  %837 = vmatprep.subr.bf16.mxu0 0
  %838 = vmatpush1.bf16.msra.mxu0 %v807
  %839 = vmatprep.subr.bf16.mxu0 0
  %840 = vmatpush2.bf16.msra.mxu0 0
  %841 = vmatprep.subr.bf16.mxu0 0
  %842 = vmatpush2.bf16.msra.mxu0 0
  %843 = vmatprep.subr.bf16.mxu0 0
  %844 = vmatpush2.bf16.msra.mxu0 0
  %845 = vmatprep.subr.bf16.mxu0 0
  %846 = vmatpush2.bf16.msra.mxu0 0
  %847 = vmatprep.subr.bf16.mxu0 0
  %848 = vmatpush2.bf16.msra.mxu0 0
  %849 = vmatprep.subr.bf16.mxu0 0
  %850 = vmatpush2.bf16.msra.mxu0 0
  %851 = vmatprep.subr.bf16.mxu0 0
  %852 = vmatpush2.bf16.msra.mxu0 0
  %853 = vmatprep.subr.bf16.mxu0 0
  %854 = vmatpush2.bf16.msra.mxu0 0
  %855 = vmatprep.mubr.bf16.mxu0 0
  %856 = vmatmul.mubr.bf16.gmra.mxu0 %v812
  %v857 = vpop.f32.mrf.mxu0
  %v858 = vadd.f32 %v797, %v857
  %v859 = vpop.f32.mrf.mxu0
  %v860 = vpop.f32.mrf.mxu0
  %v861 = vadd.f32 %v797, %v860
  %v862 = vpop.f32.mrf.mxu0
  %863 = vmatprep.mubr.bf16.mxu0 0
  %864 = vmatmul.mubr.bf16.gmra.mxu0 %v815
  %v865 = vpop.f32.mrf.mxu0
  %v866 = vadd.f32 %v797, %v865
  %v867 = vpop.f32.mrf.mxu0
  %v868 = vpop.f32.mrf.mxu0
  %v869 = vadd.f32 %v797, %v868
  %v870 = vpop.f32.mrf.mxu0
  %871 = vmatprep.mubr.bf16.mxu0 0
  %872 = vmatmul.mubr.bf16.gmra.mxu0 %v818
  %v873 = vpop.f32.mrf.mxu0
  %v874 = vadd.f32 %v797, %v873
  %v875 = vpop.f32.mrf.mxu0
  %v876 = vpop.f32.mrf.mxu0
  %v877 = vadd.f32 %v797, %v876
  %v878 = vpop.f32.mrf.mxu0
  %879 = vmatprep.mubr.bf16.mxu0 0
  %880 = vmatmul.mubr.bf16.gmra.mxu0 %v821
  %v881 = vpop.f32.mrf.mxu0
  %v882 = vadd.f32 %v797, %v881
  %v883 = vpop.f32.mrf.mxu0
  %v884 = vpop.f32.mrf.mxu0
  %v885 = vadd.f32 %v797, %v884
  %v886 = vpop.f32.mrf.mxu0
  %887 = vdwg.mxu0
  %v888 = vld [vmem:[%s33] sm:$0xf]
  %v889 = vld [vmem:[%s33 + $0x4] sm:$0xf]
  %v890 = vld [vmem:[%s33 + $0x8] sm:$0xf]
  %v891 = vld [vmem:[%s33 + $0xc] sm:$0xf]
  %v892 = vld [vmem:[%s35] sm:$0x1]
  %v894 = vlaneseq
  %v895 = vshrl.u32 %v894, 7
  %v896 = vsub.s32 0, %v895
  %v897 = vrot.slane %v892, %v896
  %v903 = vunpack.c.l.b16 %v888
  %v904 = vunpack.c.l.b16 %v889
  %v905 = vunpack.c.l.b16 %v890
  %v906 = vunpack.c.l.b16 %v891
  %v907 = vpack.c.b16 %v904, %v903
  %v908 = vpack.c.b16 %v906, %v905
  %911 = vmatprep.subr.bf16.mxu0 0
  %912 = vmatpush1.bf16.msra.mxu0 0
  %913 = vmatprep.subr.bf16.mxu0 0
  %914 = vmatpush1.bf16.msra.mxu0 0
  %915 = vmatprep.subr.bf16.mxu0 0
  %916 = vmatpush1.bf16.msra.mxu0 0
  %917 = vmatprep.subr.bf16.mxu0 0
  %918 = vmatpush1.bf16.msra.mxu0 0
  %919 = vmatprep.subr.bf16.mxu0 0
  %920 = vmatpush1.bf16.msra.mxu0 0
  %921 = vmatprep.subr.bf16.mxu0 0
  %922 = vmatpush1.bf16.msra.mxu0 0
  %923 = vmatprep.subr.bf16.mxu0 0
  %924 = vmatpush1.bf16.msra.mxu0 %v908
  %925 = vmatprep.subr.bf16.mxu0 0
  %926 = vmatpush1.bf16.msra.mxu0 %v907
  %927 = vmatprep.subr.bf16.mxu0 0
  %928 = vmatpush2.bf16.msra.mxu0 0
  %929 = vmatprep.subr.bf16.mxu0 0
  %930 = vmatpush2.bf16.msra.mxu0 0
  %931 = vmatprep.subr.bf16.mxu0 0
  %932 = vmatpush2.bf16.msra.mxu0 0
  %933 = vmatprep.subr.bf16.mxu0 0
  %934 = vmatpush2.bf16.msra.mxu0 0
  %935 = vmatprep.subr.bf16.mxu0 0
  %936 = vmatpush2.bf16.msra.mxu0 0
  %937 = vmatprep.subr.bf16.mxu0 0
  %938 = vmatpush2.bf16.msra.mxu0 0
  %939 = vmatprep.subr.bf16.mxu0 0
  %940 = vmatpush2.bf16.msra.mxu0 0
  %941 = vmatprep.subr.bf16.mxu0 0
  %942 = vmatpush2.bf16.msra.mxu0 0
  %943 = vmatprep.mubr.bf16.mxu0 0
  %944 = vmatmul.mubr.bf16.gmra.mxu0 %v812
  %v945 = vpop.f32.mrf.mxu0
  %v946 = vadd.f32 %v897, %v945
  %v947 = vpop.f32.mrf.mxu0
  %v948 = vpop.f32.mrf.mxu0
  %v949 = vadd.f32 %v897, %v948
  %v950 = vpop.f32.mrf.mxu0
  %951 = vmatprep.mubr.bf16.mxu0 0
  %952 = vmatmul.mubr.bf16.gmra.mxu0 %v815
  %v953 = vpop.f32.mrf.mxu0
  %v954 = vadd.f32 %v897, %v953
  %v955 = vpop.f32.mrf.mxu0
  %v956 = vpop.f32.mrf.mxu0
  %v957 = vadd.f32 %v897, %v956
  %v958 = vpop.f32.mrf.mxu0
  %959 = vmatprep.mubr.bf16.mxu0 0
  %960 = vmatmul.mubr.bf16.gmra.mxu0 %v818
  %v961 = vpop.f32.mrf.mxu0
  %v962 = vadd.f32 %v897, %v961
  %v963 = vpop.f32.mrf.mxu0
  %v964 = vpop.f32.mrf.mxu0
  %v965 = vadd.f32 %v897, %v964
  %v966 = vpop.f32.mrf.mxu0
  %967 = vmatprep.mubr.bf16.mxu0 0
  %968 = vmatmul.mubr.bf16.gmra.mxu0 %v821
  %v969 = vpop.f32.mrf.mxu0
  %v970 = vadd.f32 %v897, %v969
  %v971 = vpop.f32.mrf.mxu0
  %v972 = vpop.f32.mrf.mxu0
  %v973 = vadd.f32 %v897, %v972
  %v974 = vpop.f32.mrf.mxu0
  %975 = vdwg.mxu0
  %v984 = vrot.slane %v142, 7
  %vm985 = vcmask 1045509
  %v986 = vsel %vm985, %v984, %v141
  %v987 = vrot.slane %v143, 6
  %vm988 = vcmask 1046534
  %v989 = vsel %vm988, %v987, %v986
  %v990 = vrot.slane %v144, 5
  %vm991 = vcmask 1047559
  %v992 = vsel %vm991, %v990, %v989
  %v993 = vrot.slane %v145, 4
  %v994 = vrot.slane %v146, 3
  %vm995 = vcmask 1041409
  %v996 = vsel %vm995, %v994, %v993
  %v997 = vrot.slane %v147, 2
  %vm998 = vcmask 1042434
  %v999 = vsel %vm998, %v997, %v996
  %v1000 = vrot.slane %v148, 1
  %vm1001 = vcmask 1043459
  %v1002 = vsel %vm1001, %v1000, %v999
  %vm1005 = vcmask 261124
  %v1006 = vsel %vm1005, %v992, 0.0
  %1007 = vadd.xlane.f32.xlu0 %v1006
  %v1008 = vpop.xlane.xlu0 %1007
  %vm1009 = vcmask 257024
  %v1010 = vsel %vm1009, %v1002, 0.0
  %1011 = vadd.xlane.f32.xlu0 %v1010
  %v1012 = vpop.xlane.xlu0 %1011
  %v1013 = vmul.f32 %v1008, %v182
  %v1014 = vmul.f32 %v1012, %v182
  %v1017 = vrot.slane %v1013, 1
  %v1018 = vrot.slane %v1013, 2
  %v1019 = vrot.slane %v1013, 3
  %v1020 = vrot.slane %v1014, 4
  %v1021 = vrot.slane %v1014, 5
  %v1022 = vrot.slane %v1014, 6
  %v1023 = vrot.slane %v1014, 7
  %v1032 = vsub.f32 %v141, %v1013
  %v1033 = vsub.f32 %v142, %v1017
  %v1034 = vsub.f32 %v143, %v1018
  %v1035 = vsub.f32 %v144, %v1019
  %v1036 = vsub.f32 %v145, %v1020
  %v1037 = vsub.f32 %v146, %v1021
  %v1038 = vsub.f32 %v147, %v1022
  %v1039 = vsub.f32 %v148, %v1023
  %v1040 = vmul.f32 %v1032, %v1032
  %v1041 = vmul.f32 %v1033, %v1033
  %v1042 = vmul.f32 %v1034, %v1034
  %v1043 = vmul.f32 %v1035, %v1035
  %v1044 = vmul.f32 %v1036, %v1036
  %v1045 = vmul.f32 %v1037, %v1037
  %v1046 = vmul.f32 %v1038, %v1038
  %v1047 = vmul.f32 %v1039, %v1039
  %v1056 = vrot.slane %v1041, 7
  %v1057 = vsel %vm985, %v1056, %v1040
  %v1058 = vrot.slane %v1042, 6
  %v1059 = vsel %vm988, %v1058, %v1057
  %v1060 = vrot.slane %v1043, 5
  %v1061 = vsel %vm991, %v1060, %v1059
  %v1062 = vrot.slane %v1044, 4
  %v1063 = vrot.slane %v1045, 3
  %v1064 = vsel %vm995, %v1063, %v1062
  %v1065 = vrot.slane %v1046, 2
  %v1066 = vsel %vm998, %v1065, %v1064
  %v1067 = vrot.slane %v1047, 1
  %v1068 = vsel %vm1001, %v1067, %v1066
  %v1071 = vsel %vm1005, %v1061, 0.0
  %1072 = vadd.xlane.f32.xlu0 %v1071
  %v1073 = vpop.xlane.xlu0 %1072
  %v1074 = vsel %vm1009, %v1068, 0.0
  %1075 = vadd.xlane.f32.xlu0 %v1074
  %v1076 = vpop.xlane.xlu0 %1075
  %v1077 = vmul.f32 %v1073, %v182
  %v1078 = vmul.f32 %v1076, %v182
  %v1079 = vadd.f32 %v1077, 1e-05
  %v1080 = vadd.f32 %v1078, 1e-05
  %v1081 = vrsqrt.pop %v1079
  %v1082 = vrsqrt.pop %v1080
  %v1085 = vrot.slane %v1081, 1
  %v1086 = vrot.slane %v1081, 2
  %v1087 = vrot.slane %v1081, 3
  %v1088 = vrot.slane %v1082, 4
  %v1089 = vrot.slane %v1082, 5
  %v1090 = vrot.slane %v1082, 6
  %v1091 = vrot.slane %v1082, 7
  %v1100 = vmul.f32 %v1032, %v1081
  %v1101 = vmul.f32 %v1033, %v1085
  %v1102 = vmul.f32 %v1034, %v1086
  %v1103 = vmul.f32 %v1035, %v1087
  %v1104 = vmul.f32 %v1036, %v1088
  %v1105 = vmul.f32 %v1037, %v1089
  %v1106 = vmul.f32 %v1038, %v1090
  %v1107 = vmul.f32 %v1039, %v1091
  %v1108 = vmul.f32 %v1100, %v267
  %v1109 = vmul.f32 %v1101, %v267
  %v1110 = vmul.f32 %v1102, %v267
  %v1111 = vmul.f32 %v1103, %v267
  %v1112 = vmul.f32 %v1104, %v267
  %v1113 = vmul.f32 %v1105, %v267
  %v1114 = vmul.f32 %v1106, %v267
  %v1115 = vmul.f32 %v1107, %v267
  %v1116 = vadd.f32 %v1108, %v281
  %v1117 = vadd.f32 %v1109, %v281
  %v1118 = vadd.f32 %v1110, %v281
  %v1119 = vadd.f32 %v1111, %v281
  %v1120 = vadd.f32 %v1112, %v281
  %v1121 = vadd.f32 %v1113, %v281
  %v1122 = vadd.f32 %v1114, %v281
  %v1123 = vadd.f32 %v1115, %v281
  %v1132 = vrot.slane %v402, 7
  %v1133 = vsel %vm985, %v1132, %v401
  %v1134 = vrot.slane %v403, 6
  %v1135 = vsel %vm988, %v1134, %v1133
  %v1136 = vrot.slane %v404, 5
  %v1137 = vsel %vm991, %v1136, %v1135
  %v1138 = vrot.slane %v405, 4
  %v1139 = vrot.slane %v406, 3
  %v1140 = vsel %vm995, %v1139, %v1138
  %v1141 = vrot.slane %v407, 2
  %v1142 = vsel %vm998, %v1141, %v1140
  %v1143 = vrot.slane %v408, 1
  %v1144 = vsel %vm1001, %v1143, %v1142
  %vm1147 = vcmask 130052
  %v1148 = vsel %vm1147, %v1137, 0.0
  %1149 = vadd.xlane.f32.xlu0 %v1148
  %v1150 = vpop.xlane.xlu0 %1149
  %vm1151 = vcmask 125952
  %v1152 = vsel %vm1151, %v1144, 0.0
  %1153 = vadd.xlane.f32.xlu0 %v1152
  %v1154 = vpop.xlane.xlu0 %1153
  %v1155 = vmul.f32 %v1150, %v434
  %v1156 = vmul.f32 %v1154, %v434
  %v1159 = vrot.slane %v1155, 1
  %v1160 = vrot.slane %v1155, 2
  %v1161 = vrot.slane %v1155, 3
  %v1162 = vrot.slane %v1156, 4
  %v1163 = vrot.slane %v1156, 5
  %v1164 = vrot.slane %v1156, 6
  %v1165 = vrot.slane %v1156, 7
  %v1174 = vsub.f32 %v401, %v1155
  %v1175 = vsub.f32 %v402, %v1159
  %v1176 = vsub.f32 %v403, %v1160
  %v1177 = vsub.f32 %v404, %v1161
  %v1178 = vsub.f32 %v405, %v1162
  %v1179 = vsub.f32 %v406, %v1163
  %v1180 = vsub.f32 %v407, %v1164
  %v1181 = vsub.f32 %v408, %v1165
  %v1182 = vmul.f32 %v1174, %v1174
  %v1183 = vmul.f32 %v1175, %v1175
  %v1184 = vmul.f32 %v1176, %v1176
  %v1185 = vmul.f32 %v1177, %v1177
  %v1186 = vmul.f32 %v1178, %v1178
  %v1187 = vmul.f32 %v1179, %v1179
  %v1188 = vmul.f32 %v1180, %v1180
  %v1189 = vmul.f32 %v1181, %v1181
  %v1198 = vrot.slane %v1183, 7
  %v1199 = vsel %vm985, %v1198, %v1182
  %v1200 = vrot.slane %v1184, 6
  %v1201 = vsel %vm988, %v1200, %v1199
  %v1202 = vrot.slane %v1185, 5
  %v1203 = vsel %vm991, %v1202, %v1201
  %v1204 = vrot.slane %v1186, 4
  %v1205 = vrot.slane %v1187, 3
  %v1206 = vsel %vm995, %v1205, %v1204
  %v1207 = vrot.slane %v1188, 2
  %v1208 = vsel %vm998, %v1207, %v1206
  %v1209 = vrot.slane %v1189, 1
  %v1210 = vsel %vm1001, %v1209, %v1208
  %v1213 = vsel %vm1147, %v1203, 0.0
  %1214 = vadd.xlane.f32.xlu0 %v1213
  %v1215 = vpop.xlane.xlu0 %1214
  %v1216 = vsel %vm1151, %v1210, 0.0
  %1217 = vadd.xlane.f32.xlu0 %v1216
  %v1218 = vpop.xlane.xlu0 %1217
  %v1219 = vmul.f32 %v1215, %v434
  %v1220 = vmul.f32 %v1218, %v434
  %v1221 = vadd.f32 %v1219, 1e-05
  %v1222 = vadd.f32 %v1220, 1e-05
  %v1223 = vrsqrt.pop %v1221
  %v1224 = vrsqrt.pop %v1222
  %v1227 = vrot.slane %v1223, 1
  %v1228 = vrot.slane %v1223, 2
  %v1229 = vrot.slane %v1223, 3
  %v1230 = vrot.slane %v1224, 4
  %v1231 = vrot.slane %v1224, 5
  %v1232 = vrot.slane %v1224, 6
  %v1233 = vrot.slane %v1224, 7
  %v1242 = vmul.f32 %v1174, %v1223
  %v1243 = vmul.f32 %v1175, %v1227
  %v1244 = vmul.f32 %v1176, %v1228
  %v1245 = vmul.f32 %v1177, %v1229
  %v1246 = vmul.f32 %v1178, %v1230
  %v1247 = vmul.f32 %v1179, %v1231
  %v1248 = vmul.f32 %v1180, %v1232
  %v1249 = vmul.f32 %v1181, %v1233
  %v1250 = vmul.f32 %v1242, %v519
  %v1251 = vmul.f32 %v1243, %v519
  %v1252 = vmul.f32 %v1244, %v519
  %v1253 = vmul.f32 %v1245, %v519
  %v1254 = vmul.f32 %v1246, %v519
  %v1255 = vmul.f32 %v1247, %v519
  %v1256 = vmul.f32 %v1248, %v519
  %v1257 = vmul.f32 %v1249, %v519
  %v1258 = vadd.f32 %v1250, %v533
  %v1259 = vadd.f32 %v1251, %v533
  %v1260 = vadd.f32 %v1252, %v533
  %v1261 = vadd.f32 %v1253, %v533
  %v1262 = vadd.f32 %v1254, %v533
  %v1263 = vadd.f32 %v1255, %v533
  %v1264 = vadd.f32 %v1256, %v533
  %v1265 = vadd.f32 %v1257, %v533
  %v1266 = vtanh.pop %v1258
  %v1267 = vtanh.pop %v1259
  %v1268 = vtanh.pop %v1260
  %v1269 = vtanh.pop %v1261
  %v1270 = vtanh.pop %v1262
  %v1271 = vtanh.pop %v1263
  %v1272 = vtanh.pop %v1264
  %v1273 = vtanh.pop %v1265
  %v1274 = vpack.c.bf16 %v1266, %v1266
  %v1275 = vpack.c.bf16 %v1267, %v1267
  %v1276 = vpack.c.bf16 %v1268, %v1268
  %v1277 = vpack.c.bf16 %v1269, %v1269
  %v1278 = vpack.c.bf16 %v1270, %v1270
  %v1279 = vpack.c.bf16 %v1271, %v1271
  %v1280 = vpack.c.bf16 %v1272, %v1272
  %v1281 = vpack.c.bf16 %v1273, %v1273
  %v1290 = vunpack.c.l.b16 %v1274
  %v1291 = vunpack.c.l.b16 %v1275
  %v1292 = vunpack.c.l.b16 %v1276
  %v1293 = vunpack.c.l.b16 %v1277
  %v1294 = vunpack.c.l.b16 %v1278
  %v1295 = vunpack.c.l.b16 %v1279
  %v1296 = vunpack.c.l.b16 %v1280
  %v1297 = vunpack.c.l.b16 %v1281
  %v1298 = vrot.slane %v1290, 4
  %v1299 = vrot.slane %v1291, 3
  %v1300 = vsel %vm995, %v1299, %v1298
  %v1301 = vrot.slane %v1292, 2
  %v1302 = vsel %vm998, %v1301, %v1300
  %v1303 = vrot.slane %v1293, 1
  %v1304 = vsel %vm1001, %v1303, %v1302
  %vm1305 = vcmask 1044484
  %v1306 = vsel %vm1305, %v1294, %v1304
  %v1307 = vrot.slane %v1295, 7
  %v1308 = vsel %vm985, %v1307, %v1306
  %v1309 = vrot.slane %v1296, 6
  %v1310 = vsel %vm988, %v1309, %v1308
  %v1311 = vrot.slane %v1297, 5
  %v1312 = vsel %vm991, %v1311, %v1310
  %v1313 = vpack.c.b16 %v1312, %v1312
  %v1315 = vsel %vm409, %v1313, 0
  %1317 = vmatprep.subr.bf16.mxu0 0
  %1318 = vmatpush1.bf16.msra.mxu0 0
  %1319 = vmatprep.subr.bf16.mxu0 0
  %1320 = vmatpush1.bf16.msra.mxu0 0
  %1321 = vmatprep.subr.bf16.mxu0 0
  %1322 = vmatpush1.bf16.msra.mxu0 0
  %1323 = vmatprep.subr.bf16.mxu0 0
  %1324 = vmatpush1.bf16.msra.mxu0 0
  %1325 = vmatprep.subr.bf16.mxu0 0
  %1326 = vmatpush1.bf16.msra.mxu0 0
  %1327 = vmatprep.subr.bf16.mxu0 0
  %1328 = vmatpush1.bf16.msra.mxu0 0
  %1329 = vmatprep.subr.bf16.mxu0 0
  %1330 = vmatpush1.bf16.msra.mxu0 0
  %1331 = vmatprep.subr.bf16.mxu0 0
  %1332 = vmatpush1.bf16.msra.mxu0 %v565
  %1333 = vmatprep.subr.bf16.mxu0 0
  %1334 = vmatpush2.bf16.msra.mxu0 0
  %1335 = vmatprep.subr.bf16.mxu0 0
  %1336 = vmatpush2.bf16.msra.mxu0 0
  %1337 = vmatprep.subr.bf16.mxu0 0
  %1338 = vmatpush2.bf16.msra.mxu0 0
  %1339 = vmatprep.subr.bf16.mxu0 0
  %1340 = vmatpush2.bf16.msra.mxu0 0
  %1341 = vmatprep.subr.bf16.mxu0 0
  %1342 = vmatpush2.bf16.msra.mxu0 0
  %1343 = vmatprep.subr.bf16.mxu0 0
  %1344 = vmatpush2.bf16.msra.mxu0 0
  %1345 = vmatprep.subr.bf16.mxu0 0
  %1346 = vmatpush2.bf16.msra.mxu0 0
  %1347 = vmatprep.subr.bf16.mxu0 0
  %1348 = vmatpush2.bf16.msra.mxu0 0
  %1349 = vmatprep.mubr.bf16.mxu0 0
  %1350 = vmatmul.mubr.bf16.gmra.mxu0 %v1315
  %v1351 = vpop.f32.mrf.mxu0
  %v1352 = vadd.f32 %v559, %v1351
  %v1353 = vpop.f32.mrf.mxu0
  %v1354 = vpop.f32.mrf.mxu0
  %v1355 = vpop.f32.mrf.mxu0
  %1356 = vdwg.mxu0
  %v1357 = vsel %vm157, %v1352, 0.0
  %1358 = vadd.xlane.f32.xlu0 %v1357
  %v1359 = vpop.xlane.xlu0 %1358
  %v1360 = vmul.f32 %v1359, %v182
  %v1361 = vsub.f32 %v1352, %v1360
  %v1362 = vmul.f32 %v1361, %v1361
  %v1363 = vsel %vm157, %v1362, 0.0
  %1364 = vadd.xlane.f32.xlu0 %v1363
  %v1365 = vpop.xlane.xlu0 %1364
  %v1366 = vmul.f32 %v1365, %v182
  %v1367 = vadd.f32 %v1366, 1e-05
  %v1368 = vrsqrt.pop %v1367
  %v1369 = vmul.f32 %v1361, %v1368
  %v1370 = vmul.f32 %v1369, %v752
  %v1371 = vadd.f32 %v1370, %v766
  %v1373 = vrot.slane %v1371, 4
  %v1374 = vrot.slane %v1371, 5
  %v1375 = vrot.slane %v1371, 6
  %v1376 = vrot.slane %v1371, 7
  %v1377 = vrot.slane %v1371, 1
  %v1378 = vrot.slane %v1371, 2
  %v1379 = vrot.slane %v1371, 3
  %v1388 = vadd.f32 %v1116, %v1373
  %v1389 = vadd.f32 %v1117, %v1374
  %v1390 = vadd.f32 %v1118, %v1375
  %v1391 = vadd.f32 %v1119, %v1376
  %v1392 = vadd.f32 %v1120, %v1371
  %v1393 = vadd.f32 %v1121, %v1377
  %v1394 = vadd.f32 %v1122, %v1378
  %v1395 = vadd.f32 %v1123, %v1379
  %v1396 = vpack.c.bf16 %v1388, %v1388
  %v1397 = vpack.c.bf16 %v1389, %v1389
  %v1398 = vpack.c.bf16 %v1390, %v1390
  %v1399 = vpack.c.bf16 %v1391, %v1391
  %v1400 = vpack.c.bf16 %v1392, %v1392
  %v1401 = vpack.c.bf16 %v1393, %v1393
  %v1402 = vpack.c.bf16 %v1394, %v1394
  %v1403 = vpack.c.bf16 %v1395, %v1395
  %v1404 = vld [vmem:[%s25] sm:$0xf]
  %v1405 = vld [vmem:[%s25 + $0x4] sm:$0xf]
  %v1406 = vld [vmem:[%s25 + $0x8] sm:$0xf]
  %v1407 = vld [vmem:[%s25 + $0xc] sm:$0xf]
  %v1408 = vld [vmem:[%s27] sm:$0x1]
  %v1410 = vlaneseq
  %v1411 = vshrl.u32 %v1410, 7
  %v1412 = vsub.s32 0, %v1411
  %v1413 = vrot.slane %v1408, %v1412
  %v1423 = vunpack.c.l.b16 %v1396
  %v1424 = vunpack.c.l.b16 %v1397
  %v1425 = vunpack.c.l.b16 %v1398
  %v1426 = vunpack.c.l.b16 %v1399
  %v1427 = vunpack.c.l.b16 %v1400
  %v1428 = vunpack.c.l.b16 %v1401
  %v1429 = vunpack.c.l.b16 %v1402
  %v1430 = vunpack.c.l.b16 %v1403
  %v1431 = vrot.slane %v1423, 4
  %v1432 = vrot.slane %v1424, 3
  %v1433 = vsel %vm995, %v1432, %v1431
  %v1434 = vrot.slane %v1425, 2
  %v1435 = vsel %vm998, %v1434, %v1433
  %v1436 = vrot.slane %v1426, 1
  %v1437 = vsel %vm1001, %v1436, %v1435
  %v1438 = vsel %vm1305, %v1427, %v1437
  %v1439 = vrot.slane %v1428, 7
  %v1440 = vsel %vm985, %v1439, %v1438
  %v1441 = vrot.slane %v1429, 6
  %v1442 = vsel %vm988, %v1441, %v1440
  %v1443 = vrot.slane %v1430, 5
  %v1444 = vsel %vm991, %v1443, %v1442
  %v1445 = vpack.c.b16 %v1444, %v1444
  %v1450 = vunpack.c.l.b16 %v1404
  %v1451 = vunpack.c.l.b16 %v1405
  %v1452 = vunpack.c.l.b16 %v1406
  %v1453 = vunpack.c.l.b16 %v1407
  %v1454 = vpack.c.b16 %v1451, %v1450
  %v1455 = vpack.c.b16 %v1453, %v1452
  %v1459 = vsel %vm157, %v1445, 0
  %1461 = vmatprep.subr.bf16.mxu0 0
  %1462 = vmatpush1.bf16.msra.mxu0 0
  %1463 = vmatprep.subr.bf16.mxu0 0
  %1464 = vmatpush1.bf16.msra.mxu0 0
  %1465 = vmatprep.subr.bf16.mxu0 0
  %1466 = vmatpush1.bf16.msra.mxu0 0
  %1467 = vmatprep.subr.bf16.mxu0 0
  %1468 = vmatpush1.bf16.msra.mxu0 0
  %1469 = vmatprep.subr.bf16.mxu0 0
  %1470 = vmatpush1.bf16.msra.mxu0 0
  %1471 = vmatprep.subr.bf16.mxu0 0
  %1472 = vmatpush1.bf16.msra.mxu0 0
  %1473 = vmatprep.subr.bf16.mxu0 0
  %1474 = vmatpush1.bf16.msra.mxu0 %v1455
  %1475 = vmatprep.subr.bf16.mxu0 0
  %1476 = vmatpush1.bf16.msra.mxu0 %v1454
  %1477 = vmatprep.subr.bf16.mxu0 0
  %1478 = vmatpush2.bf16.msra.mxu0 0
  %1479 = vmatprep.subr.bf16.mxu0 0
  %1480 = vmatpush2.bf16.msra.mxu0 0
  %1481 = vmatprep.subr.bf16.mxu0 0
  %1482 = vmatpush2.bf16.msra.mxu0 0
  %1483 = vmatprep.subr.bf16.mxu0 0
  %1484 = vmatpush2.bf16.msra.mxu0 0
  %1485 = vmatprep.subr.bf16.mxu0 0
  %1486 = vmatpush2.bf16.msra.mxu0 0
  %1487 = vmatprep.subr.bf16.mxu0 0
  %1488 = vmatpush2.bf16.msra.mxu0 0
  %1489 = vmatprep.subr.bf16.mxu0 0
  %1490 = vmatpush2.bf16.msra.mxu0 0
  %1491 = vmatprep.subr.bf16.mxu0 0
  %1492 = vmatpush2.bf16.msra.mxu0 0
  %1493 = vmatprep.mubr.bf16.mxu0 0
  %1494 = vmatmul.mubr.bf16.gmra.mxu0 %v1459
  %v1495 = vpop.f32.mrf.mxu0
  %v1496 = vadd.f32 %v1413, %v1495
  %v1497 = vpop.f32.mrf.mxu0
  %v1498 = vpop.f32.mrf.mxu0
  %v1499 = vpop.f32.mrf.mxu0
  %1500 = vdwg.mxu0
  %v1501 = vmul.f32 %v1496, 0.35355327
  %v1503 = vcombine.high %v1501, %v1501
  %v1505 = vunpack.c.l.s4 1966171168
  %v1506 = vunpack.c.0.s8 %v1505
  %v1507 = vlaneseq
  %v1508 = vshrl.u32 %v1507, 7
  %v1509 = vsub.s32 %v1506, %v1508
  %v1510 = vrot.slane %v1501, %v1509
  %v1512 = vunpack.c.l.s4 1966171168
  %v1513 = vunpack.c.0.s8 %v1512
  %v1514 = vlaneseq
  %v1515 = vshrl.u32 %v1514, 7
  %v1516 = vsub.s32 %v1513, %v1515
  %v1517 = vrot.slane %v1503, %v1516
  %v1518 = vcombine.high %v1510, %v1510
  %v1519 = vcombine.high %v1517, %v1517
  %v1521 = vunpack.c.l.s4 1966171168
  %v1522 = vunpack.c.0.s8 %v1521
  %v1523 = vlaneseq
  %v1524 = vshrl.u32 %v1523, 7
  %v1525 = vsub.s32 %v1522, %v1524
  %v1526 = vrot.slane %v1510, %v1525
  %v1528 = vunpack.c.l.s4 1966171168
  %v1529 = vunpack.c.0.s8 %v1528
  %v1530 = vlaneseq
  %v1531 = vshrl.u32 %v1530, 7
  %v1532 = vsub.s32 %v1529, %v1531
  %v1533 = vrot.slane %v1517, %v1532
  %v1535 = vunpack.c.l.s4 1966171168
  %v1536 = vunpack.c.0.s8 %v1535
  %v1537 = vlaneseq
  %v1538 = vshrl.u32 %v1537, 7
  %v1539 = vsub.s32 %v1536, %v1538
  %v1540 = vrot.slane %v1518, %v1539
  %v1542 = vunpack.c.l.s4 1966171168
  %v1543 = vunpack.c.0.s8 %v1542
  %v1544 = vlaneseq
  %v1545 = vshrl.u32 %v1544, 7
  %v1546 = vsub.s32 %v1543, %v1545
  %v1547 = vrot.slane %v1519, %v1546
  %v1548 = vcombine.high %v1526, %v1526
  %v1549 = vcombine.high %v1533, %v1533
  %v1550 = vcombine.high %v1540, %v1540
  %v1551 = vcombine.high %v1547, %v1547
  %v1552 = vlaneseq
  %v1553 = vshrl.u32 %v1552, 7
  %v1554 = vsub.s32 0, %v1553
  %v1555 = vrot.slane %v1526, %v1554
  %v1556 = vlaneseq
  %v1557 = vshrl.u32 %v1556, 7
  %v1558 = vsub.s32 0, %v1557
  %v1559 = vrot.slane %v1540, %v1558
  %v1560 = vlaneseq
  %v1561 = vshrl.u32 %v1560, 7
  %v1562 = vsub.s32 0, %v1561
  %v1563 = vrot.slane %v1548, %v1562
  %v1564 = vlaneseq
  %v1565 = vshrl.u32 %v1564, 7
  %v1566 = vsub.s32 0, %v1565
  %v1567 = vrot.slane %v1550, %v1566
  %v1568 = vlaneseq
  %v1569 = vshrl.u32 %v1568, 7
  %v1570 = vsub.s32 0, %v1569
  %v1571 = vrot.slane %v1533, %v1570
  %v1572 = vlaneseq
  %v1573 = vshrl.u32 %v1572, 7
  %v1574 = vsub.s32 0, %v1573
  %v1575 = vrot.slane %v1547, %v1574
  %v1576 = vlaneseq
  %v1577 = vshrl.u32 %v1576, 7
  %v1578 = vsub.s32 0, %v1577
  %v1579 = vrot.slane %v1549, %v1578
  %v1580 = vlaneseq
  %v1581 = vshrl.u32 %v1580, 7
  %v1582 = vsub.s32 0, %v1581
  %v1583 = vrot.slane %v1551, %v1582
  %v1592 = vmul.f32 %v1555, %v858
  %v1593 = vmul.f32 %v1559, %v861
  %v1594 = vmul.f32 %v1563, %v866
  %v1595 = vmul.f32 %v1567, %v869
  %v1596 = vmul.f32 %v1571, %v874
  %v1597 = vmul.f32 %v1575, %v877
  %v1598 = vmul.f32 %v1579, %v882
  %v1599 = vmul.f32 %v1583, %v885
  %v1600 = vpack.c.bf16 %v1593, %v1592
  %v1601 = vpack.c.bf16 %v1595, %v1594
  %v1602 = vpack.c.bf16 %v1597, %v1596
  %v1603 = vpack.c.bf16 %v1599, %v1598
  %v1608 = vunpack.c.l.b16 %v135
  %v1609 = vunpack.c.l.b16 %v136
  %v1610 = vunpack.c.l.b16 %v137
  %v1611 = vunpack.c.l.b16 %v138
  %v1612 = vpack.c.b16 %v1609, %v1608
  %v1613 = vpack.c.b16 %v1611, %v1610
  %v1617 = vsel %vm157, %v1600, 0
  %v1620 = vsel %vm157, %v1601, 0
  %v1623 = vsel %vm157, %v1602, 0
  %v1626 = vsel %vm157, %v1603, 0
  %1628 = vmatprep.subr.bf16.mxu0 0
  %1629 = vmatpush1.bf16.msra.mxu0 0
  %1630 = vmatprep.subr.bf16.mxu0 0
  %1631 = vmatpush1.bf16.msra.mxu0 0
  %1632 = vmatprep.subr.bf16.mxu0 0
  %1633 = vmatpush1.bf16.msra.mxu0 0
  %1634 = vmatprep.subr.bf16.mxu0 0
  %1635 = vmatpush1.bf16.msra.mxu0 0
  %1636 = vmatprep.subr.bf16.mxu0 0
  %1637 = vmatpush1.bf16.msra.mxu0 0
  %1638 = vmatprep.subr.bf16.mxu0 0
  %1639 = vmatpush1.bf16.msra.mxu0 0
  %1640 = vmatprep.subr.bf16.mxu0 0
  %1641 = vmatpush1.bf16.msra.mxu0 %v1613
  %1642 = vmatprep.subr.bf16.mxu0 0
  %1643 = vmatpush1.bf16.msra.mxu0 %v1612
  %1644 = vmatprep.subr.bf16.mxu0 0
  %1645 = vmatpush2.bf16.msra.mxu0 0
  %1646 = vmatprep.subr.bf16.mxu0 0
  %1647 = vmatpush2.bf16.msra.mxu0 0
  %1648 = vmatprep.subr.bf16.mxu0 0
  %1649 = vmatpush2.bf16.msra.mxu0 0
  %1650 = vmatprep.subr.bf16.mxu0 0
  %1651 = vmatpush2.bf16.msra.mxu0 0
  %1652 = vmatprep.subr.bf16.mxu0 0
  %1653 = vmatpush2.bf16.msra.mxu0 0
  %1654 = vmatprep.subr.bf16.mxu0 0
  %1655 = vmatpush2.bf16.msra.mxu0 0
  %1656 = vmatprep.subr.bf16.mxu0 0
  %1657 = vmatpush2.bf16.msra.mxu0 0
  %1658 = vmatprep.subr.bf16.mxu0 0
  %1659 = vmatpush2.bf16.msra.mxu0 0
  %1660 = vmatprep.mubr.bf16.mxu0 0
  %1661 = vmatmul.mubr.bf16.gmra.mxu0 %v1617
  %v1662 = vpop.f32.mrf.mxu0
  %v1663 = vadd.f32 0.0, %v1662
  %v1664 = vpop.f32.mrf.mxu0
  %v1665 = vpop.f32.mrf.mxu0
  %v1666 = vadd.f32 0.0, %v1665
  %v1667 = vpop.f32.mrf.mxu0
  %1668 = vmatprep.mubr.bf16.mxu0 0
  %1669 = vmatmul.mubr.bf16.gmra.mxu0 %v1620
  %v1670 = vpop.f32.mrf.mxu0
  %v1671 = vadd.f32 0.0, %v1670
  %v1672 = vpop.f32.mrf.mxu0
  %v1673 = vpop.f32.mrf.mxu0
  %v1674 = vadd.f32 0.0, %v1673
  %v1675 = vpop.f32.mrf.mxu0
  %1676 = vmatprep.mubr.bf16.mxu0 0
  %1677 = vmatmul.mubr.bf16.gmra.mxu0 %v1623
  %v1678 = vpop.f32.mrf.mxu0
  %v1679 = vadd.f32 0.0, %v1678
  %v1680 = vpop.f32.mrf.mxu0
  %v1681 = vpop.f32.mrf.mxu0
  %v1682 = vadd.f32 0.0, %v1681
  %v1683 = vpop.f32.mrf.mxu0
  %1684 = vmatprep.mubr.bf16.mxu0 0
  %1685 = vmatmul.mubr.bf16.gmra.mxu0 %v1626
  %v1686 = vpop.f32.mrf.mxu0
  %v1687 = vadd.f32 0.0, %v1686
  %v1688 = vpop.f32.mrf.mxu0
  %v1689 = vpop.f32.mrf.mxu0
  %v1690 = vadd.f32 0.0, %v1689
  %v1691 = vpop.f32.mrf.mxu0
  %1692 = vdwg.mxu0
  %v1693 = vadd.f32 %v1663, %v140
  %v1694 = vadd.f32 %v1666, %v140
  %v1695 = vadd.f32 %v1671, %v140
  %v1696 = vadd.f32 %v1674, %v140
  %v1697 = vadd.f32 %v1679, %v140
  %v1698 = vadd.f32 %v1682, %v140
  %v1699 = vadd.f32 %v1687, %v140
  %v1700 = vadd.f32 %v1690, %v140
  %v1701 = vmax.f32 %v1693, -10.0
  %v1702 = vmax.f32 %v1694, -10.0
  %v1703 = vmax.f32 %v1695, -10.0
  %v1704 = vmax.f32 %v1696, -10.0
  %v1705 = vmax.f32 %v1697, -10.0
  %v1706 = vmax.f32 %v1698, -10.0
  %v1707 = vmax.f32 %v1699, -10.0
  %v1708 = vmax.f32 %v1700, -10.0
  %v1709 = vmin.f32 %v1701, 10.0
  %v1710 = vmin.f32 %v1702, 10.0
  %v1711 = vmin.f32 %v1703, 10.0
  %v1712 = vmin.f32 %v1704, 10.0
  %v1713 = vmin.f32 %v1705, 10.0
  %v1714 = vmin.f32 %v1706, 10.0
  %v1715 = vmin.f32 %v1707, 10.0
  %v1716 = vmin.f32 %v1708, 10.0
  %v1717 = vmul.f32 %v1709, 1.442695
  %v1718 = vpow.pop %v1717
  %v1719 = vmul.f32 %v1710, 1.442695
  %v1720 = vpow.pop %v1719
  %v1721 = vmul.f32 %v1711, 1.442695
  %v1722 = vpow.pop %v1721
  %v1723 = vmul.f32 %v1712, 1.442695
  %v1724 = vpow.pop %v1723
  %v1725 = vmul.f32 %v1713, 1.442695
  %v1726 = vpow.pop %v1725
  %v1727 = vmul.f32 %v1714, 1.442695
  %v1728 = vpow.pop %v1727
  %v1729 = vmul.f32 %v1715, 1.442695
  %v1730 = vpow.pop %v1729
  %v1731 = vmul.f32 %v1716, 1.442695
  %v1732 = vpow.pop %v1731
  %vm1733 = vcmask 31744
  %v1734 = vsel %vm1733, %v1718, 0.0
  %v1735 = vrot.slane %v1734, 4
  %v1736 = vadd.f32 %v1734, %v1735
  %v1737 = vrot.slane %v1736, 2
  %v1738 = vadd.f32 %v1736, %v1737
  %v1739 = vrot.slane %v1738, 1
  %v1740 = vadd.f32 %v1738, %v1739
  %v1741 = vsel %vm1733, %v1720, 0.0
  %v1742 = vrot.slane %v1741, 4
  %v1743 = vadd.f32 %v1741, %v1742
  %v1744 = vrot.slane %v1743, 2
  %v1745 = vadd.f32 %v1743, %v1744
  %v1746 = vrot.slane %v1745, 1
  %v1747 = vadd.f32 %v1745, %v1746
  %v1748 = vsel %vm1733, %v1722, 0.0
  %v1749 = vrot.slane %v1748, 4
  %v1750 = vadd.f32 %v1748, %v1749
  %v1751 = vrot.slane %v1750, 2
  %v1752 = vadd.f32 %v1750, %v1751
  %v1753 = vrot.slane %v1752, 1
  %v1754 = vadd.f32 %v1752, %v1753
  %v1755 = vsel %vm1733, %v1724, 0.0
  %v1756 = vrot.slane %v1755, 4
  %v1757 = vadd.f32 %v1755, %v1756
  %v1758 = vrot.slane %v1757, 2
  %v1759 = vadd.f32 %v1757, %v1758
  %v1760 = vrot.slane %v1759, 1
  %v1761 = vadd.f32 %v1759, %v1760
  %v1762 = vsel %vm1733, %v1726, 0.0
  %v1763 = vrot.slane %v1762, 4
  %v1764 = vadd.f32 %v1762, %v1763
  %v1765 = vrot.slane %v1764, 2
  %v1766 = vadd.f32 %v1764, %v1765
  %v1767 = vrot.slane %v1766, 1
  %v1768 = vadd.f32 %v1766, %v1767
  %v1769 = vsel %vm1733, %v1728, 0.0
  %v1770 = vrot.slane %v1769, 4
  %v1771 = vadd.f32 %v1769, %v1770
  %v1772 = vrot.slane %v1771, 2
  %v1773 = vadd.f32 %v1771, %v1772
  %v1774 = vrot.slane %v1773, 1
  %v1775 = vadd.f32 %v1773, %v1774
  %v1776 = vsel %vm1733, %v1730, 0.0
  %v1777 = vrot.slane %v1776, 4
  %v1778 = vadd.f32 %v1776, %v1777
  %v1779 = vrot.slane %v1778, 2
  %v1780 = vadd.f32 %v1778, %v1779
  %v1781 = vrot.slane %v1780, 1
  %v1782 = vadd.f32 %v1780, %v1781
  %v1783 = vsel %vm1733, %v1732, 0.0
  %v1784 = vrot.slane %v1783, 4
  %v1785 = vadd.f32 %v1783, %v1784
  %v1786 = vrot.slane %v1785, 2
  %v1787 = vadd.f32 %v1785, %v1786
  %v1788 = vrot.slane %v1787, 1
  %v1789 = vadd.f32 %v1787, %v1788
  %v1790 = vrcp.pop %v1740
  %v1791 = vrcp.pop %v1747
  %v1792 = vrcp.pop %v1754
  %v1793 = vrcp.pop %v1761
  %v1794 = vrcp.pop %v1768
  %v1795 = vrcp.pop %v1775
  %v1796 = vrcp.pop %v1782
  %v1797 = vrcp.pop %v1789
  %v1798 = vmul.f32 %v1718, %v1790
  %v1799 = vmul.f32 %v1720, %v1791
  %v1800 = vmul.f32 %v1722, %v1792
  %v1801 = vmul.f32 %v1724, %v1793
  %v1802 = vmul.f32 %v1726, %v1794
  %v1803 = vmul.f32 %v1728, %v1795
  %v1804 = vmul.f32 %v1730, %v1796
  %v1805 = vmul.f32 %v1732, %v1797
  %v1806 = vpack.c.bf16 %v1799, %v1798
  %v1807 = vpack.c.bf16 %v1801, %v1800
  %v1808 = vpack.c.bf16 %v1803, %v1802
  %v1809 = vpack.c.bf16 %v1805, %v1804
  %v1811 = vsel %vm1733, %v1806, 0
  %v1814 = vsel %vm1733, %v1807, 0
  %v1817 = vsel %vm1733, %v1808, 0
  %v1820 = vsel %vm1733, %v1809, 0
  %vm1822 = vcmask 1041408
  %v1824 = vsel %vm1822, %v139, 0
  %1826 = vmatprep.subr.bf16.mxu0 0
  %1827 = vmatpush1.bf16.msra.mxu0 0
  %1828 = vmatprep.subr.bf16.mxu0 0
  %1829 = vmatpush1.bf16.msra.mxu0 0
  %1830 = vmatprep.subr.bf16.mxu0 0
  %1831 = vmatpush1.bf16.msra.mxu0 0
  %1832 = vmatprep.subr.bf16.mxu0 0
  %1833 = vmatpush1.bf16.msra.mxu0 0
  %1834 = vmatprep.subr.bf16.mxu0 0
  %1835 = vmatpush1.bf16.msra.mxu0 0
  %1836 = vmatprep.subr.bf16.mxu0 0
  %1837 = vmatpush1.bf16.msra.mxu0 0
  %1838 = vmatprep.subr.bf16.mxu0 0
  %1839 = vmatpush1.bf16.msra.mxu0 0
  %1840 = vmatprep.subr.bf16.mxu0 0
  %1841 = vmatpush1.bf16.msra.mxu0 %v1824
  %1842 = vmatprep.subr.bf16.mxu0 0
  %1843 = vmatpush2.bf16.msra.mxu0 0
  %1844 = vmatprep.subr.bf16.mxu0 0
  %1845 = vmatpush2.bf16.msra.mxu0 0
  %1846 = vmatprep.subr.bf16.mxu0 0
  %1847 = vmatpush2.bf16.msra.mxu0 0
  %1848 = vmatprep.subr.bf16.mxu0 0
  %1849 = vmatpush2.bf16.msra.mxu0 0
  %1850 = vmatprep.subr.bf16.mxu0 0
  %1851 = vmatpush2.bf16.msra.mxu0 0
  %1852 = vmatprep.subr.bf16.mxu0 0
  %1853 = vmatpush2.bf16.msra.mxu0 0
  %1854 = vmatprep.subr.bf16.mxu0 0
  %1855 = vmatpush2.bf16.msra.mxu0 0
  %1856 = vmatprep.subr.bf16.mxu0 0
  %1857 = vmatpush2.bf16.msra.mxu0 0
  %1858 = vmatprep.mubr.bf16.mxu0 0
  %1859 = vmatmul.mubr.bf16.gmra.mxu0 %v1811
  %v1860 = vpop.f32.mrf.mxu0
  %v1861 = vadd.f32 0.0, %v1860
  %v1862 = vpop.f32.mrf.mxu0
  %v1863 = vpop.f32.mrf.mxu0
  %v1864 = vadd.f32 0.0, %v1863
  %v1865 = vpop.f32.mrf.mxu0
  %1866 = vmatprep.mubr.bf16.mxu0 0
  %1867 = vmatmul.mubr.bf16.gmra.mxu0 %v1814
  %v1868 = vpop.f32.mrf.mxu0
  %v1869 = vadd.f32 0.0, %v1868
  %v1870 = vpop.f32.mrf.mxu0
  %v1871 = vpop.f32.mrf.mxu0
  %v1872 = vadd.f32 0.0, %v1871
  %v1873 = vpop.f32.mrf.mxu0
  %1874 = vmatprep.mubr.bf16.mxu0 0
  %1875 = vmatmul.mubr.bf16.gmra.mxu0 %v1817
  %v1876 = vpop.f32.mrf.mxu0
  %v1877 = vadd.f32 0.0, %v1876
  %v1878 = vpop.f32.mrf.mxu0
  %v1879 = vpop.f32.mrf.mxu0
  %v1880 = vadd.f32 0.0, %v1879
  %v1881 = vpop.f32.mrf.mxu0
  %1882 = vmatprep.mubr.bf16.mxu0 0
  %1883 = vmatmul.mubr.bf16.gmra.mxu0 %v1820
  %v1884 = vpop.f32.mrf.mxu0
  %v1885 = vadd.f32 0.0, %v1884
  %v1886 = vpop.f32.mrf.mxu0
  %v1887 = vpop.f32.mrf.mxu0
  %v1888 = vadd.f32 0.0, %v1887
  %v1889 = vpop.f32.mrf.mxu0
  %1890 = vdwg.mxu0
  %v1891 = vmul.f32 %v1861, %v946
  %v1892 = vmul.f32 %v1864, %v949
  %v1893 = vmul.f32 %v1869, %v954
  %v1894 = vmul.f32 %v1872, %v957
  %v1895 = vmul.f32 %v1877, %v962
  %v1896 = vmul.f32 %v1880, %v965
  %v1897 = vmul.f32 %v1885, %v970
  %v1898 = vmul.f32 %v1888, %v973
  %v1899 = vsel %vm157, %v1891, 0.0
  %v1900 = vrot.slane %v1899, 4
  %v1901 = vadd.f32 %v1899, %v1900
  %v1902 = vrot.slane %v1901, 2
  %v1903 = vadd.f32 %v1901, %v1902
  %v1904 = vrot.slane %v1903, 1
  %v1905 = vadd.f32 %v1903, %v1904
  %v1906 = vsel %vm157, %v1892, 0.0
  %v1907 = vrot.slane %v1906, 4
  %v1908 = vadd.f32 %v1906, %v1907
  %v1909 = vrot.slane %v1908, 2
  %v1910 = vadd.f32 %v1908, %v1909
  %v1911 = vrot.slane %v1910, 1
  %v1912 = vadd.f32 %v1910, %v1911
  %v1913 = vsel %vm157, %v1893, 0.0
  %v1914 = vrot.slane %v1913, 4
  %v1915 = vadd.f32 %v1913, %v1914
  %v1916 = vrot.slane %v1915, 2
  %v1917 = vadd.f32 %v1915, %v1916
  %v1918 = vrot.slane %v1917, 1
  %v1919 = vadd.f32 %v1917, %v1918
  %v1920 = vsel %vm157, %v1894, 0.0
  %v1921 = vrot.slane %v1920, 4
  %v1922 = vadd.f32 %v1920, %v1921
  %v1923 = vrot.slane %v1922, 2
  %v1924 = vadd.f32 %v1922, %v1923
  %v1925 = vrot.slane %v1924, 1
  %v1926 = vadd.f32 %v1924, %v1925
  %v1927 = vsel %vm157, %v1895, 0.0
  %v1928 = vrot.slane %v1927, 4
  %v1929 = vadd.f32 %v1927, %v1928
  %v1930 = vrot.slane %v1929, 2
  %v1931 = vadd.f32 %v1929, %v1930
  %v1932 = vrot.slane %v1931, 1
  %v1933 = vadd.f32 %v1931, %v1932
  %v1934 = vsel %vm157, %v1896, 0.0
  %v1935 = vrot.slane %v1934, 4
  %v1936 = vadd.f32 %v1934, %v1935
  %v1937 = vrot.slane %v1936, 2
  %v1938 = vadd.f32 %v1936, %v1937
  %v1939 = vrot.slane %v1938, 1
  %v1940 = vadd.f32 %v1938, %v1939
  %v1941 = vsel %vm157, %v1897, 0.0
  %v1942 = vrot.slane %v1941, 4
  %v1943 = vadd.f32 %v1941, %v1942
  %v1944 = vrot.slane %v1943, 2
  %v1945 = vadd.f32 %v1943, %v1944
  %v1946 = vrot.slane %v1945, 1
  %v1947 = vadd.f32 %v1945, %v1946
  %v1948 = vsel %vm157, %v1898, 0.0
  %v1949 = vrot.slane %v1948, 4
  %v1950 = vadd.f32 %v1948, %v1949
  %v1951 = vrot.slane %v1950, 2
  %v1952 = vadd.f32 %v1950, %v1951
  %v1953 = vrot.slane %v1952, 1
  %v1954 = vadd.f32 %v1952, %v1953
  %v1955 = vpack.c.bf16 %v1905, %v1905
  %v1956 = vpack.c.bf16 %v1912, %v1912
  %v1957 = vpack.c.bf16 %v1919, %v1919
  %v1958 = vpack.c.bf16 %v1926, %v1926
  %v1959 = vpack.c.bf16 %v1933, %v1933
  %v1960 = vpack.c.bf16 %v1940, %v1940
  %v1961 = vpack.c.bf16 %v1947, %v1947
  %v1962 = vpack.c.bf16 %v1954, %v1954
  %v1963 = vld [vmem:[%s37] sm:$0xf]
  %v1964 = vld [vmem:[%s37 + $0x4] sm:$0xf]
  %v1965 = vld [vmem:[%s37 + $0x8] sm:$0xf]
  %v1966 = vld [vmem:[%s37 + $0xc] sm:$0xf]
  %v1967 = vld [vmem:[%s39] sm:$0x1]
  %v1969 = vlaneseq
  %v1970 = vshrl.u32 %v1969, 7
  %v1971 = vsub.s32 0, %v1970
  %v1972 = vrot.slane %v1967, %v1971
  %v1982 = vunpack.c.l.b16 %v1955
  %v1983 = vunpack.c.l.b16 %v1956
  %v1984 = vunpack.c.l.b16 %v1957
  %v1985 = vunpack.c.l.b16 %v1958
  %v1986 = vunpack.c.l.b16 %v1959
  %v1987 = vunpack.c.l.b16 %v1960
  %v1988 = vunpack.c.l.b16 %v1961
  %v1989 = vunpack.c.l.b16 %v1962
  %v1990 = vsel %vm995, %v1983, %v1982
  %v1991 = vsel %vm998, %v1984, %v1990
  %v1992 = vsel %vm1001, %v1985, %v1991
  %v1993 = vsel %vm1305, %v1986, %v1992
  %v1994 = vsel %vm985, %v1987, %v1993
  %v1995 = vsel %vm988, %v1988, %v1994
  %v1996 = vsel %vm991, %v1989, %v1995
  %v1997 = vpack.c.b16 %v1996, %v1996
  %v2002 = vunpack.c.l.b16 %v1963
  %v2003 = vunpack.c.l.b16 %v1964
  %v2004 = vunpack.c.l.b16 %v1965
  %v2005 = vunpack.c.l.b16 %v1966
  %v2006 = vpack.c.b16 %v2003, %v2002
  %v2007 = vpack.c.b16 %v2005, %v2004
  %v2011 = vsel %vm157, %v1997, 0
  %2013 = vmatprep.subr.bf16.mxu0 0
  %2014 = vmatpush1.bf16.msra.mxu0 0
  %2015 = vmatprep.subr.bf16.mxu0 0
  %2016 = vmatpush1.bf16.msra.mxu0 0
  %2017 = vmatprep.subr.bf16.mxu0 0
  %2018 = vmatpush1.bf16.msra.mxu0 0
  %2019 = vmatprep.subr.bf16.mxu0 0
  %2020 = vmatpush1.bf16.msra.mxu0 0
  %2021 = vmatprep.subr.bf16.mxu0 0
  %2022 = vmatpush1.bf16.msra.mxu0 0
  %2023 = vmatprep.subr.bf16.mxu0 0
  %2024 = vmatpush1.bf16.msra.mxu0 0
  %2025 = vmatprep.subr.bf16.mxu0 0
  %2026 = vmatpush1.bf16.msra.mxu0 %v2007
  %2027 = vmatprep.subr.bf16.mxu0 0
  %2028 = vmatpush1.bf16.msra.mxu0 %v2006
  %2029 = vmatprep.subr.bf16.mxu0 0
  %2030 = vmatpush2.bf16.msra.mxu0 0
  %2031 = vmatprep.subr.bf16.mxu0 0
  %2032 = vmatpush2.bf16.msra.mxu0 0
  %2033 = vmatprep.subr.bf16.mxu0 0
  %2034 = vmatpush2.bf16.msra.mxu0 0
  %2035 = vmatprep.subr.bf16.mxu0 0
  %2036 = vmatpush2.bf16.msra.mxu0 0
  %2037 = vmatprep.subr.bf16.mxu0 0
  %2038 = vmatpush2.bf16.msra.mxu0 0
  %2039 = vmatprep.subr.bf16.mxu0 0
  %2040 = vmatpush2.bf16.msra.mxu0 0
  %2041 = vmatprep.subr.bf16.mxu0 0
  %2042 = vmatpush2.bf16.msra.mxu0 0
  %2043 = vmatprep.subr.bf16.mxu0 0
  %2044 = vmatpush2.bf16.msra.mxu0 0
  %2045 = vmatprep.mubr.bf16.mxu0 0
  %2046 = vmatmul.mubr.bf16.gmra.mxu0 %v2011
  %v2047 = vpop.f32.mrf.mxu0
  %v2048 = vadd.f32 %v1972, %v2047
  %v2049 = vpop.f32.mrf.mxu0
  %v2050 = vpop.f32.mrf.mxu0
  %v2051 = vpop.f32.mrf.mxu0
  %2052 = vdwg.mxu0
  %v2053 = vrot.slane %v141, 4
  %v2054 = vrot.slane %v142, 3
  %v2055 = vsel %vm995, %v2054, %v2053
  %v2056 = vrot.slane %v143, 2
  %v2057 = vsel %vm998, %v2056, %v2055
  %v2058 = vrot.slane %v144, 1
  %v2059 = vsel %vm1001, %v2058, %v2057
  %v2060 = vsel %vm1305, %v145, %v2059
  %v2061 = vrot.slane %v146, 7
  %v2062 = vsel %vm985, %v2061, %v2060
  %v2063 = vrot.slane %v147, 6
  %v2064 = vsel %vm988, %v2063, %v2062
  %v2065 = vrot.slane %v148, 5
  %v2066 = vsel %vm991, %v2065, %v2064
  %v2068 = vadd.f32 %v2048, %v2066
  %v2069 = vld [vmem:[%s47] sm:$0x1]
  %v2070 = vld [vmem:[%s49] sm:$0x1]
  %v2071 = vsel %vm157, %v2068, 0.0
  %2072 = vadd.xlane.f32.xlu0 %v2071
  %v2073 = vpop.xlane.xlu0 %2072
  %v2074 = vmul.f32 %v2073, %v182
  %v2075 = vsub.f32 %v2068, %v2074
  %v2076 = vmul.f32 %v2075, %v2075
  %v2077 = vsel %vm157, %v2076, 0.0
  %2078 = vadd.xlane.f32.xlu0 %v2077
  %v2079 = vpop.xlane.xlu0 %2078
  %v2080 = vmul.f32 %v2079, %v182
  %v2081 = vadd.f32 %v2080, 1e-05
  %v2082 = vrsqrt.pop %v2081
  %v2083 = vmul.f32 %v2075, %v2082
  %v2085 = vlaneseq
  %v2086 = vshrl.u32 %v2085, 7
  %v2087 = vsub.s32 0, %v2086
  %v2088 = vrot.slane %v2069, %v2087
  %v2090 = vmul.f32 %v2083, %v2088
  %v2092 = vlaneseq
  %v2093 = vshrl.u32 %v2092, 7
  %v2094 = vsub.s32 0, %v2093
  %v2095 = vrot.slane %v2070, %v2094
  %v2097 = vadd.f32 %v2090, %v2095
  %v2098 = vpack.c.bf16 %v2097, %v2097
  %v2099 = vld [vmem:[%s51] sm:$0xf]
  %v2100 = vld [vmem:[%s51 + $0x4] sm:$0xf]
  %v2101 = vld [vmem:[%s51 + $0x8] sm:$0xf]
  %v2102 = vld [vmem:[%s51 + $0xc] sm:$0xf]
  %v2103 = vld [vmem:[%s53] sm:$0x1]
  %v2105 = vlaneseq
  %v2106 = vshrl.u32 %v2105, 7
  %v2107 = vsub.s32 0, %v2106
  %v2108 = vrot.slane %v2103, %v2107
  %v2114 = vunpack.c.l.b16 %v2099
  %v2115 = vunpack.c.l.b16 %v2100
  %v2116 = vunpack.c.l.b16 %v2101
  %v2117 = vunpack.c.l.b16 %v2102
  %v2118 = vpack.c.b16 %v2115, %v2114
  %v2119 = vpack.c.b16 %v2117, %v2116
  %v2123 = vsel %vm157, %v2098, 0
  %2125 = vmatprep.subr.bf16.mxu0 0
  %2126 = vmatpush1.bf16.msra.mxu0 0
  %2127 = vmatprep.subr.bf16.mxu0 0
  %2128 = vmatpush1.bf16.msra.mxu0 0
  %2129 = vmatprep.subr.bf16.mxu0 0
  %2130 = vmatpush1.bf16.msra.mxu0 0
  %2131 = vmatprep.subr.bf16.mxu0 0
  %2132 = vmatpush1.bf16.msra.mxu0 0
  %2133 = vmatprep.subr.bf16.mxu0 0
  %2134 = vmatpush1.bf16.msra.mxu0 0
  %2135 = vmatprep.subr.bf16.mxu0 0
  %2136 = vmatpush1.bf16.msra.mxu0 0
  %2137 = vmatprep.subr.bf16.mxu0 0
  %2138 = vmatpush1.bf16.msra.mxu0 %v2119
  %2139 = vmatprep.subr.bf16.mxu0 0
  %2140 = vmatpush1.bf16.msra.mxu0 %v2118
  %2141 = vmatprep.subr.bf16.mxu0 0
  %2142 = vmatpush2.bf16.msra.mxu0 0
  %2143 = vmatprep.subr.bf16.mxu0 0
  %2144 = vmatpush2.bf16.msra.mxu0 0
  %2145 = vmatprep.subr.bf16.mxu0 0
  %2146 = vmatpush2.bf16.msra.mxu0 0
  %2147 = vmatprep.subr.bf16.mxu0 0
  %2148 = vmatpush2.bf16.msra.mxu0 0
  %2149 = vmatprep.subr.bf16.mxu0 0
  %2150 = vmatpush2.bf16.msra.mxu0 0
  %2151 = vmatprep.subr.bf16.mxu0 0
  %2152 = vmatpush2.bf16.msra.mxu0 0
  %2153 = vmatprep.subr.bf16.mxu0 0
  %2154 = vmatpush2.bf16.msra.mxu0 0
  %2155 = vmatprep.subr.bf16.mxu0 0
  %2156 = vmatpush2.bf16.msra.mxu0 0
  %2157 = vmatprep.mubr.bf16.mxu0 0
  %2158 = vmatmul.mubr.bf16.gmra.mxu0 %v2123
  %v2159 = vpop.f32.mrf.mxu0
  %v2160 = vadd.f32 %v2108, %v2159
  %v2161 = vpop.f32.mrf.mxu0
  %v2162 = vpop.f32.mrf.mxu0
  %v2163 = vpop.f32.mrf.mxu0
  %2164 = vdwg.mxu0
  %v2165 = vmul.f32 %v2160, 0.5
  %v2166 = vmul.f32 %v2160, 0.70710677
  %vm2167 = vcmp.ge.f32.partialorder %v2166, 0.0
  %v2168 = vsel %vm2167, 1.0, -1.0
  %v2169 = vand.u32 2147483647, %v2166
  %v2170 = vmul.f32 %v2169, 0.3275911
  %v2171 = vadd.f32 %v2170, 1.0
  %v2172 = vrcp.pop %v2171
  %v2173 = vmul.f32 1.0, %v2172
  %v2174 = vmul.f32 %v2173, 1.0614054
  %v2175 = vadd.f32 %v2174, -1.4531521
  %v2176 = vmul.f32 %v2175, %v2173
  %v2177 = vadd.f32 %v2176, 1.4214138
  %v2178 = vmul.f32 %v2177, %v2173
  %v2179 = vadd.f32 %v2178, -0.28449672
  %v2180 = vmul.f32 %v2179, %v2173
  %v2181 = vadd.f32 %v2180, 0.2548296
  %v2182 = vmul.f32 %v2181, %v2173
  %v2183 = vsub.f32 0.0, %v2169
  %v2184 = vmul.f32 %v2183, %v2169
  %v2185 = vmul.f32 %v2184, 1.442695
  %v2186 = vpow.pop %v2185
  %v2187 = vmul.f32 %v2182, %v2186
  %v2188 = vsub.f32 1.0, %v2187
  %v2189 = vmul.f32 %v2168, %v2188
  %v2190 = vadd.f32 %v2189, 1.0
  %v2191 = vmul.f32 %v2165, %v2190
  %v2192 = vpack.c.bf16 %v2191, %v2191
  %v2193 = vld [vmem:[%s55] sm:$0xf]
  %v2194 = vld [vmem:[%s55 + $0x4] sm:$0xf]
  %v2195 = vld [vmem:[%s55 + $0x8] sm:$0xf]
  %v2196 = vld [vmem:[%s55 + $0xc] sm:$0xf]
  %v2197 = vld [vmem:[%s55 + $0x10] sm:$0xf]
  %v2198 = vld [vmem:[%s55 + $0x14] sm:$0xf]
  %v2199 = vld [vmem:[%s55 + $0x18] sm:$0xf]
  %v2200 = vld [vmem:[%s55 + $0x1c] sm:$0xf]
  %v2201 = vld [vmem:[%s55 + $0x20] sm:$0xf]
  %v2202 = vld [vmem:[%s55 + $0x24] sm:$0xf]
  %v2203 = vld [vmem:[%s55 + $0x28] sm:$0xf]
  %v2204 = vld [vmem:[%s55 + $0x2c] sm:$0xf]
  %v2205 = vld [vmem:[%s55 + $0x30] sm:$0xf]
  %v2206 = vld [vmem:[%s55 + $0x34] sm:$0xf]
  %v2207 = vld [vmem:[%s55 + $0x38] sm:$0xf]
  %v2208 = vld [vmem:[%s55 + $0x3c] sm:$0xf]
  %v2209 = vld [vmem:[%s57] sm:$0x1]
  %v2211 = vlaneseq
  %v2212 = vshrl.u32 %v2211, 7
  %v2213 = vsub.s32 0, %v2212
  %v2214 = vrot.slane %v2209, %v2213
  %v2232 = vunpack.c.l.b16 %v2193
  %v2233 = vunpack.c.l.b16 %v2194
  %v2234 = vunpack.c.l.b16 %v2195
  %v2235 = vunpack.c.l.b16 %v2196
  %v2236 = vunpack.c.l.b16 %v2197
  %v2237 = vunpack.c.l.b16 %v2198
  %v2238 = vunpack.c.l.b16 %v2199
  %v2239 = vunpack.c.l.b16 %v2200
  %v2240 = vunpack.c.l.b16 %v2201
  %v2241 = vunpack.c.l.b16 %v2202
  %v2242 = vunpack.c.l.b16 %v2203
  %v2243 = vunpack.c.l.b16 %v2204
  %v2244 = vunpack.c.l.b16 %v2205
  %v2245 = vunpack.c.l.b16 %v2206
  %v2246 = vunpack.c.l.b16 %v2207
  %v2247 = vunpack.c.l.b16 %v2208
  %v2248 = vpack.c.b16 %v2233, %v2232
  %v2249 = vpack.c.b16 %v2235, %v2234
  %v2250 = vpack.c.b16 %v2237, %v2236
  %v2251 = vpack.c.b16 %v2239, %v2238
  %v2252 = vpack.c.b16 %v2241, %v2240
  %v2253 = vpack.c.b16 %v2243, %v2242
  %v2254 = vpack.c.b16 %v2245, %v2244
  %v2255 = vpack.c.b16 %v2247, %v2246
  %2264 = vmatprep.subr.bf16.mxu0 0
  %2265 = vmatpush1.bf16.msra.mxu0 %v2255
  %2266 = vmatprep.subr.bf16.mxu0 0
  %2267 = vmatpush1.bf16.msra.mxu0 %v2254
  %2268 = vmatprep.subr.bf16.mxu0 0
  %2269 = vmatpush1.bf16.msra.mxu0 %v2253
  %2270 = vmatprep.subr.bf16.mxu0 0
  %2271 = vmatpush1.bf16.msra.mxu0 %v2252
  %2272 = vmatprep.subr.bf16.mxu0 0
  %2273 = vmatpush1.bf16.msra.mxu0 %v2251
  %2274 = vmatprep.subr.bf16.mxu0 0
  %2275 = vmatpush1.bf16.msra.mxu0 %v2250
  %2276 = vmatprep.subr.bf16.mxu0 0
  %2277 = vmatpush1.bf16.msra.mxu0 %v2249
  %2278 = vmatprep.subr.bf16.mxu0 0
  %2279 = vmatpush1.bf16.msra.mxu0 %v2248
  %2280 = vmatprep.subr.bf16.mxu0 0
  %2281 = vmatpush2.bf16.msra.mxu0 0
  %2282 = vmatprep.subr.bf16.mxu0 0
  %2283 = vmatpush2.bf16.msra.mxu0 0
  %2284 = vmatprep.subr.bf16.mxu0 0
  %2285 = vmatpush2.bf16.msra.mxu0 0
  %2286 = vmatprep.subr.bf16.mxu0 0
  %2287 = vmatpush2.bf16.msra.mxu0 0
  %2288 = vmatprep.subr.bf16.mxu0 0
  %2289 = vmatpush2.bf16.msra.mxu0 0
  %2290 = vmatprep.subr.bf16.mxu0 0
  %2291 = vmatpush2.bf16.msra.mxu0 0
  %2292 = vmatprep.subr.bf16.mxu0 0
  %2293 = vmatpush2.bf16.msra.mxu0 0
  %2294 = vmatprep.subr.bf16.mxu0 0
  %2295 = vmatpush2.bf16.msra.mxu0 0
  %2296 = vmatprep.mubr.bf16.mxu0 0
  %2297 = vmatmul.mubr.bf16.gmra.mxu0 %v2192
  %v2298 = vpop.f32.mrf.mxu0
  %v2299 = vadd.f32 %v2214, %v2298
  %v2300 = vpop.f32.mrf.mxu0
  %v2301 = vpop.f32.mrf.mxu0
  %v2302 = vpop.f32.mrf.mxu0
  %2303 = vdwg.mxu0
  %v2304 = vadd.f32 %v2299, %v2068
  %2305 = vst.msk [vmem:[%s59] sm:$0xff] %vm157, %v2304
  // Predicated region
  $region118: #{_forward.1} parent=0 // pred_check
    _
  $region119: #{_forward.1} parent=0 // pred_check_branch
    %2307 = sbr.rel (0) target = $region121
  $region120: #{_forward.1} parent=0 // pred_region
    _
  $region121: #{_forward.1} parent=0 // pred_fallthru
    _
  // Predicated region
  $region122: #{_forward.1} parent=0 // pred_check
    _
  $region123: #{_forward.1} parent=0 // pred_check_branch
    %2309 = sbr.rel (0) target = $region125
  $region124: #{_forward.1} parent=0 // pred_region
    _
  $region125: #{_forward.1} parent=0 // pred_fallthru
    _

// kernel: _forward.1
$region0: #{_forward.1}
  #allocation0 [shape = 'u32[]', space=smem, size = 0x4, offset = 0x4, fixed_abs, tag = 'smem constant byte address 0x4 - core index']
  #allocation1 [shape = 'u32[144,128]{1,0:T(1,128)}', space=vmem, size = 0x12000, scoped, tag = 'internal scratch']
  %s0 = inlined_call_operand.smem [shape: u32[30], index: -1, kind: input, shape index: {}]
  %s1 = sld [smem:[%s0]]
  %s2 = scalar_lea.smem %s0, 1
  %s3 = sld [smem:[%s2]]
  %s4 = scalar_lea.smem %s0, 2
  %s5 = sld [smem:[%s4]]
  %s6 = scalar_lea.smem %s0, 3
  %s7 = sld [smem:[%s6]]
  %s8 = scalar_lea.smem %s0, 4
  %s9 = sld [smem:[%s8]]
  %s10 = scalar_lea.smem %s0, 5
  %s11 = sld [smem:[%s10]]
  %s12 = scalar_lea.smem %s0, 6
  %s13 = sld [smem:[%s12]]
  %s14 = scalar_lea.smem %s0, 7
  %s15 = sld [smem:[%s14]]
  %s16 = scalar_lea.smem %s0, 8
  %s17 = sld [smem:[%s16]]
  %s18 = scalar_lea.smem %s0, 9
  %s19 = sld [smem:[%s18]]
  %s20 = scalar_lea.smem %s0, 10
  %s21 = sld [smem:[%s20]]
  %s22 = scalar_lea.smem %s0, 11
  %s23 = sld [smem:[%s22]]
  %s24 = scalar_lea.smem %s0, 12
  %s25 = sld [smem:[%s24]]
  %s26 = scalar_lea.smem %s0, 13
  %s27 = sld [smem:[%s26]]
  %s28 = scalar_lea.smem %s0, 14
  %s29 = sld [smem:[%s28]]
  %s30 = scalar_lea.smem %s0, 15
  %s31 = sld [smem:[%s30]]
  %s32 = scalar_lea.smem %s0, 16
  %s33 = sld [smem:[%s32]]
  %s34 = scalar_lea.smem %s0, 17
  %s35 = sld [smem:[%s34]]
  %s36 = scalar_lea.smem %s0, 18
  %s37 = sld [smem:[%s36]]
  %s38 = scalar_lea.smem %s0, 19
  %s39 = sld [smem:[%s38]]
  %s40 = scalar_lea.smem %s0, 20
  %s41 = sld [smem:[%s40]]
  %s42 = scalar_lea.smem %s0, 21
  %s43 = sld [smem:[%s42]]
  %s44 = scalar_lea.smem %s0, 22
  %s45 = sld [smem:[%s44]]
  %s46 = scalar_lea.smem %s0, 23
  %s47 = sld [smem:[%s46]]
  %s48 = scalar_lea.smem %s0, 24
  %s49 = sld [smem:[%s48]]
  %s50 = scalar_lea.smem %s0, 25
  %s51 = sld [smem:[%s50]]
  %s52 = scalar_lea.smem %s0, 26
  %s53 = sld [smem:[%s52]]
  %s54 = scalar_lea.smem %s0, 27
  %s55 = sld [smem:[%s54]]
  %s56 = scalar_lea.smem %s0, 28
  %s57 = sld [smem:[%s56]]
  %s58 = scalar_lea.smem %s0, 29
  %s59 = sld [smem:[%s58]]
  %s60 = sld [smem:[#allocation0]]
  $region126: #{_forward.1} parent=0
    _
  %s62 = ssub.s32 1, %s60
  %s63 = scalar_select 0, %s62, %s60
  // Predicated region
  $region2: #{_forward.1} parent=0 // pred_check
    _
  $region3: #{_forward.1} parent=0 // pred_check_branch
    %65 = sbr.rel (0) target = $region5
  $region4: #{_forward.1} parent=0 // pred_region
    _
  $region5: #{_forward.1} parent=0 // pred_fallthru
    _
  // Predicated region
  $region6: #{_forward.1} parent=0 // pred_check
    _
  $region7: #{_forward.1} parent=0 // pred_check_branch
    %67 = sbr.rel (0) target = $region9
  $region8: #{_forward.1} parent=0 // pred_region
    _
  $region9: #{_forward.1} parent=0 // pred_fallthru
    _
  // Predicated region
  $region10: #{_forward.1} parent=0 // pred_check
    _
  $region11: #{_forward.1} parent=0 // pred_check_branch
    %69 = sbr.rel (0) target = $region13
  $region12: #{_forward.1} parent=0 // pred_region
    _
  $region13: #{_forward.1} parent=0 // pred_fallthru
    _
  // Predicated region
  $region14: #{_forward.1} parent=0 // pred_check
    _
  $region15: #{_forward.1} parent=0 // pred_check_branch
    %71 = sbr.rel (0) target = $region17
  $region16: #{_forward.1} parent=0 // pred_region
    _
  $region17: #{_forward.1} parent=0 // pred_fallthru
    _
  // Predicated region
  $region18: #{_forward.1} parent=0 // pred_check
    _
  $region19: #{_forward.1} parent=0 // pred_check_branch
    %73 = sbr.rel (0) target = $region21
  $region20: #{_forward.1} parent=0 // pred_region
    _
  $region21: #{_forward.1} parent=0 // pred_fallthru
    _
  // Predicated region
  $region22: #{_forward.1} parent=0 // pred_check
    _
  $region23: #{_forward.1} parent=0 // pred_check_branch
    %75 = sbr.rel (0) target = $region25
  $region24: #{_forward.1} parent=0 // pred_region
    _
  $region25: #{_forward.1} parent=0 // pred_fallthru
    _
  // Predicated region
  $region26: #{_forward.1} parent=0 // pred_check
    _
  $region27: #{_forward.1} parent=0 // pred_check_branch
    %77 = sbr.rel (0) target = $region29
  $region28: #{_forward.1} parent=0 // pred_region
    _
  $region29: #{_forward.1} parent=0 // pred_fallthru
    _
  // Predicated region
  $region30: #{_forward.1} parent=0 // pred_check
    _
  $region31: #{_forward.1} parent=0 // pred_check_branch
    %79 = sbr.rel (0) target = $region33
  $region32: #{_forward.1} parent=0 // pred_region
    _
  $region33: #{_forward.1} parent=0 // pred_fallthru
    _
  // Predicated region
  $region34: #{_forward.1} parent=0 // pred_check
    _
  $region35: #{_forward.1} parent=0 // pred_check_branch
    %81 = sbr.rel (0) target = $region37
  $region36: #{_forward.1} parent=0 // pred_region
    _
  $region37: #{_forward.1} parent=0 // pred_fallthru
    _
  // Predicated region
  $region38: #{_forward.1} parent=0 // pred_check
    _
  $region39: #{_forward.1} parent=0 // pred_check_branch
    %83 = sbr.rel (0) target = $region41
  $region40: #{_forward.1} parent=0 // pred_region
    _
  $region41: #{_forward.1} parent=0 // pred_fallthru
    _
  // Predicated region
  $region42: #{_forward.1} parent=0 // pred_check
    _
  $region43: #{_forward.1} parent=0 // pred_check_branch
    %85 = sbr.rel (0) target = $region45
  $region44: #{_forward.1} parent=0 // pred_region
    _
  $region45: #{_forward.1} parent=0 // pred_fallthru
    _
  // Predicated region
  $region46: #{_forward.1} parent=0 // pred_check
    _
  $region47: #{_forward.1} parent=0 // pred_check_branch
    %87 = sbr.rel (0) target = $region49
  $region48: #{_forward.1} parent=0 // pred_region
    _
  $region49: #{_forward.1} parent=0 // pred_fallthru
    _
  // Predicated region
  $region50: #{_forward.1} parent=0 // pred_check
    _
  $region51: #{_forward.1} parent=0 // pred_check_branch
    %89 = sbr.rel (0) target = $region53
  $region52: #{_forward.1} parent=0 // pred_region
    _
  $region53: #{_forward.1} parent=0 // pred_fallthru
    _
  // Predicated region
  $region54: #{_forward.1} parent=0 // pred_check
    _
  $region55: #{_forward.1} parent=0 // pred_check_branch
    %91 = sbr.rel (0) target = $region57
  $region56: #{_forward.1} parent=0 // pred_region
    _
  $region57: #{_forward.1} parent=0 // pred_fallthru
    _
  // Predicated region
  $region58: #{_forward.1} parent=0 // pred_check
    _
  $region59: #{_forward.1} parent=0 // pred_check_branch
    %93 = sbr.rel (0) target = $region61
  $region60: #{_forward.1} parent=0 // pred_region
    _
  $region61: #{_forward.1} parent=0 // pred_fallthru
    _
  // Predicated region
  $region62: #{_forward.1} parent=0 // pred_check
    _
  $region63: #{_forward.1} parent=0 // pred_check_branch
    %95 = sbr.rel (0) target = $region65
  $region64: #{_forward.1} parent=0 // pred_region
    _
  $region65: #{_forward.1} parent=0 // pred_fallthru
    _
  // Predicated region
  $region66: #{_forward.1} parent=0 // pred_check
    _
  $region67: #{_forward.1} parent=0 // pred_check_branch
    %97 = sbr.rel (0) target = $region69
  $region68: #{_forward.1} parent=0 // pred_region
    _
  $region69: #{_forward.1} parent=0 // pred_fallthru
    _
  // Predicated region
  $region70: #{_forward.1} parent=0 // pred_check
    _
  $region71: #{_forward.1} parent=0 // pred_check_branch
    %99 = sbr.rel (0) target = $region73
  $region72: #{_forward.1} parent=0 // pred_region
    _
  $region73: #{_forward.1} parent=0 // pred_fallthru
    _
  // Predicated region
  $region74: #{_forward.1} parent=0 // pred_check
    _
  $region75: #{_forward.1} parent=0 // pred_check_branch
    %101 = sbr.rel (0) target = $region77
  $region76: #{_forward.1} parent=0 // pred_region
    _
  $region77: #{_forward.1} parent=0 // pred_fallthru
    _
  // Predicated region
  $region78: #{_forward.1} parent=0 // pred_check
    _
  $region79: #{_forward.1} parent=0 // pred_check_branch
    %103 = sbr.rel (0) target = $region81
  $region80: #{_forward.1} parent=0 // pred_region
    _
  $region81: #{_forward.1} parent=0 // pred_fallthru
    _
  // Predicated region
  $region82: #{_forward.1} parent=0 // pred_check
    _
  $region83: #{_forward.1} parent=0 // pred_check_branch
    %105 = sbr.rel (0) target = $region85
  $region84: #{_forward.1} parent=0 // pred_region
    _
  $region85: #{_forward.1} parent=0 // pred_fallthru
    _
  // Predicated region
  $region86: #{_forward.1} parent=0 // pred_check
    _
  $region87: #{_forward.1} parent=0 // pred_check_branch
    %107 = sbr.rel (0) target = $region89
  $region88: #{_forward.1} parent=0 // pred_region
    _
  $region89: #{_forward.1} parent=0 // pred_fallthru
    _
  // Predicated region
  $region90: #{_forward.1} parent=0 // pred_check
    _
  $region91: #{_forward.1} parent=0 // pred_check_branch
    %109 = sbr.rel (0) target = $region93
  $region92: #{_forward.1} parent=0 // pred_region
    _
  $region93: #{_forward.1} parent=0 // pred_fallthru
    _
  // Predicated region
  $region94: #{_forward.1} parent=0 // pred_check
    _
  $region95: #{_forward.1} parent=0 // pred_check_branch
    %111 = sbr.rel (0) target = $region97
  $region96: #{_forward.1} parent=0 // pred_region
    _
  $region97: #{_forward.1} parent=0 // pred_fallthru
    _
  // Predicated region
  $region98: #{_forward.1} parent=0 // pred_check
    _
  $region99: #{_forward.1} parent=0 // pred_check_branch
    %113 = sbr.rel (0) target = $region101
  $region100: #{_forward.1} parent=0 // pred_region
    _
  $region101: #{_forward.1} parent=0 // pred_fallthru
    _
  // Predicated region
  $region102: #{_forward.1} parent=0 // pred_check
    _
  $region103: #{_forward.1} parent=0 // pred_check_branch
    %115 = sbr.rel (0) target = $region105
  $region104: #{_forward.1} parent=0 // pred_region
    _
  $region105: #{_forward.1} parent=0 // pred_fallthru
    _
  // Predicated region
  $region106: #{_forward.1} parent=0 // pred_check
    _
  $region107: #{_forward.1} parent=0 // pred_check_branch
    %117 = sbr.rel (0) target = $region109
  $region108: #{_forward.1} parent=0 // pred_region
    _
  $region109: #{_forward.1} parent=0 // pred_fallthru
    _
  // Predicated region
  $region110: #{_forward.1} parent=0 // pred_check
    _
  $region111: #{_forward.1} parent=0 // pred_check_branch
    %119 = sbr.rel (0) target = $region113
  $region112: #{_forward.1} parent=0 // pred_region
    _
  $region113: #{_forward.1} parent=0 // pred_fallthru
    _
  // Predicated region
  $region114: #{_forward.1} parent=0 // pred_check
    _
  $region115: #{_forward.1} parent=0 // pred_check_branch
    %121 = sbr.rel (0) target = $region117
  $region116: #{_forward.1} parent=0 // pred_region
    _
  $region117: #{_forward.1} parent=0 // pred_fallthru
    _
  %v123 = vld [vmem:[%s5] sm:$0x1]
  %v124 = vld [vmem:[%s7] sm:$0x1]
  %v125 = vld [vmem:[%s9] sm:$0x1]
  %v126 = vld [vmem:[%s9 + $0x1] sm:$0x1]
  %v127 = vld [vmem:[%s11] sm:$0x1]
  %v128 = vld [vmem:[%s13] sm:$0x1]
  %v129 = vld [vmem:[%s15] sm:$0x1]
  %v130 = vld [vmem:[%s17] sm:$0xf]
  %v131 = vld [vmem:[%s17 + $0x4] sm:$0xf]
  %v132 = vld [vmem:[%s19] sm:$0x1]
  %v133 = vld [vmem:[%s21] sm:$0x1]
  %v134 = vld [vmem:[%s23] sm:$0x1]
  %v135 = vld [vmem:[%s43] sm:$0xf]
  %v136 = vld [vmem:[%s43 + $0x4] sm:$0xf]
  %v137 = vld [vmem:[%s43 + $0x8] sm:$0xf]
  %v138 = vld [vmem:[%s43 + $0xc] sm:$0xf]
  %v139 = vld [vmem:[%s45] sm:$0x3]
  %v140 = vld [vmem:[%s41] sm:$0xff]
  %v141 = vld [vmem:[%s1] sm:$0xff]
  %v142 = vld [vmem:[%s1 + $0x8] sm:$0xff]
  %v143 = vld [vmem:[%s1 + $0x10] sm:$0xff]
  %v144 = vld [vmem:[%s1 + $0x18] sm:$0xff]
  %v145 = vld [vmem:[%s1 + $0x20] sm:$0xff]
  %v146 = vld [vmem:[%s1 + $0x28] sm:$0xff]
  %v147 = vld [vmem:[%s1 + $0x30] sm:$0xff]
  %v148 = vld [vmem:[%s1 + $0x38] sm:$0xff]
  %v149 = vld [vmem:[%s3] sm:$0xff]
  %v150 = vld [vmem:[%s3 + $0x8] sm:$0xff]
  %v151 = vld [vmem:[%s3 + $0x10] sm:$0xff]
  %v152 = vld [vmem:[%s3 + $0x18] sm:$0xff]
  %v153 = vld [vmem:[%s3 + $0x20] sm:$0xff]
  %v154 = vld [vmem:[%s3 + $0x28] sm:$0xff]
  %v155 = vld [vmem:[%s3 + $0x30] sm:$0xff]
  %v156 = vld [vmem:[%s3 + $0x38] sm:$0xff]
  %vm157 = vcmask 261120
  %v158 = vsel %vm157, %v141, 0.0
  %159 = vadd.xlane.f32.xlu0 %v158
  %v160 = vpop.xlane.xlu0 %159
  %v161 = vsel %vm157, %v142, 0.0
  %162 = vadd.xlane.f32.xlu0 %v161
  %v163 = vpop.xlane.xlu0 %162
  %v164 = vsel %vm157, %v143, 0.0
  %165 = vadd.xlane.f32.xlu0 %v164
  %v166 = vpop.xlane.xlu0 %165
  %v167 = vsel %vm157, %v144, 0.0
  %168 = vadd.xlane.f32.xlu0 %v167
  %v169 = vpop.xlane.xlu0 %168
  %v170 = vsel %vm157, %v145, 0.0
  %171 = vadd.xlane.f32.xlu0 %v170
  %v172 = vpop.xlane.xlu0 %171
  %v173 = vsel %vm157, %v146, 0.0
  %174 = vadd.xlane.f32.xlu0 %v173
  %v175 = vpop.xlane.xlu0 %174
  %v176 = vsel %vm157, %v147, 0.0
  %177 = vadd.xlane.f32.xlu0 %v176
  %v178 = vpop.xlane.xlu0 %177
  %v179 = vsel %vm157, %v148, 0.0
  %180 = vadd.xlane.f32.xlu0 %v179
  %v181 = vpop.xlane.xlu0 %180
  %v182 = vrcp.pop 32.0
  %v183 = vmul.f32 %v160, %v182
  %v184 = vmul.f32 %v163, %v182
  %v185 = vmul.f32 %v166, %v182
  %v186 = vmul.f32 %v169, %v182
  %v187 = vmul.f32 %v172, %v182
  %v188 = vmul.f32 %v175, %v182
  %v189 = vmul.f32 %v178, %v182
  %v190 = vmul.f32 %v181, %v182
  %v191 = vsub.f32 %v141, %v183
  %v192 = vsub.f32 %v142, %v184
  %v193 = vsub.f32 %v143, %v185
  %v194 = vsub.f32 %v144, %v186
  %v195 = vsub.f32 %v145, %v187
  %v196 = vsub.f32 %v146, %v188
  %v197 = vsub.f32 %v147, %v189
  %v198 = vsub.f32 %v148, %v190
  %v199 = vmul.f32 %v191, %v191
  %v200 = vmul.f32 %v192, %v192
  %v201 = vmul.f32 %v193, %v193
  %v202 = vmul.f32 %v194, %v194
  %v203 = vmul.f32 %v195, %v195
  %v204 = vmul.f32 %v196, %v196
  %v205 = vmul.f32 %v197, %v197
  %v206 = vmul.f32 %v198, %v198
  %v207 = vsel %vm157, %v199, 0.0
  %208 = vadd.xlane.f32.xlu0 %v207
  %v209 = vpop.xlane.xlu0 %208
  %v210 = vsel %vm157, %v200, 0.0
  %211 = vadd.xlane.f32.xlu0 %v210
  %v212 = vpop.xlane.xlu0 %211
  %v213 = vsel %vm157, %v201, 0.0
  %214 = vadd.xlane.f32.xlu0 %v213
  %v215 = vpop.xlane.xlu0 %214
  %v216 = vsel %vm157, %v202, 0.0
  %217 = vadd.xlane.f32.xlu0 %v216
  %v218 = vpop.xlane.xlu0 %217
  %v219 = vsel %vm157, %v203, 0.0
  %220 = vadd.xlane.f32.xlu0 %v219
  %v221 = vpop.xlane.xlu0 %220
  %v222 = vsel %vm157, %v204, 0.0
  %223 = vadd.xlane.f32.xlu0 %v222
  %v224 = vpop.xlane.xlu0 %223
  %v225 = vsel %vm157, %v205, 0.0
  %226 = vadd.xlane.f32.xlu0 %v225
  %v227 = vpop.xlane.xlu0 %226
  %v228 = vsel %vm157, %v206, 0.0
  %229 = vadd.xlane.f32.xlu0 %v228
  %v230 = vpop.xlane.xlu0 %229
  %v231 = vmul.f32 %v209, %v182
  %v232 = vmul.f32 %v212, %v182
  %v233 = vmul.f32 %v215, %v182
  %v234 = vmul.f32 %v218, %v182
  %v235 = vmul.f32 %v221, %v182
  %v236 = vmul.f32 %v224, %v182
  %v237 = vmul.f32 %v227, %v182
  %v238 = vmul.f32 %v230, %v182
  %v239 = vadd.f32 %v231, 1e-05
  %v240 = vadd.f32 %v232, 1e-05
  %v241 = vadd.f32 %v233, 1e-05
  %v242 = vadd.f32 %v234, 1e-05
  %v243 = vadd.f32 %v235, 1e-05
  %v244 = vadd.f32 %v236, 1e-05
  %v245 = vadd.f32 %v237, 1e-05
  %v246 = vadd.f32 %v238, 1e-05
  %v247 = vrsqrt.pop %v239
  %v248 = vrsqrt.pop %v240
  %v249 = vrsqrt.pop %v241
  %v250 = vrsqrt.pop %v242
  %v251 = vrsqrt.pop %v243
  %v252 = vrsqrt.pop %v244
  %v253 = vrsqrt.pop %v245
  %v254 = vrsqrt.pop %v246
  %v255 = vmul.f32 %v191, %v247
  %v256 = vmul.f32 %v192, %v248
  %v257 = vmul.f32 %v193, %v249
  %v258 = vmul.f32 %v194, %v250
  %v259 = vmul.f32 %v195, %v251
  %v260 = vmul.f32 %v196, %v252
  %v261 = vmul.f32 %v197, %v253
  %v262 = vmul.f32 %v198, %v254
  %v264 = vlaneseq
  %v265 = vshrl.u32 %v264, 7
  %v266 = vsub.s32 0, %v265
  %v267 = vrot.slane %v123, %v266
  %v269 = vmul.f32 %v255, %v267
  %v270 = vmul.f32 %v256, %v267
  %v271 = vmul.f32 %v257, %v267
  %v272 = vmul.f32 %v258, %v267
  %v273 = vmul.f32 %v259, %v267
  %v274 = vmul.f32 %v260, %v267
  %v275 = vmul.f32 %v261, %v267
  %v276 = vmul.f32 %v262, %v267
  %v278 = vlaneseq
  %v279 = vshrl.u32 %v278, 7
  %v280 = vsub.s32 0, %v279
  %v281 = vrot.slane %v124, %v280
  %v283 = vadd.f32 %v269, %v281
  %v284 = vadd.f32 %v270, %v281
  %v285 = vadd.f32 %v271, %v281
  %v286 = vadd.f32 %v272, %v281
  %v287 = vadd.f32 %v273, %v281
  %v288 = vadd.f32 %v274, %v281
  %v289 = vadd.f32 %v275, %v281
  %v290 = vadd.f32 %v276, %v281
  %292 = vset.pattern.permute.xlu0 0
  %293 = vperm.xlu0 %292, %v149
  %v294 = vpop.permute.xlu0 %293
  %297 = vset.pattern.permute.xlu0 0
  %298 = vperm.xlu0 %297, %v150
  %v299 = vpop.permute.xlu0 %298
  %302 = vset.pattern.permute.xlu0 0
  %303 = vperm.xlu0 %302, %v151
  %v304 = vpop.permute.xlu0 %303
  %307 = vset.pattern.permute.xlu0 0
  %308 = vperm.xlu0 %307, %v152
  %v309 = vpop.permute.xlu0 %308
  %312 = vset.pattern.permute.xlu0 0
  %313 = vperm.xlu0 %312, %v153
  %v314 = vpop.permute.xlu0 %313
  %317 = vset.pattern.permute.xlu0 0
  %318 = vperm.xlu0 %317, %v154
  %v319 = vpop.permute.xlu0 %318
  %322 = vset.pattern.permute.xlu0 0
  %323 = vperm.xlu0 %322, %v155
  %v324 = vpop.permute.xlu0 %323
  %327 = vset.pattern.permute.xlu0 0
  %328 = vperm.xlu0 %327, %v156
  %v329 = vpop.permute.xlu0 %328
  %v331 = vlaneseq
  %v332 = vshrl.u32 %v331, 7
  %v333 = vsub.s32 0, %v332
  %v334 = vrot.slane %v125, %v333
  %v335 = vmul.f32 %v294, %v334
  %v336 = vmul.f32 %v299, %v334
  %v337 = vmul.f32 %v304, %v334
  %v338 = vmul.f32 %v309, %v334
  %v339 = vmul.f32 %v314, %v334
  %v340 = vmul.f32 %v319, %v334
  %v341 = vmul.f32 %v324, %v334
  %v342 = vmul.f32 %v329, %v334
  %343 = vset.pattern.permute.xlu0 1
  %344 = vperm.xlu0 %343, %v149
  %v345 = vpop.permute.xlu0 %344
  %347 = vset.pattern.permute.xlu0 1
  %348 = vperm.xlu0 %347, %v150
  %v349 = vpop.permute.xlu0 %348
  %351 = vset.pattern.permute.xlu0 1
  %352 = vperm.xlu0 %351, %v151
  %v353 = vpop.permute.xlu0 %352
  %355 = vset.pattern.permute.xlu0 1
  %356 = vperm.xlu0 %355, %v152
  %v357 = vpop.permute.xlu0 %356
  %359 = vset.pattern.permute.xlu0 1
  %360 = vperm.xlu0 %359, %v153
  %v361 = vpop.permute.xlu0 %360
  %363 = vset.pattern.permute.xlu0 1
  %364 = vperm.xlu0 %363, %v154
  %v365 = vpop.permute.xlu0 %364
  %367 = vset.pattern.permute.xlu0 1
  %368 = vperm.xlu0 %367, %v155
  %v369 = vpop.permute.xlu0 %368
  %371 = vset.pattern.permute.xlu0 1
  %372 = vperm.xlu0 %371, %v156
  %v373 = vpop.permute.xlu0 %372
  %v375 = vlaneseq
  %v376 = vshrl.u32 %v375, 7
  %v377 = vsub.s32 0, %v376
  %v378 = vrot.slane %v126, %v377
  %v379 = vmul.f32 %v345, %v378
  %v380 = vmul.f32 %v349, %v378
  %v381 = vmul.f32 %v353, %v378
  %v382 = vmul.f32 %v357, %v378
  %v383 = vmul.f32 %v361, %v378
  %v384 = vmul.f32 %v365, %v378
  %v385 = vmul.f32 %v369, %v378
  %v386 = vmul.f32 %v373, %v378
  %v387 = vadd.f32 %v335, %v379
  %v388 = vadd.f32 %v336, %v380
  %v389 = vadd.f32 %v337, %v381
  %v390 = vadd.f32 %v338, %v382
  %v391 = vadd.f32 %v339, %v383
  %v392 = vadd.f32 %v340, %v384
  %v393 = vadd.f32 %v341, %v385
  %v394 = vadd.f32 %v342, %v386
  %v396 = vlaneseq
  %v397 = vshrl.u32 %v396, 7
  %v398 = vsub.s32 0, %v397
  %v399 = vrot.slane %v127, %v398
  %v401 = vadd.f32 %v387, %v399
  %v402 = vadd.f32 %v388, %v399
  %v403 = vadd.f32 %v389, %v399
  %v404 = vadd.f32 %v390, %v399
  %v405 = vadd.f32 %v391, %v399
  %v406 = vadd.f32 %v392, %v399
  %v407 = vadd.f32 %v393, %v399
  %v408 = vadd.f32 %v394, %v399
  %vm409 = vcmask 130048
  %v410 = vsel %vm409, %v401, 0.0
  %411 = vadd.xlane.f32.xlu0 %v410
  %v412 = vpop.xlane.xlu0 %411
  %v413 = vsel %vm409, %v402, 0.0
  %414 = vadd.xlane.f32.xlu0 %v413
  %v415 = vpop.xlane.xlu0 %414
  %v416 = vsel %vm409, %v403, 0.0
  %417 = vadd.xlane.f32.xlu0 %v416
  %v418 = vpop.xlane.xlu0 %417
  %v419 = vsel %vm409, %v404, 0.0
  %420 = vadd.xlane.f32.xlu0 %v419
  %v421 = vpop.xlane.xlu0 %420
  %v422 = vsel %vm409, %v405, 0.0
  %423 = vadd.xlane.f32.xlu0 %v422
  %v424 = vpop.xlane.xlu0 %423
  %v425 = vsel %vm409, %v406, 0.0
  %426 = vadd.xlane.f32.xlu0 %v425
  %v427 = vpop.xlane.xlu0 %426
  %v428 = vsel %vm409, %v407, 0.0
  %429 = vadd.xlane.f32.xlu0 %v428
  %v430 = vpop.xlane.xlu0 %429
  %v431 = vsel %vm409, %v408, 0.0
  %432 = vadd.xlane.f32.xlu0 %v431
  %v433 = vpop.xlane.xlu0 %432
  %v434 = vrcp.pop 16.0
  %v435 = vmul.f32 %v412, %v434
  %v436 = vmul.f32 %v415, %v434
  %v437 = vmul.f32 %v418, %v434
  %v438 = vmul.f32 %v421, %v434
  %v439 = vmul.f32 %v424, %v434
  %v440 = vmul.f32 %v427, %v434
  %v441 = vmul.f32 %v430, %v434
  %v442 = vmul.f32 %v433, %v434
  %v443 = vsub.f32 %v401, %v435
  %v444 = vsub.f32 %v402, %v436
  %v445 = vsub.f32 %v403, %v437
  %v446 = vsub.f32 %v404, %v438
  %v447 = vsub.f32 %v405, %v439
  %v448 = vsub.f32 %v406, %v440
  %v449 = vsub.f32 %v407, %v441
  %v450 = vsub.f32 %v408, %v442
  %v451 = vmul.f32 %v443, %v443
  %v452 = vmul.f32 %v444, %v444
  %v453 = vmul.f32 %v445, %v445
  %v454 = vmul.f32 %v446, %v446
  %v455 = vmul.f32 %v447, %v447
  %v456 = vmul.f32 %v448, %v448
  %v457 = vmul.f32 %v449, %v449
  %v458 = vmul.f32 %v450, %v450
  %v459 = vsel %vm409, %v451, 0.0
  %460 = vadd.xlane.f32.xlu0 %v459
  %v461 = vpop.xlane.xlu0 %460
  %v462 = vsel %vm409, %v452, 0.0
  %463 = vadd.xlane.f32.xlu0 %v462
  %v464 = vpop.xlane.xlu0 %463
  %v465 = vsel %vm409, %v453, 0.0
  %466 = vadd.xlane.f32.xlu0 %v465
  %v467 = vpop.xlane.xlu0 %466
  %v468 = vsel %vm409, %v454, 0.0
  %469 = vadd.xlane.f32.xlu0 %v468
  %v470 = vpop.xlane.xlu0 %469
  %v471 = vsel %vm409, %v455, 0.0
  %472 = vadd.xlane.f32.xlu0 %v471
  %v473 = vpop.xlane.xlu0 %472
  %v474 = vsel %vm409, %v456, 0.0
  %475 = vadd.xlane.f32.xlu0 %v474
  %v476 = vpop.xlane.xlu0 %475
  %v477 = vsel %vm409, %v457, 0.0
  %478 = vadd.xlane.f32.xlu0 %v477
  %v479 = vpop.xlane.xlu0 %478
  %v480 = vsel %vm409, %v458, 0.0
  %481 = vadd.xlane.f32.xlu0 %v480
  %v482 = vpop.xlane.xlu0 %481
  %v483 = vmul.f32 %v461, %v434
  %v484 = vmul.f32 %v464, %v434
  %v485 = vmul.f32 %v467, %v434
  %v486 = vmul.f32 %v470, %v434
  %v487 = vmul.f32 %v473, %v434
  %v488 = vmul.f32 %v476, %v434
  %v489 = vmul.f32 %v479, %v434
  %v490 = vmul.f32 %v482, %v434
  %v491 = vadd.f32 %v483, 1e-05
  %v492 = vadd.f32 %v484, 1e-05
  %v493 = vadd.f32 %v485, 1e-05
  %v494 = vadd.f32 %v486, 1e-05
  %v495 = vadd.f32 %v487, 1e-05
  %v496 = vadd.f32 %v488, 1e-05
  %v497 = vadd.f32 %v489, 1e-05
  %v498 = vadd.f32 %v490, 1e-05
  %v499 = vrsqrt.pop %v491
  %v500 = vrsqrt.pop %v492
  %v501 = vrsqrt.pop %v493
  %v502 = vrsqrt.pop %v494
  %v503 = vrsqrt.pop %v495
  %v504 = vrsqrt.pop %v496
  %v505 = vrsqrt.pop %v497
  %v506 = vrsqrt.pop %v498
  %v507 = vmul.f32 %v443, %v499
  %v508 = vmul.f32 %v444, %v500
  %v509 = vmul.f32 %v445, %v501
  %v510 = vmul.f32 %v446, %v502
  %v511 = vmul.f32 %v447, %v503
  %v512 = vmul.f32 %v448, %v504
  %v513 = vmul.f32 %v449, %v505
  %v514 = vmul.f32 %v450, %v506
  %v516 = vlaneseq
  %v517 = vshrl.u32 %v516, 7
  %v518 = vsub.s32 0, %v517
  %v519 = vrot.slane %v128, %v518
  %v521 = vmul.f32 %v507, %v519
  %v522 = vmul.f32 %v508, %v519
  %v523 = vmul.f32 %v509, %v519
  %v524 = vmul.f32 %v510, %v519
  %v525 = vmul.f32 %v511, %v519
  %v526 = vmul.f32 %v512, %v519
  %v527 = vmul.f32 %v513, %v519
  %v528 = vmul.f32 %v514, %v519
  %v530 = vlaneseq
  %v531 = vshrl.u32 %v530, 7
  %v532 = vsub.s32 0, %v531
  %v533 = vrot.slane %v129, %v532
  %v535 = vadd.f32 %v521, %v533
  %v536 = vadd.f32 %v522, %v533
  %v537 = vadd.f32 %v523, %v533
  %v538 = vadd.f32 %v524, %v533
  %v539 = vadd.f32 %v525, %v533
  %v540 = vadd.f32 %v526, %v533
  %v541 = vadd.f32 %v527, %v533
  %v542 = vadd.f32 %v528, %v533
  %v543 = vtanh.pop %v535
  %v544 = vtanh.pop %v536
  %v545 = vtanh.pop %v537
  %v546 = vtanh.pop %v538
  %v547 = vtanh.pop %v539
  %v548 = vtanh.pop %v540
  %v549 = vtanh.pop %v541
  %v550 = vtanh.pop %v542
  %v551 = vpack.c.bf16 %v544, %v543
  %v552 = vpack.c.bf16 %v546, %v545
  %v553 = vpack.c.bf16 %v548, %v547
  %v554 = vpack.c.bf16 %v550, %v549
  %v556 = vlaneseq
  %v557 = vshrl.u32 %v556, 7
  %v558 = vsub.s32 0, %v557
  %v559 = vrot.slane %v132, %v558
  %v563 = vunpack.c.l.b16 %v130
  %v564 = vunpack.c.l.b16 %v131
  %v565 = vpack.c.b16 %v564, %v563
  %v568 = vsel %vm409, %v551, 0
  %v571 = vsel %vm409, %v552, 0
  %v574 = vsel %vm409, %v553, 0
  %v577 = vsel %vm409, %v554, 0
  %579 = vmatprep.subr.bf16.mxu0 0
  %580 = vmatpush1.bf16.msra.mxu0 0
  %581 = vmatprep.subr.bf16.mxu0 0
  %582 = vmatpush1.bf16.msra.mxu0 0
  %583 = vmatprep.subr.bf16.mxu0 0
  %584 = vmatpush1.bf16.msra.mxu0 0
  %585 = vmatprep.subr.bf16.mxu0 0
  %586 = vmatpush1.bf16.msra.mxu0 0
  %587 = vmatprep.subr.bf16.mxu0 0
  %588 = vmatpush1.bf16.msra.mxu0 0
  %589 = vmatprep.subr.bf16.mxu0 0
  %590 = vmatpush1.bf16.msra.mxu0 0
  %591 = vmatprep.subr.bf16.mxu0 0
  %592 = vmatpush1.bf16.msra.mxu0 0
  %593 = vmatprep.subr.bf16.mxu0 0
  %594 = vmatpush1.bf16.msra.mxu0 %v565
  %595 = vmatprep.subr.bf16.mxu0 0
  %596 = vmatpush2.bf16.msra.mxu0 0
  %597 = vmatprep.subr.bf16.mxu0 0
  %598 = vmatpush2.bf16.msra.mxu0 0
  %599 = vmatprep.subr.bf16.mxu0 0
  %600 = vmatpush2.bf16.msra.mxu0 0
  %601 = vmatprep.subr.bf16.mxu0 0
  %602 = vmatpush2.bf16.msra.mxu0 0
  %603 = vmatprep.subr.bf16.mxu0 0
  %604 = vmatpush2.bf16.msra.mxu0 0
  %605 = vmatprep.subr.bf16.mxu0 0
  %606 = vmatpush2.bf16.msra.mxu0 0
  %607 = vmatprep.subr.bf16.mxu0 0
  %608 = vmatpush2.bf16.msra.mxu0 0
  %609 = vmatprep.subr.bf16.mxu0 0
  %610 = vmatpush2.bf16.msra.mxu0 0
  %611 = vmatprep.mubr.bf16.mxu0 0
  %612 = vmatmul.mubr.bf16.gmra.mxu0 %v568
  %v613 = vpop.f32.mrf.mxu0
  %v614 = vadd.f32 %v559, %v613
  %v615 = vpop.f32.mrf.mxu0
  %v616 = vpop.f32.mrf.mxu0
  %v617 = vadd.f32 %v559, %v616
  %v618 = vpop.f32.mrf.mxu0
  %619 = vmatprep.mubr.bf16.mxu0 0
  %620 = vmatmul.mubr.bf16.gmra.mxu0 %v571
  %v621 = vpop.f32.mrf.mxu0
  %v622 = vadd.f32 %v559, %v621
  %v623 = vpop.f32.mrf.mxu0
  %v624 = vpop.f32.mrf.mxu0
  %v625 = vadd.f32 %v559, %v624
  %v626 = vpop.f32.mrf.mxu0
  %627 = vmatprep.mubr.bf16.mxu0 0
  %628 = vmatmul.mubr.bf16.gmra.mxu0 %v574
  %v629 = vpop.f32.mrf.mxu0
  %v630 = vadd.f32 %v559, %v629
  %v631 = vpop.f32.mrf.mxu0
  %v632 = vpop.f32.mrf.mxu0
  %v633 = vadd.f32 %v559, %v632
  %v634 = vpop.f32.mrf.mxu0
  %635 = vmatprep.mubr.bf16.mxu0 0
  %636 = vmatmul.mubr.bf16.gmra.mxu0 %v577
  %v637 = vpop.f32.mrf.mxu0
  %v638 = vadd.f32 %v559, %v637
  %v639 = vpop.f32.mrf.mxu0
  %v640 = vpop.f32.mrf.mxu0
  %v641 = vadd.f32 %v559, %v640
  %v642 = vpop.f32.mrf.mxu0
  %643 = vdwg.mxu0
  %v644 = vsel %vm157, %v614, 0.0
  %645 = vadd.xlane.f32.xlu0 %v644
  %v646 = vpop.xlane.xlu0 %645
  %v647 = vsel %vm157, %v617, 0.0
  %648 = vadd.xlane.f32.xlu0 %v647
  %v649 = vpop.xlane.xlu0 %648
  %v650 = vsel %vm157, %v622, 0.0
  %651 = vadd.xlane.f32.xlu0 %v650
  %v652 = vpop.xlane.xlu0 %651
  %v653 = vsel %vm157, %v625, 0.0
  %654 = vadd.xlane.f32.xlu0 %v653
  %v655 = vpop.xlane.xlu0 %654
  %v656 = vsel %vm157, %v630, 0.0
  %657 = vadd.xlane.f32.xlu0 %v656
  %v658 = vpop.xlane.xlu0 %657
  %v659 = vsel %vm157, %v633, 0.0
  %660 = vadd.xlane.f32.xlu0 %v659
  %v661 = vpop.xlane.xlu0 %660
  %v662 = vsel %vm157, %v638, 0.0
  %663 = vadd.xlane.f32.xlu0 %v662
  %v664 = vpop.xlane.xlu0 %663
  %v665 = vsel %vm157, %v641, 0.0
  %666 = vadd.xlane.f32.xlu0 %v665
  %v667 = vpop.xlane.xlu0 %666
  %v668 = vmul.f32 %v646, %v182
  %v669 = vmul.f32 %v649, %v182
  %v670 = vmul.f32 %v652, %v182
  %v671 = vmul.f32 %v655, %v182
  %v672 = vmul.f32 %v658, %v182
  %v673 = vmul.f32 %v661, %v182
  %v674 = vmul.f32 %v664, %v182
  %v675 = vmul.f32 %v667, %v182
  %v676 = vsub.f32 %v614, %v668
  %v677 = vsub.f32 %v617, %v669
  %v678 = vsub.f32 %v622, %v670
  %v679 = vsub.f32 %v625, %v671
  %v680 = vsub.f32 %v630, %v672
  %v681 = vsub.f32 %v633, %v673
  %v682 = vsub.f32 %v638, %v674
  %v683 = vsub.f32 %v641, %v675
  %v684 = vmul.f32 %v676, %v676
  %v685 = vmul.f32 %v677, %v677
  %v686 = vmul.f32 %v678, %v678
  %v687 = vmul.f32 %v679, %v679
  %v688 = vmul.f32 %v680, %v680
  %v689 = vmul.f32 %v681, %v681
  %v690 = vmul.f32 %v682, %v682
  %v691 = vmul.f32 %v683, %v683
  %v692 = vsel %vm157, %v684, 0.0
  %693 = vadd.xlane.f32.xlu0 %v692
  %v694 = vpop.xlane.xlu0 %693
  %v695 = vsel %vm157, %v685, 0.0
  %696 = vadd.xlane.f32.xlu0 %v695
  %v697 = vpop.xlane.xlu0 %696
  %v698 = vsel %vm157, %v686, 0.0
  %699 = vadd.xlane.f32.xlu0 %v698
  %v700 = vpop.xlane.xlu0 %699
  %v701 = vsel %vm157, %v687, 0.0
  %702 = vadd.xlane.f32.xlu0 %v701
  %v703 = vpop.xlane.xlu0 %702
  %v704 = vsel %vm157, %v688, 0.0
  %705 = vadd.xlane.f32.xlu0 %v704
  %v706 = vpop.xlane.xlu0 %705
  %v707 = vsel %vm157, %v689, 0.0
  %708 = vadd.xlane.f32.xlu0 %v707
  %v709 = vpop.xlane.xlu0 %708
  %v710 = vsel %vm157, %v690, 0.0
  %711 = vadd.xlane.f32.xlu0 %v710
  %v712 = vpop.xlane.xlu0 %711
  %v713 = vsel %vm157, %v691, 0.0
  %714 = vadd.xlane.f32.xlu0 %v713
  %v715 = vpop.xlane.xlu0 %714
  %v716 = vmul.f32 %v694, %v182
  %v717 = vmul.f32 %v697, %v182
  %v718 = vmul.f32 %v700, %v182
  %v719 = vmul.f32 %v703, %v182
  %v720 = vmul.f32 %v706, %v182
  %v721 = vmul.f32 %v709, %v182
  %v722 = vmul.f32 %v712, %v182
  %v723 = vmul.f32 %v715, %v182
  %v724 = vadd.f32 %v716, 1e-05
  %v725 = vadd.f32 %v717, 1e-05
  %v726 = vadd.f32 %v718, 1e-05
  %v727 = vadd.f32 %v719, 1e-05
  %v728 = vadd.f32 %v720, 1e-05
  %v729 = vadd.f32 %v721, 1e-05
  %v730 = vadd.f32 %v722, 1e-05
  %v731 = vadd.f32 %v723, 1e-05
  %v732 = vrsqrt.pop %v724
  %v733 = vrsqrt.pop %v725
  %v734 = vrsqrt.pop %v726
  %v735 = vrsqrt.pop %v727
  %v736 = vrsqrt.pop %v728
  %v737 = vrsqrt.pop %v729
  %v738 = vrsqrt.pop %v730
  %v739 = vrsqrt.pop %v731
  %v740 = vmul.f32 %v676, %v732
  %v741 = vmul.f32 %v677, %v733
  %v742 = vmul.f32 %v678, %v734
  %v743 = vmul.f32 %v679, %v735
  %v744 = vmul.f32 %v680, %v736
  %v745 = vmul.f32 %v681, %v737
  %v746 = vmul.f32 %v682, %v738
  %v747 = vmul.f32 %v683, %v739
  %v749 = vlaneseq
  %v750 = vshrl.u32 %v749, 7
  %v751 = vsub.s32 0, %v750
  %v752 = vrot.slane %v133, %v751
  %v754 = vmul.f32 %v740, %v752
  %v755 = vmul.f32 %v741, %v752
  %v756 = vmul.f32 %v742, %v752
  %v757 = vmul.f32 %v743, %v752
  %v758 = vmul.f32 %v744, %v752
  %v759 = vmul.f32 %v745, %v752
  %v760 = vmul.f32 %v746, %v752
  %v761 = vmul.f32 %v747, %v752
  %v763 = vlaneseq
  %v764 = vshrl.u32 %v763, 7
  %v765 = vsub.s32 0, %v764
  %v766 = vrot.slane %v134, %v765
  %v768 = vadd.f32 %v754, %v766
  %v769 = vadd.f32 %v755, %v766
  %v770 = vadd.f32 %v756, %v766
  %v771 = vadd.f32 %v757, %v766
  %v772 = vadd.f32 %v758, %v766
  %v773 = vadd.f32 %v759, %v766
  %v774 = vadd.f32 %v760, %v766
  %v775 = vadd.f32 %v761, %v766
  %v776 = vadd.f32 %v283, %v768
  %v777 = vadd.f32 %v284, %v769
  %v778 = vadd.f32 %v285, %v770
  %v779 = vadd.f32 %v286, %v771
  %v780 = vadd.f32 %v287, %v772
  %v781 = vadd.f32 %v288, %v773
  %v782 = vadd.f32 %v289, %v774
  %v783 = vadd.f32 %v290, %v775
  %v784 = vpack.c.bf16 %v777, %v776
  %v785 = vpack.c.bf16 %v779, %v778
  %v786 = vpack.c.bf16 %v781, %v780
  %v787 = vpack.c.bf16 %v783, %v782
  %v788 = vld [vmem:[%s29] sm:$0xf]
  %v789 = vld [vmem:[%s29 + $0x4] sm:$0xf]
  %v790 = vld [vmem:[%s29 + $0x8] sm:$0xf]
  %v791 = vld [vmem:[%s29 + $0xc] sm:$0xf]
  %v792 = vld [vmem:[%s31] sm:$0x1]
  %v794 = vlaneseq
  %v795 = vshrl.u32 %v794, 7
  %v796 = vsub.s32 0, %v795
  %v797 = vrot.slane %v792, %v796
  %v803 = vunpack.c.l.b16 %v788
  %v804 = vunpack.c.l.b16 %v789
  %v805 = vunpack.c.l.b16 %v790
  %v806 = vunpack.c.l.b16 %v791
  %v807 = vpack.c.b16 %v804, %v803
  %v808 = vpack.c.b16 %v806, %v805
  %v812 = vsel %vm157, %v784, 0
  %v815 = vsel %vm157, %v785, 0
  %v818 = vsel %vm157, %v786, 0
  %v821 = vsel %vm157, %v787, 0
  %823 = vmatprep.subr.bf16.mxu0 0
  %824 = vmatpush1.bf16.msra.mxu0 0
  %825 = vmatprep.subr.bf16.mxu0 0
  %826 = vmatpush1.bf16.msra.mxu0 0
  %827 = vmatprep.subr.bf16.mxu0 0
  %828 = vmatpush1.bf16.msra.mxu0 0
  %829 = vmatprep.subr.bf16.mxu0 0
  %830 = vmatpush1.bf16.msra.mxu0 0
  %831 = vmatprep.subr.bf16.mxu0 0
  %832 = vmatpush1.bf16.msra.mxu0 0
  %833 = vmatprep.subr.bf16.mxu0 0
  %834 = vmatpush1.bf16.msra.mxu0 0
  %835 = vmatprep.subr.bf16.mxu0 0
  %836 = vmatpush1.bf16.msra.mxu0 %v808
  %837 = vmatprep.subr.bf16.mxu0 0
  %838 = vmatpush1.bf16.msra.mxu0 %v807
  %839 = vmatprep.subr.bf16.mxu0 0
  %840 = vmatpush2.bf16.msra.mxu0 0
  %841 = vmatprep.subr.bf16.mxu0 0
  %842 = vmatpush2.bf16.msra.mxu0 0
  %843 = vmatprep.subr.bf16.mxu0 0
  %844 = vmatpush2.bf16.msra.mxu0 0
  %845 = vmatprep.subr.bf16.mxu0 0
  %846 = vmatpush2.bf16.msra.mxu0 0
  %847 = vmatprep.subr.bf16.mxu0 0
  %848 = vmatpush2.bf16.msra.mxu0 0
  %849 = vmatprep.subr.bf16.mxu0 0
  %850 = vmatpush2.bf16.msra.mxu0 0
  %851 = vmatprep.subr.bf16.mxu0 0
  %852 = vmatpush2.bf16.msra.mxu0 0
  %853 = vmatprep.subr.bf16.mxu0 0
  %854 = vmatpush2.bf16.msra.mxu0 0
  %855 = vmatprep.mubr.bf16.mxu0 0
  %856 = vmatmul.mubr.bf16.gmra.mxu0 %v812
  %v857 = vpop.f32.mrf.mxu0
  %v858 = vadd.f32 %v797, %v857
  %v859 = vpop.f32.mrf.mxu0
  %v860 = vpop.f32.mrf.mxu0
  %v861 = vadd.f32 %v797, %v860
  %v862 = vpop.f32.mrf.mxu0
  %863 = vmatprep.mubr.bf16.mxu0 0
  %864 = vmatmul.mubr.bf16.gmra.mxu0 %v815
  %v865 = vpop.f32.mrf.mxu0
  %v866 = vadd.f32 %v797, %v865
  %v867 = vpop.f32.mrf.mxu0
  %v868 = vpop.f32.mrf.mxu0
  %v869 = vadd.f32 %v797, %v868
  %v870 = vpop.f32.mrf.mxu0
  %871 = vmatprep.mubr.bf16.mxu0 0
  %872 = vmatmul.mubr.bf16.gmra.mxu0 %v818
  %v873 = vpop.f32.mrf.mxu0
  %v874 = vadd.f32 %v797, %v873
  %v875 = vpop.f32.mrf.mxu0
  %v876 = vpop.f32.mrf.mxu0
  %v877 = vadd.f32 %v797, %v876
  %v878 = vpop.f32.mrf.mxu0
  %879 = vmatprep.mubr.bf16.mxu0 0
  %880 = vmatmul.mubr.bf16.gmra.mxu0 %v821
  %v881 = vpop.f32.mrf.mxu0
  %v882 = vadd.f32 %v797, %v881
  %v883 = vpop.f32.mrf.mxu0
  %v884 = vpop.f32.mrf.mxu0
  %v885 = vadd.f32 %v797, %v884
  %v886 = vpop.f32.mrf.mxu0
  %887 = vdwg.mxu0
  %v888 = vld [vmem:[%s33] sm:$0xf]
  %v889 = vld [vmem:[%s33 + $0x4] sm:$0xf]
  %v890 = vld [vmem:[%s33 + $0x8] sm:$0xf]
  %v891 = vld [vmem:[%s33 + $0xc] sm:$0xf]
  %v892 = vld [vmem:[%s35] sm:$0x1]
  %v894 = vlaneseq
  %v895 = vshrl.u32 %v894, 7
  %v896 = vsub.s32 0, %v895
  %v897 = vrot.slane %v892, %v896
  %v903 = vunpack.c.l.b16 %v888
  %v904 = vunpack.c.l.b16 %v889
  %v905 = vunpack.c.l.b16 %v890
  %v906 = vunpack.c.l.b16 %v891
  %v907 = vpack.c.b16 %v904, %v903
  %v908 = vpack.c.b16 %v906, %v905
  %911 = vmatprep.subr.bf16.mxu0 0
  %912 = vmatpush1.bf16.msra.mxu0 0
  %913 = vmatprep.subr.bf16.mxu0 0
  %914 = vmatpush1.bf16.msra.mxu0 0
  %915 = vmatprep.subr.bf16.mxu0 0
  %916 = vmatpush1.bf16.msra.mxu0 0
  %917 = vmatprep.subr.bf16.mxu0 0
  %918 = vmatpush1.bf16.msra.mxu0 0
  %919 = vmatprep.subr.bf16.mxu0 0
  %920 = vmatpush1.bf16.msra.mxu0 0
  %921 = vmatprep.subr.bf16.mxu0 0
  %922 = vmatpush1.bf16.msra.mxu0 0
  %923 = vmatprep.subr.bf16.mxu0 0
  %924 = vmatpush1.bf16.msra.mxu0 %v908
  %925 = vmatprep.subr.bf16.mxu0 0
  %926 = vmatpush1.bf16.msra.mxu0 %v907
  %927 = vmatprep.subr.bf16.mxu0 0
  %928 = vmatpush2.bf16.msra.mxu0 0
  %929 = vmatprep.subr.bf16.mxu0 0
  %930 = vmatpush2.bf16.msra.mxu0 0
  %931 = vmatprep.subr.bf16.mxu0 0
  %932 = vmatpush2.bf16.msra.mxu0 0
  %933 = vmatprep.subr.bf16.mxu0 0
  %934 = vmatpush2.bf16.msra.mxu0 0
  %935 = vmatprep.subr.bf16.mxu0 0
  %936 = vmatpush2.bf16.msra.mxu0 0
  %937 = vmatprep.subr.bf16.mxu0 0
  %938 = vmatpush2.bf16.msra.mxu0 0
  %939 = vmatprep.subr.bf16.mxu0 0
  %940 = vmatpush2.bf16.msra.mxu0 0
  %941 = vmatprep.subr.bf16.mxu0 0
  %942 = vmatpush2.bf16.msra.mxu0 0
  %943 = vmatprep.mubr.bf16.mxu0 0
  %944 = vmatmul.mubr.bf16.gmra.mxu0 %v812
  %v945 = vpop.f32.mrf.mxu0
  %v946 = vadd.f32 %v897, %v945
  %v947 = vpop.f32.mrf.mxu0
  %v948 = vpop.f32.mrf.mxu0
  %v949 = vadd.f32 %v897, %v948
  %v950 = vpop.f32.mrf.mxu0
  %951 = vmatprep.mubr.bf16.mxu0 0
  %952 = vmatmul.mubr.bf16.gmra.mxu0 %v815
  %v953 = vpop.f32.mrf.mxu0
  %v954 = vadd.f32 %v897, %v953
  %v955 = vpop.f32.mrf.mxu0
  %v956 = vpop.f32.mrf.mxu0
  %v957 = vadd.f32 %v897, %v956
  %v958 = vpop.f32.mrf.mxu0
  %959 = vmatprep.mubr.bf16.mxu0 0
  %960 = vmatmul.mubr.bf16.gmra.mxu0 %v818
  %v961 = vpop.f32.mrf.mxu0
  %v962 = vadd.f32 %v897, %v961
  %v963 = vpop.f32.mrf.mxu0
  %v964 = vpop.f32.mrf.mxu0
  %v965 = vadd.f32 %v897, %v964
  %v966 = vpop.f32.mrf.mxu0
  %967 = vmatprep.mubr.bf16.mxu0 0
  %968 = vmatmul.mubr.bf16.gmra.mxu0 %v821
  %v969 = vpop.f32.mrf.mxu0
  %v970 = vadd.f32 %v897, %v969
  %v971 = vpop.f32.mrf.mxu0
  %v972 = vpop.f32.mrf.mxu0
  %v973 = vadd.f32 %v897, %v972
  %v974 = vpop.f32.mrf.mxu0
  %975 = vdwg.mxu0
  %v984 = vrot.slane %v142, 7
  %vm985 = vcmask 1045509
  %v986 = vsel %vm985, %v984, %v141
  %v987 = vrot.slane %v143, 6
  %vm988 = vcmask 1046534
  %v989 = vsel %vm988, %v987, %v986
  %v990 = vrot.slane %v144, 5
  %vm991 = vcmask 1047559
  %v992 = vsel %vm991, %v990, %v989
  %v993 = vrot.slane %v145, 4
  %v994 = vrot.slane %v146, 3
  %vm995 = vcmask 1041409
  %v996 = vsel %vm995, %v994, %v993
  %v997 = vrot.slane %v147, 2
  %vm998 = vcmask 1042434
  %v999 = vsel %vm998, %v997, %v996
  %v1000 = vrot.slane %v148, 1
  %vm1001 = vcmask 1043459
  %v1002 = vsel %vm1001, %v1000, %v999
  %vm1005 = vcmask 261124
  %v1006 = vsel %vm1005, %v992, 0.0
  %1007 = vadd.xlane.f32.xlu0 %v1006
  %v1008 = vpop.xlane.xlu0 %1007
  %vm1009 = vcmask 257024
  %v1010 = vsel %vm1009, %v1002, 0.0
  %1011 = vadd.xlane.f32.xlu0 %v1010
  %v1012 = vpop.xlane.xlu0 %1011
  %v1013 = vmul.f32 %v1008, %v182
  %v1014 = vmul.f32 %v1012, %v182
  %v1017 = vrot.slane %v1013, 1
  %v1018 = vrot.slane %v1013, 2
  %v1019 = vrot.slane %v1013, 3
  %v1020 = vrot.slane %v1014, 4
  %v1021 = vrot.slane %v1014, 5
  %v1022 = vrot.slane %v1014, 6
  %v1023 = vrot.slane %v1014, 7
  %v1032 = vsub.f32 %v141, %v1013
  %v1033 = vsub.f32 %v142, %v1017
  %v1034 = vsub.f32 %v143, %v1018
  %v1035 = vsub.f32 %v144, %v1019
  %v1036 = vsub.f32 %v145, %v1020
  %v1037 = vsub.f32 %v146, %v1021
  %v1038 = vsub.f32 %v147, %v1022
  %v1039 = vsub.f32 %v148, %v1023
  %v1040 = vmul.f32 %v1032, %v1032
  %v1041 = vmul.f32 %v1033, %v1033
  %v1042 = vmul.f32 %v1034, %v1034
  %v1043 = vmul.f32 %v1035, %v1035
  %v1044 = vmul.f32 %v1036, %v1036
  %v1045 = vmul.f32 %v1037, %v1037
  %v1046 = vmul.f32 %v1038, %v1038
  %v1047 = vmul.f32 %v1039, %v1039
  %v1056 = vrot.slane %v1041, 7
  %v1057 = vsel %vm985, %v1056, %v1040
  %v1058 = vrot.slane %v1042, 6
  %v1059 = vsel %vm988, %v1058, %v1057
  %v1060 = vrot.slane %v1043, 5
  %v1061 = vsel %vm991, %v1060, %v1059
  %v1062 = vrot.slane %v1044, 4
  %v1063 = vrot.slane %v1045, 3
  %v1064 = vsel %vm995, %v1063, %v1062
  %v1065 = vrot.slane %v1046, 2
  %v1066 = vsel %vm998, %v1065, %v1064
  %v1067 = vrot.slane %v1047, 1
  %v1068 = vsel %vm1001, %v1067, %v1066
  %v1071 = vsel %vm1005, %v1061, 0.0
  %1072 = vadd.xlane.f32.xlu0 %v1071
  %v1073 = vpop.xlane.xlu0 %1072
  %v1074 = vsel %vm1009, %v1068, 0.0
  %1075 = vadd.xlane.f32.xlu0 %v1074
  %v1076 = vpop.xlane.xlu0 %1075
  %v1077 = vmul.f32 %v1073, %v182
  %v1078 = vmul.f32 %v1076, %v182
  %v1079 = vadd.f32 %v1077, 1e-05
  %v1080 = vadd.f32 %v1078, 1e-05
  %v1081 = vrsqrt.pop %v1079
  %v1082 = vrsqrt.pop %v1080
  %v1085 = vrot.slane %v1081, 1
  %v1086 = vrot.slane %v1081, 2
  %v1087 = vrot.slane %v1081, 3
  %v1088 = vrot.slane %v1082, 4
  %v1089 = vrot.slane %v1082, 5
  %v1090 = vrot.slane %v1082, 6
  %v1091 = vrot.slane %v1082, 7
  %v1100 = vmul.f32 %v1032, %v1081
  %v1101 = vmul.f32 %v1033, %v1085
  %v1102 = vmul.f32 %v1034, %v1086
  %v1103 = vmul.f32 %v1035, %v1087
  %v1104 = vmul.f32 %v1036, %v1088
  %v1105 = vmul.f32 %v1037, %v1089
  %v1106 = vmul.f32 %v1038, %v1090
  %v1107 = vmul.f32 %v1039, %v1091
  %v1108 = vmul.f32 %v1100, %v267
  %v1109 = vmul.f32 %v1101, %v267
  %v1110 = vmul.f32 %v1102, %v267
  %v1111 = vmul.f32 %v1103, %v267
  %v1112 = vmul.f32 %v1104, %v267
  %v1113 = vmul.f32 %v1105, %v267
  %v1114 = vmul.f32 %v1106, %v267
  %v1115 = vmul.f32 %v1107, %v267
  %v1116 = vadd.f32 %v1108, %v281
  %v1117 = vadd.f32 %v1109, %v281
  %v1118 = vadd.f32 %v1110, %v281
  %v1119 = vadd.f32 %v1111, %v281
  %v1120 = vadd.f32 %v1112, %v281
  %v1121 = vadd.f32 %v1113, %v281
  %v1122 = vadd.f32 %v1114, %v281
  %v1123 = vadd.f32 %v1115, %v281
  %v1132 = vrot.slane %v402, 7
  %v1133 = vsel %vm985, %v1132, %v401
  %v1134 = vrot.slane %v403, 6
  %v1135 = vsel %vm988, %v1134, %v1133
  %v1136 = vrot.slane %v404, 5
  %v1137 = vsel %vm991, %v1136, %v1135
  %v1138 = vrot.slane %v405, 4
  %v1139 = vrot.slane %v406, 3
  %v1140 = vsel %vm995, %v1139, %v1138
  %v1141 = vrot.slane %v407, 2
  %v1142 = vsel %vm998, %v1141, %v1140
  %v1143 = vrot.slane %v408, 1
  %v1144 = vsel %vm1001, %v1143, %v1142
  %vm1147 = vcmask 130052
  %v1148 = vsel %vm1147, %v1137, 0.0
  %1149 = vadd.xlane.f32.xlu0 %v1148
  %v1150 = vpop.xlane.xlu0 %1149
  %vm1151 = vcmask 125952
  %v1152 = vsel %vm1151, %v1144, 0.0
  %1153 = vadd.xlane.f32.xlu0 %v1152
  %v1154 = vpop.xlane.xlu0 %1153
  %v1155 = vmul.f32 %v1150, %v434
  %v1156 = vmul.f32 %v1154, %v434
  %v1159 = vrot.slane %v1155, 1
  %v1160 = vrot.slane %v1155, 2
  %v1161 = vrot.slane %v1155, 3
  %v1162 = vrot.slane %v1156, 4
  %v1163 = vrot.slane %v1156, 5
  %v1164 = vrot.slane %v1156, 6
  %v1165 = vrot.slane %v1156, 7
  %v1174 = vsub.f32 %v401, %v1155
  %v1175 = vsub.f32 %v402, %v1159
  %v1176 = vsub.f32 %v403, %v1160
  %v1177 = vsub.f32 %v404, %v1161
  %v1178 = vsub.f32 %v405, %v1162
  %v1179 = vsub.f32 %v406, %v1163
  %v1180 = vsub.f32 %v407, %v1164
  %v1181 = vsub.f32 %v408, %v1165
  %v1182 = vmul.f32 %v1174, %v1174
  %v1183 = vmul.f32 %v1175, %v1175
  %v1184 = vmul.f32 %v1176, %v1176
  %v1185 = vmul.f32 %v1177, %v1177
  %v1186 = vmul.f32 %v1178, %v1178
  %v1187 = vmul.f32 %v1179, %v1179
  %v1188 = vmul.f32 %v1180, %v1180
  %v1189 = vmul.f32 %v1181, %v1181
  %v1198 = vrot.slane %v1183, 7
  %v1199 = vsel %vm985, %v1198, %v1182
  %v1200 = vrot.slane %v1184, 6
  %v1201 = vsel %vm988, %v1200, %v1199
  %v1202 = vrot.slane %v1185, 5
  %v1203 = vsel %vm991, %v1202, %v1201
  %v1204 = vrot.slane %v1186, 4
  %v1205 = vrot.slane %v1187, 3
  %v1206 = vsel %vm995, %v1205, %v1204
  %v1207 = vrot.slane %v1188, 2
  %v1208 = vsel %vm998, %v1207, %v1206
  %v1209 = vrot.slane %v1189, 1
  %v1210 = vsel %vm1001, %v1209, %v1208
  %v1213 = vsel %vm1147, %v1203, 0.0
  %1214 = vadd.xlane.f32.xlu0 %v1213
  %v1215 = vpop.xlane.xlu0 %1214
  %v1216 = vsel %vm1151, %v1210, 0.0
  %1217 = vadd.xlane.f32.xlu0 %v1216
  %v1218 = vpop.xlane.xlu0 %1217
  %v1219 = vmul.f32 %v1215, %v434
  %v1220 = vmul.f32 %v1218, %v434
  %v1221 = vadd.f32 %v1219, 1e-05
  %v1222 = vadd.f32 %v1220, 1e-05
  %v1223 = vrsqrt.pop %v1221
  %v1224 = vrsqrt.pop %v1222
  %v1227 = vrot.slane %v1223, 1
  %v1228 = vrot.slane %v1223, 2
  %v1229 = vrot.slane %v1223, 3
  %v1230 = vrot.slane %v1224, 4
  %v1231 = vrot.slane %v1224, 5
  %v1232 = vrot.slane %v1224, 6
  %v1233 = vrot.slane %v1224, 7
  %v1242 = vmul.f32 %v1174, %v1223
  %v1243 = vmul.f32 %v1175, %v1227
  %v1244 = vmul.f32 %v1176, %v1228
  %v1245 = vmul.f32 %v1177, %v1229
  %v1246 = vmul.f32 %v1178, %v1230
  %v1247 = vmul.f32 %v1179, %v1231
  %v1248 = vmul.f32 %v1180, %v1232
  %v1249 = vmul.f32 %v1181, %v1233
  %v1250 = vmul.f32 %v1242, %v519
  %v1251 = vmul.f32 %v1243, %v519
  %v1252 = vmul.f32 %v1244, %v519
  %v1253 = vmul.f32 %v1245, %v519
  %v1254 = vmul.f32 %v1246, %v519
  %v1255 = vmul.f32 %v1247, %v519
  %v1256 = vmul.f32 %v1248, %v519
  %v1257 = vmul.f32 %v1249, %v519
  %v1258 = vadd.f32 %v1250, %v533
  %v1259 = vadd.f32 %v1251, %v533
  %v1260 = vadd.f32 %v1252, %v533
  %v1261 = vadd.f32 %v1253, %v533
  %v1262 = vadd.f32 %v1254, %v533
  %v1263 = vadd.f32 %v1255, %v533
  %v1264 = vadd.f32 %v1256, %v533
  %v1265 = vadd.f32 %v1257, %v533
  %v1266 = vtanh.pop %v1258
  %v1267 = vtanh.pop %v1259
  %v1268 = vtanh.pop %v1260
  %v1269 = vtanh.pop %v1261
  %v1270 = vtanh.pop %v1262
  %v1271 = vtanh.pop %v1263
  %v1272 = vtanh.pop %v1264
  %v1273 = vtanh.pop %v1265
  %v1274 = vpack.c.bf16 %v1266, %v1266
  %v1275 = vpack.c.bf16 %v1267, %v1267
  %v1276 = vpack.c.bf16 %v1268, %v1268
  %v1277 = vpack.c.bf16 %v1269, %v1269
  %v1278 = vpack.c.bf16 %v1270, %v1270
  %v1279 = vpack.c.bf16 %v1271, %v1271
  %v1280 = vpack.c.bf16 %v1272, %v1272
  %v1281 = vpack.c.bf16 %v1273, %v1273
  %v1290 = vunpack.c.l.b16 %v1274
  %v1291 = vunpack.c.l.b16 %v1275
  %v1292 = vunpack.c.l.b16 %v1276
  %v1293 = vunpack.c.l.b16 %v1277
  %v1294 = vunpack.c.l.b16 %v1278
  %v1295 = vunpack.c.l.b16 %v1279
  %v1296 = vunpack.c.l.b16 %v1280
  %v1297 = vunpack.c.l.b16 %v1281
  %v1298 = vrot.slane %v1290, 4
  %v1299 = vrot.slane %v1291, 3
  %v1300 = vsel %vm995, %v1299, %v1298
  %v1301 = vrot.slane %v1292, 2
  %v1302 = vsel %vm998, %v1301, %v1300
  %v1303 = vrot.slane %v1293, 1
  %v1304 = vsel %vm1001, %v1303, %v1302
  %vm1305 = vcmask 1044484
  %v1306 = vsel %vm1305, %v1294, %v1304
  %v1307 = vrot.slane %v1295, 7
  %v1308 = vsel %vm985, %v1307, %v1306
  %v1309 = vrot.slane %v1296, 6
  %v1310 = vsel %vm988, %v1309, %v1308
  %v1311 = vrot.slane %v1297, 5
  %v1312 = vsel %vm991, %v1311, %v1310
  %v1313 = vpack.c.b16 %v1312, %v1312
  %v1315 = vsel %vm409, %v1313, 0
  %1317 = vmatprep.subr.bf16.mxu0 0
  %1318 = vmatpush1.bf16.msra.mxu0 0
  %1319 = vmatprep.subr.bf16.mxu0 0
  %1320 = vmatpush1.bf16.msra.mxu0 0
  %1321 = vmatprep.subr.bf16.mxu0 0
  %1322 = vmatpush1.bf16.msra.mxu0 0
  %1323 = vmatprep.subr.bf16.mxu0 0
  %1324 = vmatpush1.bf16.msra.mxu0 0
  %1325 = vmatprep.subr.bf16.mxu0 0
  %1326 = vmatpush1.bf16.msra.mxu0 0
  %1327 = vmatprep.subr.bf16.mxu0 0
  %1328 = vmatpush1.bf16.msra.mxu0 0
  %1329 = vmatprep.subr.bf16.mxu0 0
  %1330 = vmatpush1.bf16.msra.mxu0 0
  %1331 = vmatprep.subr.bf16.mxu0 0
  %1332 = vmatpush1.bf16.msra.mxu0 %v565
  %1333 = vmatprep.subr.bf16.mxu0 0
  %1334 = vmatpush2.bf16.msra.mxu0 0
  %1335 = vmatprep.subr.bf16.mxu0 0
  %1336 = vmatpush2.bf16.msra.mxu0 0
  %1337 = vmatprep.subr.bf16.mxu0 0
  %1338 = vmatpush2.bf16.msra.mxu0 0
  %1339 = vmatprep.subr.bf16.mxu0 0
  %1340 = vmatpush2.bf16.msra.mxu0 0
  %1341 = vmatprep.subr.bf16.mxu0 0
  %1342 = vmatpush2.bf16.msra.mxu0 0
  %1343 = vmatprep.subr.bf16.mxu0 0
  %1344 = vmatpush2.bf16.msra.mxu0 0
  %1345 = vmatprep.subr.bf16.mxu0 0
  %1346 = vmatpush2.bf16.msra.mxu0 0
  %1347 = vmatprep.subr.bf16.mxu0 0
  %1348 = vmatpush2.bf16.msra.mxu0 0
  %1349 = vmatprep.mubr.bf16.mxu0 0
  %1350 = vmatmul.mubr.bf16.gmra.mxu0 %v1315
  %v1351 = vpop.f32.mrf.mxu0
  %v1352 = vadd.f32 %v559, %v1351
  %v1353 = vpop.f32.mrf.mxu0
  %v1354 = vpop.f32.mrf.mxu0
  %v1355 = vpop.f32.mrf.mxu0
  %1356 = vdwg.mxu0
  %v1357 = vsel %vm157, %v1352, 0.0
  %1358 = vadd.xlane.f32.xlu0 %v1357
  %v1359 = vpop.xlane.xlu0 %1358
  %v1360 = vmul.f32 %v1359, %v182
  %v1361 = vsub.f32 %v1352, %v1360
  %v1362 = vmul.f32 %v1361, %v1361
  %v1363 = vsel %vm157, %v1362, 0.0
  %1364 = vadd.xlane.f32.xlu0 %v1363
  %v1365 = vpop.xlane.xlu0 %1364
  %v1366 = vmul.f32 %v1365, %v182
  %v1367 = vadd.f32 %v1366, 1e-05
  %v1368 = vrsqrt.pop %v1367
  %v1369 = vmul.f32 %v1361, %v1368
  %v1370 = vmul.f32 %v1369, %v752
  %v1371 = vadd.f32 %v1370, %v766
  %v1373 = vrot.slane %v1371, 4
  %v1374 = vrot.slane %v1371, 5
  %v1375 = vrot.slane %v1371, 6
  %v1376 = vrot.slane %v1371, 7
  %v1377 = vrot.slane %v1371, 1
  %v1378 = vrot.slane %v1371, 2
  %v1379 = vrot.slane %v1371, 3
  %v1388 = vadd.f32 %v1116, %v1373
  %v1389 = vadd.f32 %v1117, %v1374
  %v1390 = vadd.f32 %v1118, %v1375
  %v1391 = vadd.f32 %v1119, %v1376
  %v1392 = vadd.f32 %v1120, %v1371
  %v1393 = vadd.f32 %v1121, %v1377
  %v1394 = vadd.f32 %v1122, %v1378
  %v1395 = vadd.f32 %v1123, %v1379
  %v1396 = vpack.c.bf16 %v1388, %v1388
  %v1397 = vpack.c.bf16 %v1389, %v1389
  %v1398 = vpack.c.bf16 %v1390, %v1390
  %v1399 = vpack.c.bf16 %v1391, %v1391
  %v1400 = vpack.c.bf16 %v1392, %v1392
  %v1401 = vpack.c.bf16 %v1393, %v1393
  %v1402 = vpack.c.bf16 %v1394, %v1394
  %v1403 = vpack.c.bf16 %v1395, %v1395
  %v1404 = vld [vmem:[%s25] sm:$0xf]
  %v1405 = vld [vmem:[%s25 + $0x4] sm:$0xf]
  %v1406 = vld [vmem:[%s25 + $0x8] sm:$0xf]
  %v1407 = vld [vmem:[%s25 + $0xc] sm:$0xf]
  %v1408 = vld [vmem:[%s27] sm:$0x1]
  %v1410 = vlaneseq
  %v1411 = vshrl.u32 %v1410, 7
  %v1412 = vsub.s32 0, %v1411
  %v1413 = vrot.slane %v1408, %v1412
  %v1423 = vunpack.c.l.b16 %v1396
  %v1424 = vunpack.c.l.b16 %v1397
  %v1425 = vunpack.c.l.b16 %v1398
  %v1426 = vunpack.c.l.b16 %v1399
  %v1427 = vunpack.c.l.b16 %v1400
  %v1428 = vunpack.c.l.b16 %v1401
  %v1429 = vunpack.c.l.b16 %v1402
  %v1430 = vunpack.c.l.b16 %v1403
  %v1431 = vrot.slane %v1423, 4
  %v1432 = vrot.slane %v1424, 3
  %v1433 = vsel %vm995, %v1432, %v1431
  %v1434 = vrot.slane %v1425, 2
  %v1435 = vsel %vm998, %v1434, %v1433
  %v1436 = vrot.slane %v1426, 1
  %v1437 = vsel %vm1001, %v1436, %v1435
  %v1438 = vsel %vm1305, %v1427, %v1437
  %v1439 = vrot.slane %v1428, 7
  %v1440 = vsel %vm985, %v1439, %v1438
  %v1441 = vrot.slane %v1429, 6
  %v1442 = vsel %vm988, %v1441, %v1440
  %v1443 = vrot.slane %v1430, 5
  %v1444 = vsel %vm991, %v1443, %v1442
  %v1445 = vpack.c.b16 %v1444, %v1444
  %v1450 = vunpack.c.l.b16 %v1404
  %v1451 = vunpack.c.l.b16 %v1405
  %v1452 = vunpack.c.l.b16 %v1406
  %v1453 = vunpack.c.l.b16 %v1407
  %v1454 = vpack.c.b16 %v1451, %v1450
  %v1455 = vpack.c.b16 %v1453, %v1452
  %v1459 = vsel %vm157, %v1445, 0
  %1461 = vmatprep.subr.bf16.mxu0 0
  %1462 = vmatpush1.bf16.msra.mxu0 0
  %1463 = vmatprep.subr.bf16.mxu0 0
  %1464 = vmatpush1.bf16.msra.mxu0 0
  %1465 = vmatprep.subr.bf16.mxu0 0
  %1466 = vmatpush1.bf16.msra.mxu0 0
  %1467 = vmatprep.subr.bf16.mxu0 0
  %1468 = vmatpush1.bf16.msra.mxu0 0
  %1469 = vmatprep.subr.bf16.mxu0 0
  %1470 = vmatpush1.bf16.msra.mxu0 0
  %1471 = vmatprep.subr.bf16.mxu0 0
  %1472 = vmatpush1.bf16.msra.mxu0 0
  %1473 = vmatprep.subr.bf16.mxu0 0
  %1474 = vmatpush1.bf16.msra.mxu0 %v1455
  %1475 = vmatprep.subr.bf16.mxu0 0
  %1476 = vmatpush1.bf16.msra.mxu0 %v1454
  %1477 = vmatprep.subr.bf16.mxu0 0
  %1478 = vmatpush2.bf16.msra.mxu0 0
  %1479 = vmatprep.subr.bf16.mxu0 0
  %1480 = vmatpush2.bf16.msra.mxu0 0
  %1481 = vmatprep.subr.bf16.mxu0 0
  %1482 = vmatpush2.bf16.msra.mxu0 0
  %1483 = vmatprep.subr.bf16.mxu0 0
  %1484 = vmatpush2.bf16.msra.mxu0 0
  %1485 = vmatprep.subr.bf16.mxu0 0
  %1486 = vmatpush2.bf16.msra.mxu0 0
  %1487 = vmatprep.subr.bf16.mxu0 0
  %1488 = vmatpush2.bf16.msra.mxu0 0
  %1489 = vmatprep.subr.bf16.mxu0 0
  %1490 = vmatpush2.bf16.msra.mxu0 0
  %1491 = vmatprep.subr.bf16.mxu0 0
  %1492 = vmatpush2.bf16.msra.mxu0 0
  %1493 = vmatprep.mubr.bf16.mxu0 0
  %1494 = vmatmul.mubr.bf16.gmra.mxu0 %v1459
  %v1495 = vpop.f32.mrf.mxu0
  %v1496 = vadd.f32 %v1413, %v1495
  %v1497 = vpop.f32.mrf.mxu0
  %v1498 = vpop.f32.mrf.mxu0
  %v1499 = vpop.f32.mrf.mxu0
  %1500 = vdwg.mxu0
  %v1501 = vmul.f32 %v1496, 0.35355327
  %v1503 = vcombine.high %v1501, %v1501
  %v1505 = vunpack.c.l.s4 1966171168
  %v1506 = vunpack.c.0.s8 %v1505
  %v1507 = vlaneseq
  %v1508 = vshrl.u32 %v1507, 7
  %v1509 = vsub.s32 %v1506, %v1508
  %v1510 = vrot.slane %v1501, %v1509
  %v1512 = vunpack.c.l.s4 1966171168
  %v1513 = vunpack.c.0.s8 %v1512
  %v1514 = vlaneseq
  %v1515 = vshrl.u32 %v1514, 7
  %v1516 = vsub.s32 %v1513, %v1515
  %v1517 = vrot.slane %v1503, %v1516
  %v1518 = vcombine.high %v1510, %v1510
  %v1519 = vcombine.high %v1517, %v1517
  %v1521 = vunpack.c.l.s4 1966171168
  %v1522 = vunpack.c.0.s8 %v1521
  %v1523 = vlaneseq
  %v1524 = vshrl.u32 %v1523, 7
  %v1525 = vsub.s32 %v1522, %v1524
  %v1526 = vrot.slane %v1510, %v1525
  %v1528 = vunpack.c.l.s4 1966171168
  %v1529 = vunpack.c.0.s8 %v1528
  %v1530 = vlaneseq
  %v1531 = vshrl.u32 %v1530, 7
  %v1532 = vsub.s32 %v1529, %v1531
  %v1533 = vrot.slane %v1517, %v1532
  %v1535 = vunpack.c.l.s4 1966171168
  %v1536 = vunpack.c.0.s8 %v1535
  %v1537 = vlaneseq
  %v1538 = vshrl.u32 %v1537, 7
  %v1539 = vsub.s32 %v1536, %v1538
  %v1540 = vrot.slane %v1518, %v1539
  %v1542 = vunpack.c.l.s4 1966171168
  %v1543 = vunpack.c.0.s8 %v1542
  %v1544 = vlaneseq
  %v1545 = vshrl.u32 %v1544, 7
  %v1546 = vsub.s32 %v1543, %v1545
  %v1547 = vrot.slane %v1519, %v1546
  %v1548 = vcombine.high %v1526, %v1526
  %v1549 = vcombine.high %v1533, %v1533
  %v1550 = vcombine.high %v1540, %v1540
  %v1551 = vcombine.high %v1547, %v1547
  %v1552 = vlaneseq
  %v1553 = vshrl.u32 %v1552, 7
  %v1554 = vsub.s32 0, %v1553
  %v1555 = vrot.slane %v1526, %v1554
  %v1556 = vlaneseq
  %v1557 = vshrl.u32 %v1556, 7
  %v1558 = vsub.s32 0, %v1557
  %v1559 = vrot.slane %v1540, %v1558
  %v1560 = vlaneseq
  %v1561 = vshrl.u32 %v1560, 7
  %v1562 = vsub.s32 0, %v1561
  %v1563 = vrot.slane %v1548, %v1562
  %v1564 = vlaneseq
  %v1565 = vshrl.u32 %v1564, 7
  %v1566 = vsub.s32 0, %v1565
  %v1567 = vrot.slane %v1550, %v1566
  %v1568 = vlaneseq
  %v1569 = vshrl.u32 %v1568, 7
  %v1570 = vsub.s32 0, %v1569
  %v1571 = vrot.slane %v1533, %v1570
  %v1572 = vlaneseq
  %v1573 = vshrl.u32 %v1572, 7
  %v1574 = vsub.s32 0, %v1573
  %v1575 = vrot.slane %v1547, %v1574
  %v1576 = vlaneseq
  %v1577 = vshrl.u32 %v1576, 7
  %v1578 = vsub.s32 0, %v1577
  %v1579 = vrot.slane %v1549, %v1578
  %v1580 = vlaneseq
  %v1581 = vshrl.u32 %v1580, 7
  %v1582 = vsub.s32 0, %v1581
  %v1583 = vrot.slane %v1551, %v1582
  %v1592 = vmul.f32 %v1555, %v858
  %v1593 = vmul.f32 %v1559, %v861
  %v1594 = vmul.f32 %v1563, %v866
  %v1595 = vmul.f32 %v1567, %v869
  %v1596 = vmul.f32 %v1571, %v874
  %v1597 = vmul.f32 %v1575, %v877
  %v1598 = vmul.f32 %v1579, %v882
  %v1599 = vmul.f32 %v1583, %v885
  %v1600 = vpack.c.bf16 %v1593, %v1592
  %v1601 = vpack.c.bf16 %v1595, %v1594
  %v1602 = vpack.c.bf16 %v1597, %v1596
  %v1603 = vpack.c.bf16 %v1599, %v1598
  %v1608 = vunpack.c.l.b16 %v135
  %v1609 = vunpack.c.l.b16 %v136
  %v1610 = vunpack.c.l.b16 %v137
  %v1611 = vunpack.c.l.b16 %v138
  %v1612 = vpack.c.b16 %v1609, %v1608
  %v1613 = vpack.c.b16 %v1611, %v1610
  %v1617 = vsel %vm157, %v1600, 0
  %v1620 = vsel %vm157, %v1601, 0
  %v1623 = vsel %vm157, %v1602, 0
  %v1626 = vsel %vm157, %v1603, 0
  %1628 = vmatprep.subr.bf16.mxu0 0
  %1629 = vmatpush1.bf16.msra.mxu0 0
  %1630 = vmatprep.subr.bf16.mxu0 0
  %1631 = vmatpush1.bf16.msra.mxu0 0
  %1632 = vmatprep.subr.bf16.mxu0 0
  %1633 = vmatpush1.bf16.msra.mxu0 0
  %1634 = vmatprep.subr.bf16.mxu0 0
  %1635 = vmatpush1.bf16.msra.mxu0 0
  %1636 = vmatprep.subr.bf16.mxu0 0
  %1637 = vmatpush1.bf16.msra.mxu0 0
  %1638 = vmatprep.subr.bf16.mxu0 0
  %1639 = vmatpush1.bf16.msra.mxu0 0
  %1640 = vmatprep.subr.bf16.mxu0 0
  %1641 = vmatpush1.bf16.msra.mxu0 %v1613
  %1642 = vmatprep.subr.bf16.mxu0 0
  %1643 = vmatpush1.bf16.msra.mxu0 %v1612
  %1644 = vmatprep.subr.bf16.mxu0 0
  %1645 = vmatpush2.bf16.msra.mxu0 0
  %1646 = vmatprep.subr.bf16.mxu0 0
  %1647 = vmatpush2.bf16.msra.mxu0 0
  %1648 = vmatprep.subr.bf16.mxu0 0
  %1649 = vmatpush2.bf16.msra.mxu0 0
  %1650 = vmatprep.subr.bf16.mxu0 0
  %1651 = vmatpush2.bf16.msra.mxu0 0
  %1652 = vmatprep.subr.bf16.mxu0 0
  %1653 = vmatpush2.bf16.msra.mxu0 0
  %1654 = vmatprep.subr.bf16.mxu0 0
  %1655 = vmatpush2.bf16.msra.mxu0 0
  %1656 = vmatprep.subr.bf16.mxu0 0
  %1657 = vmatpush2.bf16.msra.mxu0 0
  %1658 = vmatprep.subr.bf16.mxu0 0
  %1659 = vmatpush2.bf16.msra.mxu0 0
  %1660 = vmatprep.mubr.bf16.mxu0 0
  %1661 = vmatmul.mubr.bf16.gmra.mxu0 %v1617
  %v1662 = vpop.f32.mrf.mxu0
  %v1663 = vadd.f32 0.0, %v1662
  %v1664 = vpop.f32.mrf.mxu0
  %v1665 = vpop.f32.mrf.mxu0
  %v1666 = vadd.f32 0.0, %v1665
  %v1667 = vpop.f32.mrf.mxu0
  %1668 = vmatprep.mubr.bf16.mxu0 0
  %1669 = vmatmul.mubr.bf16.gmra.mxu0 %v1620
  %v1670 = vpop.f32.mrf.mxu0
  %v1671 = vadd.f32 0.0, %v1670
  %v1672 = vpop.f32.mrf.mxu0
  %v1673 = vpop.f32.mrf.mxu0
  %v1674 = vadd.f32 0.0, %v1673
  %v1675 = vpop.f32.mrf.mxu0
  %1676 = vmatprep.mubr.bf16.mxu0 0
  %1677 = vmatmul.mubr.bf16.gmra.mxu0 %v1623
  %v1678 = vpop.f32.mrf.mxu0
  %v1679 = vadd.f32 0.0, %v1678
  %v1680 = vpop.f32.mrf.mxu0
  %v1681 = vpop.f32.mrf.mxu0
  %v1682 = vadd.f32 0.0, %v1681
  %v1683 = vpop.f32.mrf.mxu0
  %1684 = vmatprep.mubr.bf16.mxu0 0
  %1685 = vmatmul.mubr.bf16.gmra.mxu0 %v1626
  %v1686 = vpop.f32.mrf.mxu0
  %v1687 = vadd.f32 0.0, %v1686
  %v1688 = vpop.f32.mrf.mxu0
  %v1689 = vpop.f32.mrf.mxu0
  %v1690 = vadd.f32 0.0, %v1689
  %v1691 = vpop.f32.mrf.mxu0
  %1692 = vdwg.mxu0
  %v1693 = vadd.f32 %v1663, %v140
  %v1694 = vadd.f32 %v1666, %v140
  %v1695 = vadd.f32 %v1671, %v140
  %v1696 = vadd.f32 %v1674, %v140
  %v1697 = vadd.f32 %v1679, %v140
  %v1698 = vadd.f32 %v1682, %v140
  %v1699 = vadd.f32 %v1687, %v140
  %v1700 = vadd.f32 %v1690, %v140
  %v1701 = vmax.f32 %v1693, -10.0
  %v1702 = vmax.f32 %v1694, -10.0
  %v1703 = vmax.f32 %v1695, -10.0
  %v1704 = vmax.f32 %v1696, -10.0
  %v1705 = vmax.f32 %v1697, -10.0
  %v1706 = vmax.f32 %v1698, -10.0
  %v1707 = vmax.f32 %v1699, -10.0
  %v1708 = vmax.f32 %v1700, -10.0
  %v1709 = vmin.f32 %v1701, 10.0
  %v1710 = vmin.f32 %v1702, 10.0
  %v1711 = vmin.f32 %v1703, 10.0
  %v1712 = vmin.f32 %v1704, 10.0
  %v1713 = vmin.f32 %v1705, 10.0
  %v1714 = vmin.f32 %v1706, 10.0
  %v1715 = vmin.f32 %v1707, 10.0
  %v1716 = vmin.f32 %v1708, 10.0
  %v1717 = vmul.f32 %v1709, 1.442695
  %v1718 = vpow.pop %v1717
  %v1719 = vmul.f32 %v1710, 1.442695
  %v1720 = vpow.pop %v1719
  %v1721 = vmul.f32 %v1711, 1.442695
  %v1722 = vpow.pop %v1721
  %v1723 = vmul.f32 %v1712, 1.442695
  %v1724 = vpow.pop %v1723
  %v1725 = vmul.f32 %v1713, 1.442695
  %v1726 = vpow.pop %v1725
  %v1727 = vmul.f32 %v1714, 1.442695
  %v1728 = vpow.pop %v1727
  %v1729 = vmul.f32 %v1715, 1.442695
  %v1730 = vpow.pop %v1729
  %v1731 = vmul.f32 %v1716, 1.442695
  %v1732 = vpow.pop %v1731
  %vm1733 = vcmask 31744
  %v1734 = vsel %vm1733, %v1718, 0.0
  %v1735 = vrot.slane %v1734, 4
  %v1736 = vadd.f32 %v1734, %v1735
  %v1737 = vrot.slane %v1736, 2
  %v1738 = vadd.f32 %v1736, %v1737
  %v1739 = vrot.slane %v1738, 1
  %v1740 = vadd.f32 %v1738, %v1739
  %v1741 = vsel %vm1733, %v1720, 0.0
  %v1742 = vrot.slane %v1741, 4
  %v1743 = vadd.f32 %v1741, %v1742
  %v1744 = vrot.slane %v1743, 2
  %v1745 = vadd.f32 %v1743, %v1744
  %v1746 = vrot.slane %v1745, 1
  %v1747 = vadd.f32 %v1745, %v1746
  %v1748 = vsel %vm1733, %v1722, 0.0
  %v1749 = vrot.slane %v1748, 4
  %v1750 = vadd.f32 %v1748, %v1749
  %v1751 = vrot.slane %v1750, 2
  %v1752 = vadd.f32 %v1750, %v1751
  %v1753 = vrot.slane %v1752, 1
  %v1754 = vadd.f32 %v1752, %v1753
  %v1755 = vsel %vm1733, %v1724, 0.0
  %v1756 = vrot.slane %v1755, 4
  %v1757 = vadd.f32 %v1755, %v1756
  %v1758 = vrot.slane %v1757, 2
  %v1759 = vadd.f32 %v1757, %v1758
  %v1760 = vrot.slane %v1759, 1
  %v1761 = vadd.f32 %v1759, %v1760
  %v1762 = vsel %vm1733, %v1726, 0.0
  %v1763 = vrot.slane %v1762, 4
  %v1764 = vadd.f32 %v1762, %v1763
  %v1765 = vrot.slane %v1764, 2
  %v1766 = vadd.f32 %v1764, %v1765
  %v1767 = vrot.slane %v1766, 1
  %v1768 = vadd.f32 %v1766, %v1767
  %v1769 = vsel %vm1733, %v1728, 0.0
  %v1770 = vrot.slane %v1769, 4
  %v1771 = vadd.f32 %v1769, %v1770
  %v1772 = vrot.slane %v1771, 2
  %v1773 = vadd.f32 %v1771, %v1772
  %v1774 = vrot.slane %v1773, 1
  %v1775 = vadd.f32 %v1773, %v1774
  %v1776 = vsel %vm1733, %v1730, 0.0
  %v1777 = vrot.slane %v1776, 4
  %v1778 = vadd.f32 %v1776, %v1777
  %v1779 = vrot.slane %v1778, 2
  %v1780 = vadd.f32 %v1778, %v1779
  %v1781 = vrot.slane %v1780, 1
  %v1782 = vadd.f32 %v1780, %v1781
  %v1783 = vsel %vm1733, %v1732, 0.0
  %v1784 = vrot.slane %v1783, 4
  %v1785 = vadd.f32 %v1783, %v1784
  %v1786 = vrot.slane %v1785, 2
  %v1787 = vadd.f32 %v1785, %v1786
  %v1788 = vrot.slane %v1787, 1
  %v1789 = vadd.f32 %v1787, %v1788
  %v1790 = vrcp.pop %v1740
  %v1791 = vrcp.pop %v1747
  %v1792 = vrcp.pop %v1754
  %v1793 = vrcp.pop %v1761
  %v1794 = vrcp.pop %v1768
  %v1795 = vrcp.pop %v1775
  %v1796 = vrcp.pop %v1782
  %v1797 = vrcp.pop %v1789
  %v1798 = vmul.f32 %v1718, %v1790
  %v1799 = vmul.f32 %v1720, %v1791
  %v1800 = vmul.f32 %v1722, %v1792
  %v1801 = vmul.f32 %v1724, %v1793
  %v1802 = vmul.f32 %v1726, %v1794
  %v1803 = vmul.f32 %v1728, %v1795
  %v1804 = vmul.f32 %v1730, %v1796
  %v1805 = vmul.f32 %v1732, %v1797
  %v1806 = vpack.c.bf16 %v1799, %v1798
  %v1807 = vpack.c.bf16 %v1801, %v1800
  %v1808 = vpack.c.bf16 %v1803, %v1802
  %v1809 = vpack.c.bf16 %v1805, %v1804
  %v1811 = vsel %vm1733, %v1806, 0
  %v1814 = vsel %vm1733, %v1807, 0
  %v1817 = vsel %vm1733, %v1808, 0
  %v1820 = vsel %vm1733, %v1809, 0
  %vm1822 = vcmask 1041408
  %v1824 = vsel %vm1822, %v139, 0
  %1826 = vmatprep.subr.bf16.mxu0 0
  %1827 = vmatpush1.bf16.msra.mxu0 0
  %1828 = vmatprep.subr.bf16.mxu0 0
  %1829 = vmatpush1.bf16.msra.mxu0 0
  %1830 = vmatprep.subr.bf16.mxu0 0
  %1831 = vmatpush1.bf16.msra.mxu0 0
  %1832 = vmatprep.subr.bf16.mxu0 0
  %1833 = vmatpush1.bf16.msra.mxu0 0
  %1834 = vmatprep.subr.bf16.mxu0 0
  %1835 = vmatpush1.bf16.msra.mxu0 0
  %1836 = vmatprep.subr.bf16.mxu0 0
  %1837 = vmatpush1.bf16.msra.mxu0 0
  %1838 = vmatprep.subr.bf16.mxu0 0
  %1839 = vmatpush1.bf16.msra.mxu0 0
  %1840 = vmatprep.subr.bf16.mxu0 0
  %1841 = vmatpush1.bf16.msra.mxu0 %v1824
  %1842 = vmatprep.subr.bf16.mxu0 0
  %1843 = vmatpush2.bf16.msra.mxu0 0
  %1844 = vmatprep.subr.bf16.mxu0 0
  %1845 = vmatpush2.bf16.msra.mxu0 0
  %1846 = vmatprep.subr.bf16.mxu0 0
  %1847 = vmatpush2.bf16.msra.mxu0 0
  %1848 = vmatprep.subr.bf16.mxu0 0
  %1849 = vmatpush2.bf16.msra.mxu0 0
  %1850 = vmatprep.subr.bf16.mxu0 0
  %1851 = vmatpush2.bf16.msra.mxu0 0
  %1852 = vmatprep.subr.bf16.mxu0 0
  %1853 = vmatpush2.bf16.msra.mxu0 0
  %1854 = vmatprep.subr.bf16.mxu0 0
  %1855 = vmatpush2.bf16.msra.mxu0 0
  %1856 = vmatprep.subr.bf16.mxu0 0
  %1857 = vmatpush2.bf16.msra.mxu0 0
  %1858 = vmatprep.mubr.bf16.mxu0 0
  %1859 = vmatmul.mubr.bf16.gmra.mxu0 %v1811
  %v1860 = vpop.f32.mrf.mxu0
  %v1861 = vadd.f32 0.0, %v1860
  %v1862 = vpop.f32.mrf.mxu0
  %v1863 = vpop.f32.mrf.mxu0
  %v1864 = vadd.f32 0.0, %v1863
  %v1865 = vpop.f32.mrf.mxu0
  %1866 = vmatprep.mubr.bf16.mxu0 0
  %1867 = vmatmul.mubr.bf16.gmra.mxu0 %v1814
  %v1868 = vpop.f32.mrf.mxu0
  %v1869 = vadd.f32 0.0, %v1868
  %v1870 = vpop.f32.mrf.mxu0
  %v1871 = vpop.f32.mrf.mxu0
  %v1872 = vadd.f32 0.0, %v1871
  %v1873 = vpop.f32.mrf.mxu0
  %1874 = vmatprep.mubr.bf16.mxu0 0
  %1875 = vmatmul.mubr.bf16.gmra.mxu0 %v1817
  %v1876 = vpop.f32.mrf.mxu0
  %v1877 = vadd.f32 0.0, %v1876
  %v1878 = vpop.f32.mrf.mxu0
  %v1879 = vpop.f32.mrf.mxu0
  %v1880 = vadd.f32 0.0, %v1879
  %v1881 = vpop.f32.mrf.mxu0
  %1882 = vmatprep.mubr.bf16.mxu0 0
  %1883 = vmatmul.mubr.bf16.gmra.mxu0 %v1820
  %v1884 = vpop.f32.mrf.mxu0
  %v1885 = vadd.f32 0.0, %v1884
  %v1886 = vpop.f32.mrf.mxu0
  %v1887 = vpop.f32.mrf.mxu0
  %v1888 = vadd.f32 0.0, %v1887
  %v1889 = vpop.f32.mrf.mxu0
  %1890 = vdwg.mxu0
  %v1891 = vmul.f32 %v1861, %v946
  %v1892 = vmul.f32 %v1864, %v949
  %v1893 = vmul.f32 %v1869, %v954
  %v1894 = vmul.f32 %v1872, %v957
  %v1895 = vmul.f32 %v1877, %v962
  %v1896 = vmul.f32 %v1880, %v965
  %v1897 = vmul.f32 %v1885, %v970
  %v1898 = vmul.f32 %v1888, %v973
  %v1899 = vsel %vm157, %v1891, 0.0
  %v1900 = vrot.slane %v1899, 4
  %v1901 = vadd.f32 %v1899, %v1900
  %v1902 = vrot.slane %v1901, 2
  %v1903 = vadd.f32 %v1901, %v1902
  %v1904 = vrot.slane %v1903, 1
  %v1905 = vadd.f32 %v1903, %v1904
  %v1906 = vsel %vm157, %v1892, 0.0
  %v1907 = vrot.slane %v1906, 4
  %v1908 = vadd.f32 %v1906, %v1907
  %v1909 = vrot.slane %v1908, 2
  %v1910 = vadd.f32 %v1908, %v1909
  %v1911 = vrot.slane %v1910, 1
  %v1912 = vadd.f32 %v1910, %v1911
  %v1913 = vsel %vm157, %v1893, 0.0
  %v1914 = vrot.slane %v1913, 4
  %v1915 = vadd.f32 %v1913, %v1914
  %v1916 = vrot.slane %v1915, 2
  %v1917 = vadd.f32 %v1915, %v1916
  %v1918 = vrot.slane %v1917, 1
  %v1919 = vadd.f32 %v1917, %v1918
  %v1920 = vsel %vm157, %v1894, 0.0
  %v1921 = vrot.slane %v1920, 4
  %v1922 = vadd.f32 %v1920, %v1921
  %v1923 = vrot.slane %v1922, 2
  %v1924 = vadd.f32 %v1922, %v1923
  %v1925 = vrot.slane %v1924, 1
  %v1926 = vadd.f32 %v1924, %v1925
  %v1927 = vsel %vm157, %v1895, 0.0
  %v1928 = vrot.slane %v1927, 4
  %v1929 = vadd.f32 %v1927, %v1928
  %v1930 = vrot.slane %v1929, 2
  %v1931 = vadd.f32 %v1929, %v1930
  %v1932 = vrot.slane %v1931, 1
  %v1933 = vadd.f32 %v1931, %v1932
  %v1934 = vsel %vm157, %v1896, 0.0
  %v1935 = vrot.slane %v1934, 4
  %v1936 = vadd.f32 %v1934, %v1935
  %v1937 = vrot.slane %v1936, 2
  %v1938 = vadd.f32 %v1936, %v1937
  %v1939 = vrot.slane %v1938, 1
  %v1940 = vadd.f32 %v1938, %v1939
  %v1941 = vsel %vm157, %v1897, 0.0
  %v1942 = vrot.slane %v1941, 4
  %v1943 = vadd.f32 %v1941, %v1942
  %v1944 = vrot.slane %v1943, 2
  %v1945 = vadd.f32 %v1943, %v1944
  %v1946 = vrot.slane %v1945, 1
  %v1947 = vadd.f32 %v1945, %v1946
  %v1948 = vsel %vm157, %v1898, 0.0
  %v1949 = vrot.slane %v1948, 4
  %v1950 = vadd.f32 %v1948, %v1949
  %v1951 = vrot.slane %v1950, 2
  %v1952 = vadd.f32 %v1950, %v1951
  %v1953 = vrot.slane %v1952, 1
  %v1954 = vadd.f32 %v1952, %v1953
  %v1955 = vpack.c.bf16 %v1905, %v1905
  %v1956 = vpack.c.bf16 %v1912, %v1912
  %v1957 = vpack.c.bf16 %v1919, %v1919
  %v1958 = vpack.c.bf16 %v1926, %v1926
  %v1959 = vpack.c.bf16 %v1933, %v1933
  %v1960 = vpack.c.bf16 %v1940, %v1940
  %v1961 = vpack.c.bf16 %v1947, %v1947
  %v1962 = vpack.c.bf16 %v1954, %v1954
  %v1963 = vld [vmem:[%s37] sm:$0xf]
  %v1964 = vld [vmem:[%s37 + $0x4] sm:$0xf]
  %v1965 = vld [vmem:[%s37 + $0x8] sm:$0xf]
  %v1966 = vld [vmem:[%s37 + $0xc] sm:$0xf]
  %v1967 = vld [vmem:[%s39] sm:$0x1]
  %v1969 = vlaneseq
  %v1970 = vshrl.u32 %v1969, 7
  %v1971 = vsub.s32 0, %v1970
  %v1972 = vrot.slane %v1967, %v1971
  %v1982 = vunpack.c.l.b16 %v1955
  %v1983 = vunpack.c.l.b16 %v1956
  %v1984 = vunpack.c.l.b16 %v1957
  %v1985 = vunpack.c.l.b16 %v1958
  %v1986 = vunpack.c.l.b16 %v1959
  %v1987 = vunpack.c.l.b16 %v1960
  %v1988 = vunpack.c.l.b16 %v1961
  %v1989 = vunpack.c.l.b16 %v1962
  %v1990 = vsel %vm995, %v1983, %v1982
  %v1991 = vsel %vm998, %v1984, %v1990
  %v1992 = vsel %vm1001, %v1985, %v1991
  %v1993 = vsel %vm1305, %v1986, %v1992
  %v1994 = vsel %vm985, %v1987, %v1993
  %v1995 = vsel %vm988, %v1988, %v1994
  %v1996 = vsel %vm991, %v1989, %v1995
  %v1997 = vpack.c.b16 %v1996, %v1996
  %v2002 = vunpack.c.l.b16 %v1963
  %v2003 = vunpack.c.l.b16 %v1964
  %v2004 = vunpack.c.l.b16 %v1965
  %v2005 = vunpack.c.l.b16 %v1966
  %v2006 = vpack.c.b16 %v2003, %v2002
  %v2007 = vpack.c.b16 %v2005, %v2004
  %v2011 = vsel %vm157, %v1997, 0
  %2013 = vmatprep.subr.bf16.mxu0 0
  %2014 = vmatpush1.bf16.msra.mxu0 0
  %2015 = vmatprep.subr.bf16.mxu0 0
  %2016 = vmatpush1.bf16.msra.mxu0 0
  %2017 = vmatprep.subr.bf16.mxu0 0
  %2018 = vmatpush1.bf16.msra.mxu0 0
  %2019 = vmatprep.subr.bf16.mxu0 0
  %2020 = vmatpush1.bf16.msra.mxu0 0
  %2021 = vmatprep.subr.bf16.mxu0 0
  %2022 = vmatpush1.bf16.msra.mxu0 0
  %2023 = vmatprep.subr.bf16.mxu0 0
  %2024 = vmatpush1.bf16.msra.mxu0 0
  %2025 = vmatprep.subr.bf16.mxu0 0
  %2026 = vmatpush1.bf16.msra.mxu0 %v2007
  %2027 = vmatprep.subr.bf16.mxu0 0
  %2028 = vmatpush1.bf16.msra.mxu0 %v2006
  %2029 = vmatprep.subr.bf16.mxu0 0
  %2030 = vmatpush2.bf16.msra.mxu0 0
  %2031 = vmatprep.subr.bf16.mxu0 0
  %2032 = vmatpush2.bf16.msra.mxu0 0
  %2033 = vmatprep.subr.bf16.mxu0 0
  %2034 = vmatpush2.bf16.msra.mxu0 0
  %2035 = vmatprep.subr.bf16.mxu0 0
  %2036 = vmatpush2.bf16.msra.mxu0 0
  %2037 = vmatprep.subr.bf16.mxu0 0
  %2038 = vmatpush2.bf16.msra.mxu0 0
  %2039 = vmatprep.subr.bf16.mxu0 0
  %2040 = vmatpush2.bf16.msra.mxu0 0
  %2041 = vmatprep.subr.bf16.mxu0 0
  %2042 = vmatpush2.bf16.msra.mxu0 0
  %2043 = vmatprep.subr.bf16.mxu0 0
  %2044 = vmatpush2.bf16.msra.mxu0 0
  %2045 = vmatprep.mubr.bf16.mxu0 0
  %2046 = vmatmul.mubr.bf16.gmra.mxu0 %v2011
  %v2047 = vpop.f32.mrf.mxu0
  %v2048 = vadd.f32 %v1972, %v2047
  %v2049 = vpop.f32.mrf.mxu0
  %v2050 = vpop.f32.mrf.mxu0
  %v2051 = vpop.f32.mrf.mxu0
  %2052 = vdwg.mxu0
  %v2053 = vrot.slane %v141, 4
  %v2054 = vrot.slane %v142, 3
  %v2055 = vsel %vm995, %v2054, %v2053
  %v2056 = vrot.slane %v143, 2
  %v2057 = vsel %vm998, %v2056, %v2055
  %v2058 = vrot.slane %v144, 1
  %v2059 = vsel %vm1001, %v2058, %v2057
  %v2060 = vsel %vm1305, %v145, %v2059
  %v2061 = vrot.slane %v146, 7
  %v2062 = vsel %vm985, %v2061, %v2060
  %v2063 = vrot.slane %v147, 6
  %v2064 = vsel %vm988, %v2063, %v2062
  %v2065 = vrot.slane %v148, 5
  %v2066 = vsel %vm991, %v2065, %v2064
  %v2068 = vadd.f32 %v2048, %v2066
  %v2069 = vld [vmem:[%s47] sm:$0x1]
  %v2070 = vld [vmem:[%s49] sm:$0x1]
  %v2071 = vsel %vm157, %v2068, 0.0
  %2072 = vadd.xlane.f32.xlu0 %v2071
  %v2073 = vpop.xlane.xlu0 %2072
  %v2074 = vmul.f32 %v2073, %v182
  %v2075 = vsub.f32 %v2068, %v2074
  %v2076 = vmul.f32 %v2075, %v2075
  %v2077 = vsel %vm157, %v2076, 0.0
  %2078 = vadd.xlane.f32.xlu0 %v2077
  %v2079 = vpop.xlane.xlu0 %2078
  %v2080 = vmul.f32 %v2079, %v182
  %v2081 = vadd.f32 %v2080, 1e-05
  %v2082 = vrsqrt.pop %v2081
  %v2083 = vmul.f32 %v2075, %v2082
  %v2085 = vlaneseq
  %v2086 = vshrl.u32 %v2085, 7
  %v2087 = vsub.s32 0, %v2086
  %v2088 = vrot.slane %v2069, %v2087
  %v2090 = vmul.f32 %v2083, %v2088
  %v2092 = vlaneseq
  %v2093 = vshrl.u32 %v2092, 7
  %v2094 = vsub.s32 0, %v2093
  %v2095 = vrot.slane %v2070, %v2094
  %v2097 = vadd.f32 %v2090, %v2095
  %v2098 = vpack.c.bf16 %v2097, %v2097
  %v2099 = vld [vmem:[%s51] sm:$0xf]
  %v2100 = vld [vmem:[%s51 + $0x4] sm:$0xf]
  %v2101 = vld [vmem:[%s51 + $0x8] sm:$0xf]
  %v2102 = vld [vmem:[%s51 + $0xc] sm:$0xf]
  %v2103 = vld [vmem:[%s53] sm:$0x1]
  %v2105 = vlaneseq
  %v2106 = vshrl.u32 %v2105, 7
  %v2107 = vsub.s32 0, %v2106
  %v2108 = vrot.slane %v2103, %v2107
  %v2114 = vunpack.c.l.b16 %v2099
  %v2115 = vunpack.c.l.b16 %v2100
  %v2116 = vunpack.c.l.b16 %v2101
  %v2117 = vunpack.c.l.b16 %v2102
  %v2118 = vpack.c.b16 %v2115, %v2114
  %v2119 = vpack.c.b16 %v2117, %v2116
  %v2123 = vsel %vm157, %v2098, 0
  %2125 = vmatprep.subr.bf16.mxu0 0
  %2126 = vmatpush1.bf16.msra.mxu0 0
  %2127 = vmatprep.subr.bf16.mxu0 0
  %2128 = vmatpush1.bf16.msra.mxu0 0
  %2129 = vmatprep.subr.bf16.mxu0 0
  %2130 = vmatpush1.bf16.msra.mxu0 0
  %2131 = vmatprep.subr.bf16.mxu0 0
  %2132 = vmatpush1.bf16.msra.mxu0 0
  %2133 = vmatprep.subr.bf16.mxu0 0
  %2134 = vmatpush1.bf16.msra.mxu0 0
  %2135 = vmatprep.subr.bf16.mxu0 0
  %2136 = vmatpush1.bf16.msra.mxu0 0
  %2137 = vmatprep.subr.bf16.mxu0 0
  %2138 = vmatpush1.bf16.msra.mxu0 %v2119
  %2139 = vmatprep.subr.bf16.mxu0 0
  %2140 = vmatpush1.bf16.msra.mxu0 %v2118
  %2141 = vmatprep.subr.bf16.mxu0 0
  %2142 = vmatpush2.bf16.msra.mxu0 0
  %2143 = vmatprep.subr.bf16.mxu0 0
  %2144 = vmatpush2.bf16.msra.mxu0 0
  %2145 = vmatprep.subr.bf16.mxu0 0
  %2146 = vmatpush2.bf16.msra.mxu0 0
  %2147 = vmatprep.subr.bf16.mxu0 0
  %2148 = vmatpush2.bf16.msra.mxu0 0
  %2149 = vmatprep.subr.bf16.mxu0 0
  %2150 = vmatpush2.bf16.msra.mxu0 0
  %2151 = vmatprep.subr.bf16.mxu0 0
  %2152 = vmatpush2.bf16.msra.mxu0 0
  %2153 = vmatprep.subr.bf16.mxu0 0
  %2154 = vmatpush2.bf16.msra.mxu0 0
  %2155 = vmatprep.subr.bf16.mxu0 0
  %2156 = vmatpush2.bf16.msra.mxu0 0
  %2157 = vmatprep.mubr.bf16.mxu0 0
  %2158 = vmatmul.mubr.bf16.gmra.mxu0 %v2123
  %v2159 = vpop.f32.mrf.mxu0
  %v2160 = vadd.f32 %v2108, %v2159
  %v2161 = vpop.f32.mrf.mxu0
  %v2162 = vpop.f32.mrf.mxu0
  %v2163 = vpop.f32.mrf.mxu0
  %2164 = vdwg.mxu0
  %v2165 = vmul.f32 %v2160, 0.5
  %v2166 = vmul.f32 %v2160, 0.70710677
  %vm2167 = vcmp.ge.f32.partialorder %v2166, 0.0
  %v2168 = vsel %vm2167, 1.0, -1.0
  %v2169 = vand.u32 2147483647, %v2166
  %v2170 = vmul.f32 %v2169, 0.3275911
  %v2171 = vadd.f32 %v2170, 1.0
  %v2172 = vrcp.pop %v2171
  %v2173 = vmul.f32 1.0, %v2172
  %v2174 = vmul.f32 %v2173, 1.0614054
  %v2175 = vadd.f32 %v2174, -1.4531521
  %v2176 = vmul.f32 %v2175, %v2173
  %v2177 = vadd.f32 %v2176, 1.4214138
  %v2178 = vmul.f32 %v2177, %v2173
  %v2179 = vadd.f32 %v2178, -0.28449672
  %v2180 = vmul.f32 %v2179, %v2173
  %v2181 = vadd.f32 %v2180, 0.2548296
  %v2182 = vmul.f32 %v2181, %v2173
  %v2183 = vsub.f32 0.0, %v2169
  %v2184 = vmul.f32 %v2183, %v2169
  %v2185 = vmul.f32 %v2184, 1.442695
  %v2186 = vpow.pop %v2185
  %v2187 = vmul.f32 %v2182, %v2186
  %v2188 = vsub.f32 1.0, %v2187
  %v2189 = vmul.f32 %v2168, %v2188
  %v2190 = vadd.f32 %v2189, 1.0
  %v2191 = vmul.f32 %v2165, %v2190
  %v2192 = vpack.c.bf16 %v2191, %v2191
  %v2193 = vld [vmem:[%s55] sm:$0xf]
  %v2194 = vld [vmem:[%s55 + $0x4] sm:$0xf]
  %v2195 = vld [vmem:[%s55 + $0x8] sm:$0xf]
  %v2196 = vld [vmem:[%s55 + $0xc] sm:$0xf]
  %v2197 = vld [vmem:[%s55 + $0x10] sm:$0xf]
  %v2198 = vld [vmem:[%s55 + $0x14] sm:$0xf]
  %v2199 = vld [vmem:[%s55 + $0x18] sm:$0xf]
  %v2200 = vld [vmem:[%s55 + $0x1c] sm:$0xf]
  %v2201 = vld [vmem:[%s55 + $0x20] sm:$0xf]
  %v2202 = vld [vmem:[%s55 + $0x24] sm:$0xf]
  %v2203 = vld [vmem:[%s55 + $0x28] sm:$0xf]
  %v2204 = vld [vmem:[%s55 + $0x2c] sm:$0xf]
  %v2205 = vld [vmem:[%s55 + $0x30] sm:$0xf]
  %v2206 = vld [vmem:[%s55 + $0x34] sm:$0xf]
  %v2207 = vld [vmem:[%s55 + $0x38] sm:$0xf]
  %v2208 = vld [vmem:[%s55 + $0x3c] sm:$0xf]
  %v2209 = vld [vmem:[%s57] sm:$0x1]
  %v2211 = vlaneseq
  %v2212 = vshrl.u32 %v2211, 7
  %v2213 = vsub.s32 0, %v2212
  %v2214 = vrot.slane %v2209, %v2213
  %v2232 = vunpack.c.l.b16 %v2193
  %v2233 = vunpack.c.l.b16 %v2194
  %v2234 = vunpack.c.l.b16 %v2195
  %v2235 = vunpack.c.l.b16 %v2196
  %v2236 = vunpack.c.l.b16 %v2197
  %v2237 = vunpack.c.l.b16 %v2198
  %v2238 = vunpack.c.l.b16 %v2199
  %v2239 = vunpack.c.l.b16 %v2200
  %v2240 = vunpack.c.l.b16 %v2201
  %v2241 = vunpack.c.l.b16 %v2202
  %v2242 = vunpack.c.l.b16 %v2203
  %v2243 = vunpack.c.l.b16 %v2204
  %v2244 = vunpack.c.l.b16 %v2205
  %v2245 = vunpack.c.l.b16 %v2206
  %v2246 = vunpack.c.l.b16 %v2207
  %v2247 = vunpack.c.l.b16 %v2208
  %v2248 = vpack.c.b16 %v2233, %v2232
  %v2249 = vpack.c.b16 %v2235, %v2234
  %v2250 = vpack.c.b16 %v2237, %v2236
  %v2251 = vpack.c.b16 %v2239, %v2238
  %v2252 = vpack.c.b16 %v2241, %v2240
  %v2253 = vpack.c.b16 %v2243, %v2242
  %v2254 = vpack.c.b16 %v2245, %v2244
  %v2255 = vpack.c.b16 %v2247, %v2246
  %2264 = vmatprep.subr.bf16.mxu0 0
  %2265 = vmatpush1.bf16.msra.mxu0 %v2255
  %2266 = vmatprep.subr.bf16.mxu0 0
  %2267 = vmatpush1.bf16.msra.mxu0 %v2254
  %2268 = vmatprep.subr.bf16.mxu0 0
  %2269 = vmatpush1.bf16.msra.mxu0 %v2253
  %2270 = vmatprep.subr.bf16.mxu0 0
  %2271 = vmatpush1.bf16.msra.mxu0 %v2252
  %2272 = vmatprep.subr.bf16.mxu0 0
  %2273 = vmatpush1.bf16.msra.mxu0 %v2251
  %2274 = vmatprep.subr.bf16.mxu0 0
  %2275 = vmatpush1.bf16.msra.mxu0 %v2250
  %2276 = vmatprep.subr.bf16.mxu0 0
  %2277 = vmatpush1.bf16.msra.mxu0 %v2249
  %2278 = vmatprep.subr.bf16.mxu0 0
  %2279 = vmatpush1.bf16.msra.mxu0 %v2248
  %2280 = vmatprep.subr.bf16.mxu0 0
  %2281 = vmatpush2.bf16.msra.mxu0 0
  %2282 = vmatprep.subr.bf16.mxu0 0
  %2283 = vmatpush2.bf16.msra.mxu0 0
  %2284 = vmatprep.subr.bf16.mxu0 0
  %2285 = vmatpush2.bf16.msra.mxu0 0
  %2286 = vmatprep.subr.bf16.mxu0 0
  %2287 = vmatpush2.bf16.msra.mxu0 0
  %2288 = vmatprep.subr.bf16.mxu0 0
  %2289 = vmatpush2.bf16.msra.mxu0 0
  %2290 = vmatprep.subr.bf16.mxu0 0
  %2291 = vmatpush2.bf16.msra.mxu0 0
  %2292 = vmatprep.subr.bf16.mxu0 0
  %2293 = vmatpush2.bf16.msra.mxu0 0
  %2294 = vmatprep.subr.bf16.mxu0 0
  %2295 = vmatpush2.bf16.msra.mxu0 0
  %2296 = vmatprep.mubr.bf16.mxu0 0
  %2297 = vmatmul.mubr.bf16.gmra.mxu0 %v2192
  %v2298 = vpop.f32.mrf.mxu0
  %v2299 = vadd.f32 %v2214, %v2298
  %v2300 = vpop.f32.mrf.mxu0
  %v2301 = vpop.f32.mrf.mxu0
  %v2302 = vpop.f32.mrf.mxu0
  %2303 = vdwg.mxu0
  %v2304 = vadd.f32 %v2299, %v2068
  %2305 = vst.msk [vmem:[%s59] sm:$0xff] %vm157, %v2304
  // Predicated region
  $region118: #{_forward.1} parent=0 // pred_check
    _
  $region119: #{_forward.1} parent=0 // pred_check_branch
    %2307 = sbr.rel (0) target = $region121
  $region120: #{_forward.1} parent=0 // pred_region
    _
  $region121: #{_forward.1} parent=0 // pred_fallthru
    _
  // Predicated region
  $region122: #{_forward.1} parent=0 // pred_check
    _
  $region123: #{_forward.1} parent=0 // pred_check_branch
    %2309 = sbr.rel (0) target = $region125
  $region124: #{_forward.1} parent=0 // pred_region
    _
  $region125: #{_forward.1} parent=0 // pred_fallthru
    _

</llo_original>
